<compile_context>
chip_gen: v5e
topology: v5e:2x2
jax: 0.10.0
libtpu: 0.0.40
codegen_flags: <defaults>
</compile_context>

<pallas_src>
import functools

import jax
import jax.numpy as jnp
from jax.experimental import pallas as pl
from jax.experimental.pallas import tpu as pltpu


def _round_up(x, m):
    return (x + m - 1) // m * m


# --------------------- tiled GEMM with fused epilogue ----------------------- #

def _apply_act(y, act):
    if act == "leaky":
        return jnp.where(y >= 0, y, 0.2 * y)          # LeakyReLU(0.2)
    if act == "sigmoid":
        return jax.nn.sigmoid(y)                      # exp/recip on the EUP slot
    return y


def _gemm_kernel(a_ref, b_ref, *rest, act, with_stats):
    if with_stats:
        c_ref, sum_ref, sq_ref, acc_ref = rest
    else:
        c_ref, acc_ref = rest
    i = pl.program_id(1)            # M-tile index (grid = (j, i, k))
    k = pl.program_id(2)            # K-tile index (reduction, innermost)

    @pl.when(k == 0)
    def _():
        acc_ref[...] = jnp.zeros_like(acc_ref)

    if with_stats:
        # Stats output block (0, j) stays resident across the whole (i, k)
        # sweep for a given j; zero it on the first visit.
        @pl.when((i == 0) & (k == 0))
        def _():
            sum_ref[...] = jnp.zeros_like(sum_ref)
            sq_ref[...] = jnp.zeros_like(sq_ref)

    acc_ref[...] += jnp.dot(a_ref[...], b_ref[...],
                            preferred_element_type=jnp.float32)

    @pl.when(k == pl.num_programs(2) - 1)
    def _():
        y = acc_ref[...]
        if with_stats:
            # Column reductions ride the XLU slot, idle during the MXU GEMM.
            # (Padded A rows are zero, so they contribute nothing.)
            sum_ref[...] += jnp.sum(y, axis=0, keepdims=True)
            sq_ref[...] += jnp.sum(y * y, axis=0, keepdims=True)
        c_ref[...] = _apply_act(y, act).astype(c_ref.dtype)


def pallas_gemm(a, b, *, act="none", with_stats=False, out_dtype=jnp.float32,
                tm_max=256, tk_max=512, tn_max=256):
    """C = act(A @ B); optionally also per-column sum / sum-of-squares of A@B.

    A: [M, K], B: [K, N]; computed in bf16 on the MXU with an f32 accumulator.
    Tiles are (16,128)-aligned; working set (< a few MiB double-buffered) fits
    comfortably inside the default scoped VMEM on v5e/v6e/v7x.
    """
    M, K = a.shape
    K2, N = b.shape
    assert K == K2
    a = a.astype(jnp.bfloat16)
    b = b.astype(jnp.bfloat16)

    # Full-dim blocks for small axes (no host-side pad copy); tile + pad only
    # the remainder for large axes.
    tm, Mp = (M, M) if M <= tm_max else (tm_max, _round_up(M, tm_max))
    tk, Kp = (K, K) if K <= tk_max else (tk_max, _round_up(K, tk_max))
    tn, Np = (N, N) if N <= tn_max else (tn_max, _round_up(N, tn_max))
    if (Mp, Kp) != (M, K):
        a = jnp.pad(a, ((0, Mp - M), (0, Kp - K)))
    if (Kp, Np) != (K, N):
        b = jnp.pad(b, ((0, Kp - K), (0, Np - N)))
    gm, gn, gk = Mp // tm, Np // tn, Kp // tk

    out_shape = [jax.ShapeDtypeStruct((Mp, Np), out_dtype)]
    out_specs = [pl.BlockSpec((tm, tn), lambda j, i, k: (i, j))]
    if with_stats:
        out_shape.append(jax.ShapeDtypeStruct((1, Np), jnp.float32))
        out_shape.append(jax.ShapeDtypeStruct((1, Np), jnp.float32))
        out_specs.append(pl.BlockSpec((1, tn), lambda j, i, k: (0, j)))
        out_specs.append(pl.BlockSpec((1, tn), lambda j, i, k: (0, j)))

    # Stats accumulate across the M axis -> M must stay "arbitrary" then.
    dims = ("parallel", "arbitrary" if with_stats else "parallel", "arbitrary")

    flops = 2 * Mp * Kp * Np
    bytes_accessed = (Mp * Kp + Kp * Np) * 2 + Mp * Np * jnp.dtype(out_dtype).itemsize

    outs = pl.pallas_call(
        functools.partial(_gemm_kernel, act=act, with_stats=with_stats),
        out_shape=tuple(out_shape),
        grid=(gn, gm, gk),
        in_specs=[pl.BlockSpec((tm, tk), lambda j, i, k: (i, k)),
                  pl.BlockSpec((tk, tn), lambda j, i, k: (k, j))],
        out_specs=tuple(out_specs),
        scratch_shapes=[pltpu.VMEM((tm, tn), jnp.float32)],
        compiler_params=pltpu.CompilerParams(dimension_semantics=dims),
        cost_estimate=pl.CostEstimate(flops=flops, transcendentals=0,
                                      bytes_accessed=bytes_accessed),
    )(a, b)

    c, rest = outs[0], outs[1:]
    if (Mp, Np) != (M, N):
        c = c[:M, :N]
        rest = tuple(r[:, :N] for r in rest)
    return (c, *rest) if with_stats else c


# ------------------- tiled affine (BN scale/shift) + LeakyReLU -------------- #

def _affine_leaky_kernel(x_ref, scale_ref, shift_ref, o_ref):
    y = x_ref[...] * scale_ref[...] + shift_ref[...]
    o_ref[...] = jnp.where(y >= 0, y, 0.2 * y).astype(o_ref.dtype)


def pallas_affine_leaky(x, scale, shift, out_dtype=jnp.bfloat16, tr_max=1024):
    """out = LeakyReLU_0.2(x * scale + shift); scale/shift broadcast per channel."""
    M, C = x.shape
    tr = M if M <= tr_max else tr_max       # row tile; partial tail is masked
    return pl.pallas_call(
        _affine_leaky_kernel,
        out_shape=jax.ShapeDtypeStruct((M, C), out_dtype),
        grid=(pl.cdiv(M, tr),),
        in_specs=[pl.BlockSpec((tr, C), lambda r: (r, 0)),
                  pl.BlockSpec((1, C), lambda r: (0, 0)),
                  pl.BlockSpec((1, C), lambda r: (0, 0))],
        out_specs=pl.BlockSpec((tr, C), lambda r: (r, 0)),
        compiler_params=pltpu.CompilerParams(dimension_semantics=("parallel",)),
    )(x, scale.reshape(1, C).astype(jnp.float32),
      shift.reshape(1, C).astype(jnp.float32))


# --------------------------- 1x1 conv + sigmoid head ------------------------ #

def _conv1x1_sigmoid_kernel(x_ref, w_ref, o_ref):
    y = jnp.sum(x_ref[...].astype(jnp.float32) * w_ref[...], axis=1, keepdims=True)
    o_ref[...] = jax.nn.sigmoid(y)


def pallas_conv1x1_sigmoid(x, w, tr_max=512):
    """sigmoid(x @ w) for a single output channel, as a lane reduction."""
    M, C = x.shape
    w2 = w.reshape(1, C).astype(jnp.float32)
    tr = M if M <= tr_max else tr_max
    return pl.pallas_call(
        _conv1x1_sigmoid_kernel,
        out_shape=jax.ShapeDtypeStruct((M, 1), jnp.float32),
        grid=(pl.cdiv(M, tr),),
        in_specs=[pl.BlockSpec((tr, C), lambda r: (r, 0)),
                  pl.BlockSpec((1, C), lambda r: (0, 0))],
        out_specs=pl.BlockSpec((tr, 1), lambda r: (r, 0)),
        compiler_params=pltpu.CompilerParams(dimension_semantics=("parallel",)),
    )(x, w2)


# ------------------------------ JAX glue ----------------------------------- #

def im2col(x_nhwc, k=4, s=2, p=1):
    """Extract conv patches. Returns ([N*OH*OW, k*k*C], (N, OH, OW))."""
    # TODO(synk): stream the 16 (kh,kw) slices through the GEMM K grid axis via
    # manual strided DMA instead of materializing the 16x-expanded patch slab.
    N, H, W, C = x_nhwc.shape
    xp = jnp.pad(x_nhwc, ((0, 0), (p, p), (p, p), (0, 0)))
    OH = (H + 2 * p - k) // s + 1
    OW = (W + 2 * p - k) // s + 1
    cols = []
    for kh in range(k):
        for kw in range(k):
            cols.append(xp[:, kh:kh + s * OH:s, kw:kw + s * OW:s, :])
    patches = jnp.concatenate(cols, axis=-1)            # order: (kh, kw, cin)
    return patches.reshape(N * OH * OW, k * k * C), (N, OH, OW)


def down_block(h_nhwc, w_hwio, norm):
    cout = w_hwio.shape[-1]
    patches, (n, oh, ow) = im2col(h_nhwc, k=4, s=2, p=1)     # bf16 patches
    # weight stored HWIO == torch weight.permute(2,3,1,0); flatten matches patch order
    w2d = w_hwio.reshape(-1, cout)
    m = patches.shape[0]
    if norm:
        # GEMM emits the f32 pre-activation plus fused per-channel sum / sum-sq.
        pre, s, sq = pallas_gemm(patches, w2d, act="none",
                                 with_stats=True, out_dtype=jnp.float32)
        mean = s[0] / m
        # E[x^2]-E[x]^2 in f32; clamp guards small negative round-off.
        var = jnp.maximum(sq[0] / m - mean * mean, 0.0)      # biased (train-mode BN)
        inv = jax.lax.rsqrt(var + 1e-5)
        out = pallas_affine_leaky(pre, inv, -mean * inv)     # gamma=1, beta=0
    else:
        # Affine is identity here, so LeakyReLU fuses straight into the GEMM.
        out = pallas_gemm(patches, w2d, act="leaky",
                          with_stats=False, out_dtype=jnp.bfloat16)
    return out.reshape(n, oh, ow, cout)


def discriminator_forward(x_nchw, y_nchw, params):
    x = jnp.transpose(x_nchw, (0, 2, 3, 1))
    y = jnp.transpose(y_nchw, (0, 2, 3, 1))
    h = jnp.concatenate([x, y], axis=-1).astype(jnp.bfloat16)   # torch.cat dim=1
    h = down_block(h, params["w1"], norm=False)                 # disc1
    h = down_block(h, params["w2"], norm=True)                  # disc2
    h = down_block(h, params["w3"], norm=True)                  # disc3
    h = down_block(h, params["w4"], norm=True)                  # disc4
    n, oh, ow, c = h.shape
    out = pallas_conv1x1_sigmoid(h.reshape(n * oh * ow, c), params["w5"])
    return jnp.transpose(out.reshape(n, oh, ow, 1), (0, 3, 1, 2))   # NCHW


def init_params(key, chnum_in):
    keys = jax.random.split(key, 5)

    def conv_w(k, kh, kw, cin, cout):
        fan_in = kh * kw * cin
        return (jax.random.normal(k, (kh, kw, cin, cout), jnp.float32)
                / jnp.sqrt(fan_in))

    return {
        "w1": conv_w(keys[0], 4, 4, 2 * chnum_in, 64),
        "w2": conv_w(keys[1], 4, 4, 64, 128),
        "w3": conv_w(keys[2], 4, 4, 128, 256),
        "w4": conv_w(keys[3], 4, 4, 256, 512),
        "w5": conv_w(keys[4], 1, 1, 512, 1),
    }


if __name__ == "__main__":
    chnum_in = 2
    N, H, W = 2, 16, 16
    key = jax.random.PRNGKey(0)
    kx, ky, kp = jax.random.split(key, 3)
    x = jax.random.normal(kx, (N, chnum_in, H, W), jnp.float32)
    y = jax.random.normal(ky, (N, chnum_in, H, W), jnp.float32)
    params = init_params(kp, chnum_in)

    fwd = jax.jit(discriminator_forward)
    out = jax.block_until_ready(fwd(x, y, params))
    assert out.shape == (N, 1, 1, 1), out.shape
    assert bool(jnp.all((out >= 0.0) & (out <= 1.0)))
    print("KERNEL_OK")
</pallas_src>

<mosaic_0001>
module attributes {stable_mosaic.version = 11 : i64} {
  func.func @_gemm_kernel(%arg0: i32, %arg1: i32, %arg2: i32, %arg3: memref<128x64xbf16, #tpu.memory_space<vmem>>, %arg4: memref<64x64xbf16, #tpu.memory_space<vmem>>, %arg5: memref<128x64xbf16, #tpu.memory_space<vmem>>, %arg6: memref<128x64xf32, #tpu.memory_space<vmem>>) attributes {dimension_semantics = [#tpu.dimension_semantics<parallel>, #tpu.dimension_semantics<parallel>, #tpu.dimension_semantics<arbitrary>], iteration_bounds = array<i64: 1, 1, 1>, scalar_prefetch = 0 : i64, scratch_operands = 1 : i64, tpu.core_type = #tpu.core_type<tc>, window_params = [{transform_indices = @transform_0, window_bounds = array<i64: 128, 64>}, {transform_indices = @transform_1, window_bounds = array<i64: 64, 64>}, {transform_indices = @transform_2, window_bounds = array<i64: 128, 64>}]} {
    %c0_i32 = arith.constant 0 : i32
    %0 = arith.cmpi eq, %arg2, %c0_i32 : i32
    %1 = arith.extui %0 : i1 to i32
    %c0_i32_0 = arith.constant 0 : i32
    %2 = arith.cmpi ne, %1, %c0_i32_0 : i32
    scf.if %2 {
      %cst_10 = arith.constant 0.000000e+00 : f32
      %12 = vector.broadcast %cst_10 : f32 to vector<128x64xf32>
      %c0_11 = arith.constant 0 : index
      %c0_12 = arith.constant 0 : index
      %13 = vector.load %arg6[%c0_11, %c0_12] : memref<128x64xf32, #tpu.memory_space<vmem>>, vector<128x64xf32>
      tpu.vector_store %arg6[%c0_11, %c0_12], %12 {strides = array<i32>} : memref<128x64xf32, #tpu.memory_space<vmem>>, vector<128x64xf32>,
    } else {
    }
    %c0 = arith.constant 0 : index
    %c0_1 = arith.constant 0 : index
    %3 = vector.load %arg6[%c0, %c0_1] : memref<128x64xf32, #tpu.memory_space<vmem>>, vector<128x64xf32>
    %c0_2 = arith.constant 0 : index
    %c0_3 = arith.constant 0 : index
    %4 = vector.load %arg3[%c0_2, %c0_3] : memref<128x64xbf16, #tpu.memory_space<vmem>>, vector<128x64xbf16>
    %c0_4 = arith.constant 0 : index
    %c0_5 = arith.constant 0 : index
    %5 = vector.load %arg4[%c0_4, %c0_5] : memref<64x64xbf16, #tpu.memory_space<vmem>>, vector<64x64xbf16>
    %cst = arith.constant dense<0.000000e+00> : vector<128x64xf32>
    %6 = tpu.matmul %4, %5, %cst {dimension_numbers = #tpu.dot_dimension_numbers<[1], [0], [0], [1], [0, 0, 1, 1], [], []>} : vector<128x64xbf16>, vector<64x64xbf16>, vector<128x64xf32> -> vector<128x64xf32>
    %7 = arith.addf %3, %6 : vector<128x64xf32>
    %c0_6 = arith.constant 0 : index
    %c0_7 = arith.constant 0 : index
    %8 = vector.load %arg6[%c0_6, %c0_7] : memref<128x64xf32, #tpu.memory_space<vmem>>, vector<128x64xf32>
    tpu.vector_store %arg6[%c0_6, %c0_7], %7 {strides = array<i32>} : memref<128x64xf32, #tpu.memory_space<vmem>>, vector<128x64xf32>,
    %c0_i32_8 = arith.constant 0 : i32
    %9 = arith.cmpi eq, %arg2, %c0_i32_8 : i32
    %10 = arith.extui %9 : i1 to i32
    %c0_i32_9 = arith.constant 0 : i32
    %11 = arith.cmpi ne, %10, %c0_i32_9 : i32
    scf.if %11 {
      %c0_10 = arith.constant 0 : index
      %c0_11 = arith.constant 0 : index
      %12 = vector.load %arg6[%c0_10, %c0_11] : memref<128x64xf32, #tpu.memory_space<vmem>>, vector<128x64xf32>
      %cst_12 = arith.constant 0.000000e+00 : f32
      %13 = vector.broadcast %cst_12 : f32 to vector<128x64xf32>
      %14 = arith.cmpf oge, %12, %13 : vector<128x64xf32>
      %cst_13 = arith.constant 2.000000e-01 : f32
      %15 = vector.broadcast %cst_13 : f32 to vector<128x64xf32>
      %16 = arith.mulf %15, %12 : vector<128x64xf32>
      %17 = arith.select %14, %12, %16 : vector<128x64xi1>, vector<128x64xf32>
      %18 = arith.truncf %17 : vector<128x64xf32> to vector<128x64xbf16>
      %c0_14 = arith.constant 0 : index
      %c0_15 = arith.constant 0 : index
      %19 = vector.load %arg5[%c0_14, %c0_15] : memref<128x64xbf16, #tpu.memory_space<vmem>>, vector<128x64xbf16>
      tpu.vector_store %arg5[%c0_14, %c0_15], %18 {strides = array<i32>} : memref<128x64xbf16, #tpu.memory_space<vmem>>, vector<128x64xbf16>,
    } else {
    }
    return
  }
  func.func @transform_0(%arg0: i32, %arg1: i32, %arg2: i32) -> (i32, i32) {
    %c0_i32 = arith.constant 0 : i32
    return %arg1, %arg2 : i32, i32
  }
  func.func @transform_1(%arg0: i32, %arg1: i32, %arg2: i32) -> (i32, i32) {
    %c0_i32 = arith.constant 0 : i32
    return %arg2, %arg0 : i32, i32
  }
  func.func @transform_2(%arg0: i32, %arg1: i32, %arg2: i32) -> (i32, i32) {
    %c0_i32 = arith.constant 0 : i32
    return %arg1, %arg0 : i32, i32
  }
}

module attributes {stable_mosaic.version = 11 : i64} {
  func.func @_gemm_kernel(%arg0: i32, %arg1: i32, %arg2: i32, %arg3: memref<32x512xbf16, #tpu.memory_space<vmem>>, %arg4: memref<512x128xbf16, #tpu.memory_space<vmem>>, %arg5: memref<32x128xf32, #tpu.memory_space<vmem>>, %arg6: memref<1x128xf32, #tpu.memory_space<vmem>>, %arg7: memref<1x128xf32, #tpu.memory_space<vmem>>, %arg8: memref<32x128xf32, #tpu.memory_space<vmem>>) attributes {dimension_semantics = [#tpu.dimension_semantics<parallel>, #tpu.dimension_semantics<arbitrary>, #tpu.dimension_semantics<arbitrary>], iteration_bounds = array<i64: 1, 1, 2>, scalar_prefetch = 0 : i64, scratch_operands = 1 : i64, tpu.core_type = #tpu.core_type<tc>, window_params = [{transform_indices = @transform_0, window_bounds = array<i64: 32, 512>}, {transform_indices = @transform_1, window_bounds = array<i64: 512, 128>}, {transform_indices = @transform_2, window_bounds = array<i64: 32, 128>}, {transform_indices = @transform_3, window_bounds = array<i64: 1, 128>}, {transform_indices = @transform_4, window_bounds = array<i64: 1, 128>}]} {
    %c0_i32 = arith.constant 0 : i32
    %0 = arith.cmpi eq, %arg2, %c0_i32 : i32
    %1 = arith.extui %0 : i1 to i32
    %c0_i32_0 = arith.constant 0 : i32
    %2 = arith.cmpi ne, %1, %c0_i32_0 : i32
    scf.if %2 {
      %cst_12 = arith.constant 0.000000e+00 : f32
      %17 = vector.broadcast %cst_12 : f32 to vector<32x128xf32>
      %c0_13 = arith.constant 0 : index
      %c0_14 = arith.constant 0 : index
      %18 = vector.load %arg8[%c0_13, %c0_14] : memref<32x128xf32, #tpu.memory_space<vmem>>, vector<32x128xf32>
      tpu.vector_store %arg8[%c0_13, %c0_14], %17 {strides = array<i32>} : memref<32x128xf32, #tpu.memory_space<vmem>>, vector<32x128xf32>,
    } else {
    }
    %c0_i32_1 = arith.constant 0 : i32
    %3 = arith.cmpi eq, %arg1, %c0_i32_1 : i32
    %c0_i32_2 = arith.constant 0 : i32
    %4 = arith.cmpi eq, %arg2, %c0_i32_2 : i32
    %5 = arith.andi %3, %4 : i1
    %6 = arith.extui %5 : i1 to i32
    %c0_i32_3 = arith.constant 0 : i32
    %7 = arith.cmpi ne, %6, %c0_i32_3 : i32
    scf.if %7 {
      %cst_12 = arith.constant 0.000000e+00 : f32
      %17 = vector.broadcast %cst_12 : f32 to vector<1x128xf32>
      %c0_13 = arith.constant 0 : index
      %c0_14 = arith.constant 0 : index
      %18 = vector.load %arg6[%c0_13, %c0_14] : memref<1x128xf32, #tpu.memory_space<vmem>>, vector<1x128xf32>
      tpu.vector_store %arg6[%c0_13, %c0_14], %17 {strides = array<i32>} : memref<1x128xf32, #tpu.memory_space<vmem>>, vector<1x128xf32>,
      %cst_15 = arith.constant 0.000000e+00 : f32
      %19 = vector.broadcast %cst_15 : f32 to vector<1x128xf32>
      %c0_16 = arith.constant 0 : index
      %c0_17 = arith.constant 0 : index
      %20 = vector.load %arg7[%c0_16, %c0_17] : memref<1x128xf32, #tpu.memory_space<vmem>>, vector<1x128xf32>
      tpu.vector_store %arg7[%c0_16, %c0_17], %19 {strides = array<i32>} : memref<1x128xf32, #tpu.memory_space<vmem>>, vector<1x128xf32>,
    } else {
    }
    %c0 = arith.constant 0 : index
    %c0_4 = arith.constant 0 : index
    %8 = vector.load %arg8[%c0, %c0_4] : memref<32x128xf32, #tpu.memory_space<vmem>>, vector<32x128xf32>
    %c0_5 = arith.constant 0 : index
    %c0_6 = arith.constant 0 : index
    %9 = vector.load %arg3[%c0_5, %c0_6] : memref<32x512xbf16, #tpu.memory_space<vmem>>, vector<32x512xbf16>
    %c0_7 = arith.constant 0 : index
    %c0_8 = arith.constant 0 : index
    %10 = vector.load %arg4[%c0_7, %c0_8] : memref<512x128xbf16, #tpu.memory_space<vmem>>, vector<512x128xbf16>
    %cst = arith.constant dense<0.000000e+00> : vector<32x128xf32>
    %11 = tpu.matmul %9, %10, %cst {dimension_numbers = #tpu.dot_dimension_numbers<[1], [0], [0], [1], [0, 0, 1, 1], [], []>} : vector<32x512xbf16>, vector<512x128xbf16>, vector<32x128xf32> -> vector<32x128xf32>
    %12 = arith.addf %8, %11 : vector<32x128xf32>
    %c0_9 = arith.constant 0 : index
    %c0_10 = arith.constant 0 : index
    %13 = vector.load %arg8[%c0_9, %c0_10] : memref<32x128xf32, #tpu.memory_space<vmem>>, vector<32x128xf32>
    tpu.vector_store %arg8[%c0_9, %c0_10], %12 {strides = array<i32>} : memref<32x128xf32, #tpu.memory_space<vmem>>, vector<32x128xf32>,
    %c1_i32 = arith.constant 1 : i32
    %14 = arith.cmpi eq, %arg2, %c1_i32 : i32
    %15 = arith.extui %14 : i1 to i32
    %c0_i32_11 = arith.constant 0 : i32
    %16 = arith.cmpi ne, %15, %c0_i32_11 : i32
    scf.if %16 {
      %c0_12 = arith.constant 0 : index
      %c0_13 = arith.constant 0 : index
      %17 = vector.load %arg8[%c0_12, %c0_13] : memref<32x128xf32, #tpu.memory_space<vmem>>, vector<32x128xf32>
      %c0_14 = arith.constant 0 : index
      %c0_15 = arith.constant 0 : index
      %18 = vector.load %arg6[%c0_14, %c0_15] : memref<1x128xf32, #tpu.memory_space<vmem>>, vector<1x128xf32>
      %cst_16 = arith.constant dense<0.000000e+00> : vector<128xf32>
      %19 = vector.multi_reduction <add>, %17, %cst_16 [0] : vector<32x128xf32> to vector<128xf32>
      %20 = vector.shape_cast %19 : vector<128xf32> to vector<1x128xf32>
      %21 = arith.addf %18, %20 : vector<1x128xf32>
      %c0_17 = arith.constant 0 : index
      %c0_18 = arith.constant 0 : index
      %22 = vector.load %arg6[%c0_17, %c0_18] : memref<1x128xf32, #tpu.memory_space<vmem>>, vector<1x128xf32>
      tpu.vector_store %arg6[%c0_17, %c0_18], %21 {strides = array<i32>} : memref<1x128xf32, #tpu.memory_space<vmem>>, vector<1x128xf32>,
      %c0_19 = arith.constant 0 : index
      %c0_20 = arith.constant 0 : index
      %23 = vector.load %arg7[%c0_19, %c0_20] : memref<1x128xf32, #tpu.memory_space<vmem>>, vector<1x128xf32>
      %24 = arith.mulf %17, %17 : vector<32x128xf32>
      %cst_21 = arith.constant dense<0.000000e+00> : vector<128xf32>
      %25 = vector.multi_reduction <add>, %24, %cst_21 [0] : vector<32x128xf32> to vector<128xf32>
      %26 = vector.shape_cast %25 : vector<128xf32> to vector<1x128xf32>
      %27 = arith.addf %23, %26 : vector<1x128xf32>
      %c0_22 = arith.constant 0 : index
      %c0_23 = arith.constant 0 : index
      %28 = vector.load %arg7[%c0_22, %c0_23] : memref<1x128xf32, #tpu.memory_space<vmem>>, vector<1x128xf32>
      tpu.vector_store %arg7[%c0_22, %c0_23], %27 {strides = array<i32>} : memref<1x128xf32, #tpu.memory_space<vmem>>, vector<1x128xf32>,
      %c0_24 = arith.constant 0 : index
      %c0_25 = arith.constant 0 : index
      %29 = vector.load %arg5[%c0_24, %c0_25] : memref<32x128xf32, #tpu.memory_space<vmem>>, vector<32x128xf32>
      tpu.vector_store %arg5[%c0_24, %c0_25], %17 {strides = array<i32>} : memref<32x128xf32, #tpu.memory_space<vmem>>, vector<32x128xf32>,
    } else {
    }
    return
  }
  func.func @transform_0(%arg0: i32, %arg1: i32, %arg2: i32) -> (i32, i32) {
    %c0_i32 = arith.constant 0 : i32
    return %arg1, %arg2 : i32, i32
  }
  func.func @transform_1(%arg0: i32, %arg1: i32, %arg2: i32) -> (i32, i32) {
    %c0_i32 = arith.constant 0 : i32
    return %arg2, %arg0 : i32, i32
  }
  func.func @transform_2(%arg0: i32, %arg1: i32, %arg2: i32) -> (i32, i32) {
    %c0_i32 = arith.constant 0 : i32
    return %arg1, %arg0 : i32, i32
  }
  func.func @transform_3(%arg0: i32, %arg1: i32, %arg2: i32) -> (i32, i32) {
    %c0_i32 = arith.constant 0 : i32
    %c0_i32_0 = arith.constant 0 : i32
    return %c0_i32, %arg0 : i32, i32
  }
  func.func @transform_4(%arg0: i32, %arg1: i32, %arg2: i32) -> (i32, i32) {
    %c0_i32 = arith.constant 0 : i32
    %c0_i32_0 = arith.constant 0 : i32
    return %c0_i32, %arg0 : i32, i32
  }
}

module attributes {stable_mosaic.version = 11 : i64} {
  func.func @_affine_leaky_kernel(%arg0: i32, %arg1: memref<32x128xf32, #tpu.memory_space<vmem>>, %arg2: memref<1x128xf32, #tpu.memory_space<vmem>>, %arg3: memref<1x128xf32, #tpu.memory_space<vmem>>, %arg4: memref<32x128xbf16, #tpu.memory_space<vmem>>) attributes {dimension_semantics = [#tpu.dimension_semantics<parallel>], iteration_bounds = array<i64: 1>, scalar_prefetch = 0 : i64, scratch_operands = 0 : i64, tpu.core_type = #tpu.core_type<tc>, window_params = [{transform_indices = @transform_0, window_bounds = array<i64: 32, 128>}, {pipeline_mode = #tpu.pipeline_mode<synchronous>, transform_indices = @transform_1, window_bounds = array<i64: 1, 128>}, {pipeline_mode = #tpu.pipeline_mode<synchronous>, transform_indices = @transform_2, window_bounds = array<i64: 1, 128>}, {transform_indices = @transform_3, window_bounds = array<i64: 32, 128>}]} {
    %c0 = arith.constant 0 : index
    %c0_0 = arith.constant 0 : index
    %0 = vector.load %arg1[%c0, %c0_0] : memref<32x128xf32, #tpu.memory_space<vmem>>, vector<32x128xf32>
    %c0_1 = arith.constant 0 : index
    %c0_2 = arith.constant 0 : index
    %1 = vector.load %arg2[%c0_1, %c0_2] : memref<1x128xf32, #tpu.memory_space<vmem>>, vector<1x128xf32>
    %2 = vector.broadcast %1 : vector<1x128xf32> to vector<32x128xf32>
    %3 = arith.mulf %0, %2 : vector<32x128xf32>
    %c0_3 = arith.constant 0 : index
    %c0_4 = arith.constant 0 : index
    %4 = vector.load %arg3[%c0_3, %c0_4] : memref<1x128xf32, #tpu.memory_space<vmem>>, vector<1x128xf32>
    %5 = vector.broadcast %4 : vector<1x128xf32> to vector<32x128xf32>
    %6 = arith.addf %3, %5 : vector<32x128xf32>
    %cst = arith.constant 0.000000e+00 : f32
    %7 = vector.broadcast %cst : f32 to vector<32x128xf32>
    %8 = arith.cmpf oge, %6, %7 : vector<32x128xf32>
    %cst_5 = arith.constant 2.000000e-01 : f32
    %9 = vector.broadcast %cst_5 : f32 to vector<32x128xf32>
    %10 = arith.mulf %9, %6 : vector<32x128xf32>
    %11 = arith.select %8, %6, %10 : vector<32x128xi1>, vector<32x128xf32>
    %12 = arith.truncf %11 : vector<32x128xf32> to vector<32x128xbf16>
    %c0_6 = arith.constant 0 : index
    %c0_7 = arith.constant 0 : index
    %13 = vector.load %arg4[%c0_6, %c0_7] : memref<32x128xbf16, #tpu.memory_space<vmem>>, vector<32x128xbf16>
    tpu.vector_store %arg4[%c0_6, %c0_7], %12 {strides = array<i32>} : memref<32x128xbf16, #tpu.memory_space<vmem>>, vector<32x128xbf16>,
    return
  }
  func.func @transform_0(%arg0: i32) -> (i32, i32) {
    %c0_i32 = arith.constant 0 : i32
    %c0_i32_0 = arith.constant 0 : i32
    return %arg0, %c0_i32 : i32, i32
  }
  func.func @transform_1(%arg0: i32) -> (i32, i32) {
    %c0_i32 = arith.constant 0 : i32
    %c0_i32_0 = arith.constant 0 : i32
    %c0_i32_1 = arith.constant 0 : i32
    return %c0_i32, %c0_i32_0 : i32, i32
  }
  func.func @transform_2(%arg0: i32) -> (i32, i32) {
    %c0_i32 = arith.constant 0 : i32
    %c0_i32_0 = arith.constant 0 : i32
    %c0_i32_1 = arith.constant 0 : i32
    return %c0_i32, %c0_i32_0 : i32, i32
  }
  func.func @transform_3(%arg0: i32) -> (i32, i32) {
    %c0_i32 = arith.constant 0 : i32
    %c0_i32_0 = arith.constant 0 : i32
    return %arg0, %c0_i32 : i32, i32
  }
}

module attributes {stable_mosaic.version = 11 : i64} {
  func.func @_affine_leaky_kernel(%arg0: i32, %arg1: memref<8x256xf32, #tpu.memory_space<vmem>>, %arg2: memref<1x256xf32, #tpu.memory_space<vmem>>, %arg3: memref<1x256xf32, #tpu.memory_space<vmem>>, %arg4: memref<8x256xbf16, #tpu.memory_space<vmem>>) attributes {dimension_semantics = [#tpu.dimension_semantics<parallel>], iteration_bounds = array<i64: 1>, scalar_prefetch = 0 : i64, scratch_operands = 0 : i64, tpu.core_type = #tpu.core_type<tc>, window_params = [{transform_indices = @transform_0, window_bounds = array<i64: 8, 256>}, {pipeline_mode = #tpu.pipeline_mode<synchronous>, transform_indices = @transform_1, window_bounds = array<i64: 1, 256>}, {pipeline_mode = #tpu.pipeline_mode<synchronous>, transform_indices = @transform_2, window_bounds = array<i64: 1, 256>}, {transform_indices = @transform_3, window_bounds = array<i64: 8, 256>}]} {
    %c0 = arith.constant 0 : index
    %c0_0 = arith.constant 0 : index
    %0 = vector.load %arg1[%c0, %c0_0] : memref<8x256xf32, #tpu.memory_space<vmem>>, vector<8x256xf32>
    %c0_1 = arith.constant 0 : index
    %c0_2 = arith.constant 0 : index
    %1 = vector.load %arg2[%c0_1, %c0_2] : memref<1x256xf32, #tpu.memory_space<vmem>>, vector<1x256xf32>
    %2 = vector.broadcast %1 : vector<1x256xf32> to vector<8x256xf32>
    %3 = arith.mulf %0, %2 : vector<8x256xf32>
    %c0_3 = arith.constant 0 : index
    %c0_4 = arith.constant 0 : index
    %4 = vector.load %arg3[%c0_3, %c0_4] : memref<1x256xf32, #tpu.memory_space<vmem>>, vector<1x256xf32>
    %5 = vector.broadcast %4 : vector<1x256xf32> to vector<8x256xf32>
    %6 = arith.addf %3, %5 : vector<8x256xf32>
    %cst = arith.constant 0.000000e+00 : f32
    %7 = vector.broadcast %cst : f32 to vector<8x256xf32>
    %8 = arith.cmpf oge, %6, %7 : vector<8x256xf32>
    %cst_5 = arith.constant 2.000000e-01 : f32
    %9 = vector.broadcast %cst_5 : f32 to vector<8x256xf32>
    %10 = arith.mulf %9, %6 : vector<8x256xf32>
    %11 = arith.select %8, %6, %10 : vector<8x256xi1>, vector<8x256xf32>
    %12 = arith.truncf %11 : vector<8x256xf32> to vector<8x256xbf16>
    %c0_6 = arith.constant 0 : index
    %c0_7 = arith.constant 0 : index
    %13 = vector.load %arg4[%c0_6, %c0_7] : memref<8x256xbf16, #tpu.memory_space<vmem>>, vector<8x256xbf16>
    tpu.vector_store %arg4[%c0_6, %c0_7], %12 {strides = array<i32>} : memref<8x256xbf16, #tpu.memory_space<vmem>>, vector<8x256xbf16>,
    return
  }
  func.func @transform_0(%arg0: i32) -> (i32, i32) {
    %c0_i32 = arith.constant 0 : i32
    %c0_i32_0 = arith.constant 0 : i32
    return %arg0, %c0_i32 : i32, i32
  }
  func.func @transform_1(%arg0: i32) -> (i32, i32) {
    %c0_i32 = arith.constant 0 : i32
    %c0_i32_0 = arith.constant 0 : i32
    %c0_i32_1 = arith.constant 0 : i32
    return %c0_i32, %c0_i32_0 : i32, i32
  }
  func.func @transform_2(%arg0: i32) -> (i32, i32) {
    %c0_i32 = arith.constant 0 : i32
    %c0_i32_0 = arith.constant 0 : i32
    %c0_i32_1 = arith.constant 0 : i32
    return %c0_i32, %c0_i32_0 : i32, i32
  }
  func.func @transform_3(%arg0: i32) -> (i32, i32) {
    %c0_i32 = arith.constant 0 : i32
    %c0_i32_0 = arith.constant 0 : i32
    return %arg0, %c0_i32 : i32, i32
  }
}

module attributes {stable_mosaic.version = 11 : i64} {
  func.func @_gemm_kernel(%arg0: i32, %arg1: i32, %arg2: i32, %arg3: memref<8x512xbf16, #tpu.memory_space<vmem>>, %arg4: memref<512x256xbf16, #tpu.memory_space<vmem>>, %arg5: memref<8x256xf32, #tpu.memory_space<vmem>>, %arg6: memref<1x256xf32, #tpu.memory_space<vmem>>, %arg7: memref<1x256xf32, #tpu.memory_space<vmem>>, %arg8: memref<8x256xf32, #tpu.memory_space<vmem>>) attributes {dimension_semantics = [#tpu.dimension_semantics<parallel>, #tpu.dimension_semantics<arbitrary>, #tpu.dimension_semantics<arbitrary>], iteration_bounds = array<i64: 1, 1, 4>, scalar_prefetch = 0 : i64, scratch_operands = 1 : i64, tpu.core_type = #tpu.core_type<tc>, window_params = [{transform_indices = @transform_0, window_bounds = array<i64: 8, 512>}, {transform_indices = @transform_1, window_bounds = array<i64: 512, 256>}, {transform_indices = @transform_2, window_bounds = array<i64: 8, 256>}, {transform_indices = @transform_3, window_bounds = array<i64: 1, 256>}, {transform_indices = @transform_4, window_bounds = array<i64: 1, 256>}]} {
    %c0_i32 = arith.constant 0 : i32
    %0 = arith.cmpi eq, %arg2, %c0_i32 : i32
    %1 = arith.extui %0 : i1 to i32
    %c0_i32_0 = arith.constant 0 : i32
    %2 = arith.cmpi ne, %1, %c0_i32_0 : i32
    scf.if %2 {
      %cst_12 = arith.constant 0.000000e+00 : f32
      %17 = vector.broadcast %cst_12 : f32 to vector<8x256xf32>
      %c0_13 = arith.constant 0 : index
      %c0_14 = arith.constant 0 : index
      %18 = vector.load %arg8[%c0_13, %c0_14] : memref<8x256xf32, #tpu.memory_space<vmem>>, vector<8x256xf32>
      tpu.vector_store %arg8[%c0_13, %c0_14], %17 {strides = array<i32>} : memref<8x256xf32, #tpu.memory_space<vmem>>, vector<8x256xf32>,
    } else {
    }
    %c0_i32_1 = arith.constant 0 : i32
    %3 = arith.cmpi eq, %arg1, %c0_i32_1 : i32
    %c0_i32_2 = arith.constant 0 : i32
    %4 = arith.cmpi eq, %arg2, %c0_i32_2 : i32
    %5 = arith.andi %3, %4 : i1
    %6 = arith.extui %5 : i1 to i32
    %c0_i32_3 = arith.constant 0 : i32
    %7 = arith.cmpi ne, %6, %c0_i32_3 : i32
    scf.if %7 {
      %cst_12 = arith.constant 0.000000e+00 : f32
      %17 = vector.broadcast %cst_12 : f32 to vector<1x256xf32>
      %c0_13 = arith.constant 0 : index
      %c0_14 = arith.constant 0 : index
      %18 = vector.load %arg6[%c0_13, %c0_14] : memref<1x256xf32, #tpu.memory_space<vmem>>, vector<1x256xf32>
      tpu.vector_store %arg6[%c0_13, %c0_14], %17 {strides = array<i32>} : memref<1x256xf32, #tpu.memory_space<vmem>>, vector<1x256xf32>,
      %cst_15 = arith.constant 0.000000e+00 : f32
      %19 = vector.broadcast %cst_15 : f32 to vector<1x256xf32>
      %c0_16 = arith.constant 0 : index
      %c0_17 = arith.constant 0 : index
      %20 = vector.load %arg7[%c0_16, %c0_17] : memref<1x256xf32, #tpu.memory_space<vmem>>, vector<1x256xf32>
      tpu.vector_store %arg7[%c0_16, %c0_17], %19 {strides = array<i32>} : memref<1x256xf32, #tpu.memory_space<vmem>>, vector<1x256xf32>,
    } else {
    }
    %c0 = arith.constant 0 : index
    %c0_4 = arith.constant 0 : index
    %8 = vector.load %arg8[%c0, %c0_4] : memref<8x256xf32, #tpu.memory_space<vmem>>, vector<8x256xf32>
    %c0_5 = arith.constant 0 : index
    %c0_6 = arith.constant 0 : index
    %9 = vector.load %arg3[%c0_5, %c0_6] : memref<8x512xbf16, #tpu.memory_space<vmem>>, vector<8x512xbf16>
    %c0_7 = arith.constant 0 : index
    %c0_8 = arith.constant 0 : index
    %10 = vector.load %arg4[%c0_7, %c0_8] : memref<512x256xbf16, #tpu.memory_space<vmem>>, vector<512x256xbf16>
    %cst = arith.constant dense<0.000000e+00> : vector<8x256xf32>
    %11 = tpu.matmul %9, %10, %cst {dimension_numbers = #tpu.dot_dimension_numbers<[1], [0], [0], [1], [0, 0, 1, 1], [], []>} : vector<8x512xbf16>, vector<512x256xbf16>, vector<8x256xf32> -> vector<8x256xf32>
    %12 = arith.addf %8, %11 : vector<8x256xf32>
    %c0_9 = arith.constant 0 : index
    %c0_10 = arith.constant 0 : index
    %13 = vector.load %arg8[%c0_9, %c0_10] : memref<8x256xf32, #tpu.memory_space<vmem>>, vector<8x256xf32>
    tpu.vector_store %arg8[%c0_9, %c0_10], %12 {strides = array<i32>} : memref<8x256xf32, #tpu.memory_space<vmem>>, vector<8x256xf32>,
    %c3_i32 = arith.constant 3 : i32
    %14 = arith.cmpi eq, %arg2, %c3_i32 : i32
    %15 = arith.extui %14 : i1 to i32
    %c0_i32_11 = arith.constant 0 : i32
    %16 = arith.cmpi ne, %15, %c0_i32_11 : i32
    scf.if %16 {
      %c0_12 = arith.constant 0 : index
      %c0_13 = arith.constant 0 : index
      %17 = vector.load %arg8[%c0_12, %c0_13] : memref<8x256xf32, #tpu.memory_space<vmem>>, vector<8x256xf32>
      %c0_14 = arith.constant 0 : index
      %c0_15 = arith.constant 0 : index
      %18 = vector.load %arg6[%c0_14, %c0_15] : memref<1x256xf32, #tpu.memory_space<vmem>>, vector<1x256xf32>
      %cst_16 = arith.constant dense<0.000000e+00> : vector<256xf32>
      %19 = vector.multi_reduction <add>, %17, %cst_16 [0] : vector<8x256xf32> to vector<256xf32>
      %20 = vector.shape_cast %19 : vector<256xf32> to vector<1x256xf32>
      %21 = arith.addf %18, %20 : vector<1x256xf32>
      %c0_17 = arith.constant 0 : index
      %c0_18 = arith.constant 0 : index
      %22 = vector.load %arg6[%c0_17, %c0_18] : memref<1x256xf32, #tpu.memory_space<vmem>>, vector<1x256xf32>
      tpu.vector_store %arg6[%c0_17, %c0_18], %21 {strides = array<i32>} : memref<1x256xf32, #tpu.memory_space<vmem>>, vector<1x256xf32>,
      %c0_19 = arith.constant 0 : index
      %c0_20 = arith.constant 0 : index
      %23 = vector.load %arg7[%c0_19, %c0_20] : memref<1x256xf32, #tpu.memory_space<vmem>>, vector<1x256xf32>
      %24 = arith.mulf %17, %17 : vector<8x256xf32>
      %cst_21 = arith.constant dense<0.000000e+00> : vector<256xf32>
      %25 = vector.multi_reduction <add>, %24, %cst_21 [0] : vector<8x256xf32> to vector<256xf32>
      %26 = vector.shape_cast %25 : vector<256xf32> to vector<1x256xf32>
      %27 = arith.addf %23, %26 : vector<1x256xf32>
      %c0_22 = arith.constant 0 : index
      %c0_23 = arith.constant 0 : index
      %28 = vector.load %arg7[%c0_22, %c0_23] : memref<1x256xf32, #tpu.memory_space<vmem>>, vector<1x256xf32>
      tpu.vector_store %arg7[%c0_22, %c0_23], %27 {strides = array<i32>} : memref<1x256xf32, #tpu.memory_space<vmem>>, vector<1x256xf32>,
      %c0_24 = arith.constant 0 : index
      %c0_25 = arith.constant 0 : index
      %29 = vector.load %arg5[%c0_24, %c0_25] : memref<8x256xf32, #tpu.memory_space<vmem>>, vector<8x256xf32>
      tpu.vector_store %arg5[%c0_24, %c0_25], %17 {strides = array<i32>} : memref<8x256xf32, #tpu.memory_space<vmem>>, vector<8x256xf32>,
    } else {
    }
    return
  }
  func.func @transform_0(%arg0: i32, %arg1: i32, %arg2: i32) -> (i32, i32) {
    %c0_i32 = arith.constant 0 : i32
    return %arg1, %arg2 : i32, i32
  }
  func.func @transform_1(%arg0: i32, %arg1: i32, %arg2: i32) -> (i32, i32) {
    %c0_i32 = arith.constant 0 : i32
    return %arg2, %arg0 : i32, i32
  }
  func.func @transform_2(%arg0: i32, %arg1: i32, %arg2: i32) -> (i32, i32) {
    %c0_i32 = arith.constant 0 : i32
    return %arg1, %arg0 : i32, i32
  }
  func.func @transform_3(%arg0: i32, %arg1: i32, %arg2: i32) -> (i32, i32) {
    %c0_i32 = arith.constant 0 : i32
    %c0_i32_0 = arith.constant 0 : i32
    return %c0_i32, %arg0 : i32, i32
  }
  func.func @transform_4(%arg0: i32, %arg1: i32, %arg2: i32) -> (i32, i32) {
    %c0_i32 = arith.constant 0 : i32
    %c0_i32_0 = arith.constant 0 : i32
    return %c0_i32, %arg0 : i32, i32
  }
}

module attributes {stable_mosaic.version = 11 : i64} {
  func.func @_gemm_kernel(%arg0: i32, %arg1: i32, %arg2: i32, %arg3: memref<2x512xbf16, #tpu.memory_space<vmem>>, %arg4: memref<512x256xbf16, #tpu.memory_space<vmem>>, %arg5: memref<2x256xf32, #tpu.memory_space<vmem>>, %arg6: memref<1x256xf32, #tpu.memory_space<vmem>>, %arg7: memref<1x256xf32, #tpu.memory_space<vmem>>, %arg8: memref<2x256xf32, #tpu.memory_space<vmem>>) attributes {dimension_semantics = [#tpu.dimension_semantics<parallel>, #tpu.dimension_semantics<arbitrary>, #tpu.dimension_semantics<arbitrary>], iteration_bounds = array<i64: 2, 1, 8>, scalar_prefetch = 0 : i64, scratch_operands = 1 : i64, tpu.core_type = #tpu.core_type<tc>, window_params = [{transform_indices = @transform_0, window_bounds = array<i64: 2, 512>}, {transform_indices = @transform_1, window_bounds = array<i64: 512, 256>}, {transform_indices = @transform_2, window_bounds = array<i64: 2, 256>}, {transform_indices = @transform_3, window_bounds = array<i64: 1, 256>}, {transform_indices = @transform_4, window_bounds = array<i64: 1, 256>}]} {
    %c0_i32 = arith.constant 0 : i32
    %0 = arith.cmpi eq, %arg2, %c0_i32 : i32
    %1 = arith.extui %0 : i1 to i32
    %c0_i32_0 = arith.constant 0 : i32
    %2 = arith.cmpi ne, %1, %c0_i32_0 : i32
    scf.if %2 {
      %cst_12 = arith.constant 0.000000e+00 : f32
      %17 = vector.broadcast %cst_12 : f32 to vector<2x256xf32>
      %c0_13 = arith.constant 0 : index
      %c0_14 = arith.constant 0 : index
      %18 = vector.load %arg8[%c0_13, %c0_14] : memref<2x256xf32, #tpu.memory_space<vmem>>, vector<2x256xf32>
      tpu.vector_store %arg8[%c0_13, %c0_14], %17 {strides = array<i32>} : memref<2x256xf32, #tpu.memory_space<vmem>>, vector<2x256xf32>,
    } else {
    }
    %c0_i32_1 = arith.constant 0 : i32
    %3 = arith.cmpi eq, %arg1, %c0_i32_1 : i32
    %c0_i32_2 = arith.constant 0 : i32
    %4 = arith.cmpi eq, %arg2, %c0_i32_2 : i32
    %5 = arith.andi %3, %4 : i1
    %6 = arith.extui %5 : i1 to i32
    %c0_i32_3 = arith.constant 0 : i32
    %7 = arith.cmpi ne, %6, %c0_i32_3 : i32
    scf.if %7 {
      %cst_12 = arith.constant 0.000000e+00 : f32
      %17 = vector.broadcast %cst_12 : f32 to vector<1x256xf32>
      %c0_13 = arith.constant 0 : index
      %c0_14 = arith.constant 0 : index
      %18 = vector.load %arg6[%c0_13, %c0_14] : memref<1x256xf32, #tpu.memory_space<vmem>>, vector<1x256xf32>
      tpu.vector_store %arg6[%c0_13, %c0_14], %17 {strides = array<i32>} : memref<1x256xf32, #tpu.memory_space<vmem>>, vector<1x256xf32>,
      %cst_15 = arith.constant 0.000000e+00 : f32
      %19 = vector.broadcast %cst_15 : f32 to vector<1x256xf32>
      %c0_16 = arith.constant 0 : index
      %c0_17 = arith.constant 0 : index
      %20 = vector.load %arg7[%c0_16, %c0_17] : memref<1x256xf32, #tpu.memory_space<vmem>>, vector<1x256xf32>
      tpu.vector_store %arg7[%c0_16, %c0_17], %19 {strides = array<i32>} : memref<1x256xf32, #tpu.memory_space<vmem>>, vector<1x256xf32>,
    } else {
    }
    %c0 = arith.constant 0 : index
    %c0_4 = arith.constant 0 : index
    %8 = vector.load %arg8[%c0, %c0_4] : memref<2x256xf32, #tpu.memory_space<vmem>>, vector<2x256xf32>
    %c0_5 = arith.constant 0 : index
    %c0_6 = arith.constant 0 : index
    %9 = vector.load %arg3[%c0_5, %c0_6] : memref<2x512xbf16, #tpu.memory_space<vmem>>, vector<2x512xbf16>
    %c0_7 = arith.constant 0 : index
    %c0_8 = arith.constant 0 : index
    %10 = vector.load %arg4[%c0_7, %c0_8] : memref<512x256xbf16, #tpu.memory_space<vmem>>, vector<512x256xbf16>
    %cst = arith.constant dense<0.000000e+00> : vector<2x256xf32>
    %11 = tpu.matmul %9, %10, %cst {dimension_numbers = #tpu.dot_dimension_numbers<[1], [0], [0], [1], [0, 0, 1, 1], [], []>} : vector<2x512xbf16>, vector<512x256xbf16>, vector<2x256xf32> -> vector<2x256xf32>
    %12 = arith.addf %8, %11 : vector<2x256xf32>
    %c0_9 = arith.constant 0 : index
    %c0_10 = arith.constant 0 : index
    %13 = vector.load %arg8[%c0_9, %c0_10] : memref<2x256xf32, #tpu.memory_space<vmem>>, vector<2x256xf32>
    tpu.vector_store %arg8[%c0_9, %c0_10], %12 {strides = array<i32>} : memref<2x256xf32, #tpu.memory_space<vmem>>, vector<2x256xf32>,
    %c7_i32 = arith.constant 7 : i32
    %14 = arith.cmpi eq, %arg2, %c7_i32 : i32
    %15 = arith.extui %14 : i1 to i32
    %c0_i32_11 = arith.constant 0 : i32
    %16 = arith.cmpi ne, %15, %c0_i32_11 : i32
    scf.if %16 {
      %c0_12 = arith.constant 0 : index
      %c0_13 = arith.constant 0 : index
      %17 = vector.load %arg8[%c0_12, %c0_13] : memref<2x256xf32, #tpu.memory_space<vmem>>, vector<2x256xf32>
      %c0_14 = arith.constant 0 : index
      %c0_15 = arith.constant 0 : index
      %18 = vector.load %arg6[%c0_14, %c0_15] : memref<1x256xf32, #tpu.memory_space<vmem>>, vector<1x256xf32>
      %cst_16 = arith.constant dense<0.000000e+00> : vector<256xf32>
      %19 = vector.multi_reduction <add>, %17, %cst_16 [0] : vector<2x256xf32> to vector<256xf32>
      %20 = vector.shape_cast %19 : vector<256xf32> to vector<1x256xf32>
      %21 = arith.addf %18, %20 : vector<1x256xf32>
      %c0_17 = arith.constant 0 : index
      %c0_18 = arith.constant 0 : index
      %22 = vector.load %arg6[%c0_17, %c0_18] : memref<1x256xf32, #tpu.memory_space<vmem>>, vector<1x256xf32>
      tpu.vector_store %arg6[%c0_17, %c0_18], %21 {strides = array<i32>} : memref<1x256xf32, #tpu.memory_space<vmem>>, vector<1x256xf32>,
      %c0_19 = arith.constant 0 : index
      %c0_20 = arith.constant 0 : index
      %23 = vector.load %arg7[%c0_19, %c0_20] : memref<1x256xf32, #tpu.memory_space<vmem>>, vector<1x256xf32>
      %24 = arith.mulf %17, %17 : vector<2x256xf32>
      %cst_21 = arith.constant dense<0.000000e+00> : vector<256xf32>
      %25 = vector.multi_reduction <add>, %24, %cst_21 [0] : vector<2x256xf32> to vector<256xf32>
      %26 = vector.shape_cast %25 : vector<256xf32> to vector<1x256xf32>
      %27 = arith.addf %23, %26 : vector<1x256xf32>
      %c0_22 = arith.constant 0 : index
      %c0_23 = arith.constant 0 : index
      %28 = vector.load %arg7[%c0_22, %c0_23] : memref<1x256xf32, #tpu.memory_space<vmem>>, vector<1x256xf32>
      tpu.vector_store %arg7[%c0_22, %c0_23], %27 {strides = array<i32>} : memref<1x256xf32, #tpu.memory_space<vmem>>, vector<1x256xf32>,
      %c0_24 = arith.constant 0 : index
      %c0_25 = arith.constant 0 : index
      %29 = vector.load %arg5[%c0_24, %c0_25] : memref<2x256xf32, #tpu.memory_space<vmem>>, vector<2x256xf32>
      tpu.vector_store %arg5[%c0_24, %c0_25], %17 {strides = array<i32>} : memref<2x256xf32, #tpu.memory_space<vmem>>, vector<2x256xf32>,
    } else {
    }
    return
  }
  func.func @transform_0(%arg0: i32, %arg1: i32, %arg2: i32) -> (i32, i32) {
    %c0_i32 = arith.constant 0 : i32
    return %arg1, %arg2 : i32, i32
  }
  func.func @transform_1(%arg0: i32, %arg1: i32, %arg2: i32) -> (i32, i32) {
    %c0_i32 = arith.constant 0 : i32
    return %arg2, %arg0 : i32, i32
  }
  func.func @transform_2(%arg0: i32, %arg1: i32, %arg2: i32) -> (i32, i32) {
    %c0_i32 = arith.constant 0 : i32
    return %arg1, %arg0 : i32, i32
  }
  func.func @transform_3(%arg0: i32, %arg1: i32, %arg2: i32) -> (i32, i32) {
    %c0_i32 = arith.constant 0 : i32
    %c0_i32_0 = arith.constant 0 : i32
    return %c0_i32, %arg0 : i32, i32
  }
  func.func @transform_4(%arg0: i32, %arg1: i32, %arg2: i32) -> (i32, i32) {
    %c0_i32 = arith.constant 0 : i32
    %c0_i32_0 = arith.constant 0 : i32
    return %c0_i32, %arg0 : i32, i32
  }
}

module attributes {stable_mosaic.version = 11 : i64} {
  func.func @_affine_leaky_kernel(%arg0: i32, %arg1: memref<2x512xf32, #tpu.memory_space<vmem>>, %arg2: memref<1x512xf32, #tpu.memory_space<vmem>>, %arg3: memref<1x512xf32, #tpu.memory_space<vmem>>, %arg4: memref<2x512xbf16, #tpu.memory_space<vmem>>) attributes {dimension_semantics = [#tpu.dimension_semantics<parallel>], iteration_bounds = array<i64: 1>, scalar_prefetch = 0 : i64, scratch_operands = 0 : i64, tpu.core_type = #tpu.core_type<tc>, window_params = [{transform_indices = @transform_0, window_bounds = array<i64: 2, 512>}, {pipeline_mode = #tpu.pipeline_mode<synchronous>, transform_indices = @transform_1, window_bounds = array<i64: 1, 512>}, {pipeline_mode = #tpu.pipeline_mode<synchronous>, transform_indices = @transform_2, window_bounds = array<i64: 1, 512>}, {transform_indices = @transform_3, window_bounds = array<i64: 2, 512>}]} {
    %c0 = arith.constant 0 : index
    %c0_0 = arith.constant 0 : index
    %0 = vector.load %arg1[%c0, %c0_0] : memref<2x512xf32, #tpu.memory_space<vmem>>, vector<2x512xf32>
    %c0_1 = arith.constant 0 : index
    %c0_2 = arith.constant 0 : index
    %1 = vector.load %arg2[%c0_1, %c0_2] : memref<1x512xf32, #tpu.memory_space<vmem>>, vector<1x512xf32>
    %2 = vector.broadcast %1 : vector<1x512xf32> to vector<2x512xf32>
    %3 = arith.mulf %0, %2 : vector<2x512xf32>
    %c0_3 = arith.constant 0 : index
    %c0_4 = arith.constant 0 : index
    %4 = vector.load %arg3[%c0_3, %c0_4] : memref<1x512xf32, #tpu.memory_space<vmem>>, vector<1x512xf32>
    %5 = vector.broadcast %4 : vector<1x512xf32> to vector<2x512xf32>
    %6 = arith.addf %3, %5 : vector<2x512xf32>
    %cst = arith.constant 0.000000e+00 : f32
    %7 = vector.broadcast %cst : f32 to vector<2x512xf32>
    %8 = arith.cmpf oge, %6, %7 : vector<2x512xf32>
    %cst_5 = arith.constant 2.000000e-01 : f32
    %9 = vector.broadcast %cst_5 : f32 to vector<2x512xf32>
    %10 = arith.mulf %9, %6 : vector<2x512xf32>
    %11 = arith.select %8, %6, %10 : vector<2x512xi1>, vector<2x512xf32>
    %12 = arith.truncf %11 : vector<2x512xf32> to vector<2x512xbf16>
    %c0_6 = arith.constant 0 : index
    %c0_7 = arith.constant 0 : index
    %13 = vector.load %arg4[%c0_6, %c0_7] : memref<2x512xbf16, #tpu.memory_space<vmem>>, vector<2x512xbf16>
    tpu.vector_store %arg4[%c0_6, %c0_7], %12 {strides = array<i32>} : memref<2x512xbf16, #tpu.memory_space<vmem>>, vector<2x512xbf16>,
    return
  }
  func.func @transform_0(%arg0: i32) -> (i32, i32) {
    %c0_i32 = arith.constant 0 : i32
    %c0_i32_0 = arith.constant 0 : i32
    return %arg0, %c0_i32 : i32, i32
  }
  func.func @transform_1(%arg0: i32) -> (i32, i32) {
    %c0_i32 = arith.constant 0 : i32
    %c0_i32_0 = arith.constant 0 : i32
    %c0_i32_1 = arith.constant 0 : i32
    return %c0_i32, %c0_i32_0 : i32, i32
  }
  func.func @transform_2(%arg0: i32) -> (i32, i32) {
    %c0_i32 = arith.constant 0 : i32
    %c0_i32_0 = arith.constant 0 : i32
    %c0_i32_1 = arith.constant 0 : i32
    return %c0_i32, %c0_i32_0 : i32, i32
  }
  func.func @transform_3(%arg0: i32) -> (i32, i32) {
    %c0_i32 = arith.constant 0 : i32
    %c0_i32_0 = arith.constant 0 : i32
    return %arg0, %c0_i32 : i32, i32
  }
}

module attributes {stable_mosaic.version = 11 : i64} {
  func.func @_conv1x1_sigmoid_kernel(%arg0: i32, %arg1: memref<2x512xbf16, #tpu.memory_space<vmem>>, %arg2: memref<1x512xf32, #tpu.memory_space<vmem>>, %arg3: memref<2x1xf32, #tpu.memory_space<vmem>>) attributes {dimension_semantics = [#tpu.dimension_semantics<parallel>], iteration_bounds = array<i64: 1>, scalar_prefetch = 0 : i64, scratch_operands = 0 : i64, tpu.core_type = #tpu.core_type<tc>, window_params = [{transform_indices = @transform_0, window_bounds = array<i64: 2, 512>}, {pipeline_mode = #tpu.pipeline_mode<synchronous>, transform_indices = @transform_1, window_bounds = array<i64: 1, 512>}, {transform_indices = @transform_2, window_bounds = array<i64: 2, 1>}]} {
    %c0 = arith.constant 0 : index
    %c0_0 = arith.constant 0 : index
    %0 = vector.load %arg1[%c0, %c0_0] : memref<2x512xbf16, #tpu.memory_space<vmem>>, vector<2x512xbf16>
    %1 = arith.extf %0 : vector<2x512xbf16> to vector<2x512xf32>
    %c0_1 = arith.constant 0 : index
    %c0_2 = arith.constant 0 : index
    %2 = vector.load %arg2[%c0_1, %c0_2] : memref<1x512xf32, #tpu.memory_space<vmem>>, vector<1x512xf32>
    %3 = vector.broadcast %2 : vector<1x512xf32> to vector<2x512xf32>
    %4 = arith.mulf %1, %3 : vector<2x512xf32>
    %cst = arith.constant dense<0.000000e+00> : vector<2xf32>
    %5 = vector.multi_reduction <add>, %4, %cst [1] : vector<2x512xf32> to vector<2xf32>
    %6 = vector.shape_cast %5 : vector<2xf32> to vector<2x1xf32>
    %7 = arith.negf %6 : vector<2x1xf32>
    %8 = math.exp %7 : vector<2x1xf32>
    %cst_3 = arith.constant 1.000000e+00 : f32
    %9 = vector.broadcast %cst_3 : f32 to vector<2x1xf32>
    %10 = arith.addf %9, %8 : vector<2x1xf32>
    %11 = arith.divf %9, %10 : vector<2x1xf32>
    %c0_4 = arith.constant 0 : index
    %c0_5 = arith.constant 0 : index
    %12 = vector.load %arg3[%c0_4, %c0_5] : memref<2x1xf32, #tpu.memory_space<vmem>>, vector<2x1xf32>
    tpu.vector_store %arg3[%c0_4, %c0_5], %11 {strides = array<i32>} : memref<2x1xf32, #tpu.memory_space<vmem>>, vector<2x1xf32>,
    return
  }
  func.func @transform_0(%arg0: i32) -> (i32, i32) {
    %c0_i32 = arith.constant 0 : i32
    %c0_i32_0 = arith.constant 0 : i32
    return %arg0, %c0_i32 : i32, i32
  }
  func.func @transform_1(%arg0: i32) -> (i32, i32) {
    %c0_i32 = arith.constant 0 : i32
    %c0_i32_0 = arith.constant 0 : i32
    %c0_i32_1 = arith.constant 0 : i32
    return %c0_i32, %c0_i32_0 : i32, i32
  }
  func.func @transform_2(%arg0: i32) -> (i32, i32) {
    %c0_i32 = arith.constant 0 : i32
    %c0_i32_0 = arith.constant 0 : i32
    return %arg0, %c0_i32 : i32, i32
  }
}

</mosaic_0001>

<llo_original>
// kernel: discriminator_forward.8
$region0: #{discriminator_forward.8}
  #allocation0 [shape = 'u32[]', space=smem, size = 0x4, offset = 0x4, fixed_abs, tag = 'smem constant byte address 0x4 - core index']
  #allocation1 [shape = 'u32[72,128]{1,0:T(1,128)}', space=vmem, size = 0x9000, scoped, tag = 'internal scratch']
  #allocation2 [shape = 'f32[128,64]{1,0:T(8,128)}', space=vmem, size = 0x10000, scoped, tag = 'scratch operand']
  %s0 = inlined_call_operand.vmem [shape: bf16[128,64], index: 0, kind: input, shape index: {}]
  %s1 = inlined_call_operand.vmem [shape: bf16[64,64], index: 1, kind: input, shape index: {}]
  %s2 = inlined_call_operand.vmem [shape: bf16[128,64], index: 2, kind: output, shape index: {}]
  %s3 = sld [smem:[#allocation0]]
  $region26: #{discriminator_forward.8} parent=0
    _
  %s5 = ssub.s32 1, %s3
  %s6 = scalar_select 0, %s5, %s3
  // Predicated region
  $region2: #{discriminator_forward.8} parent=0 // pred_check
    _
  $region3: #{discriminator_forward.8} parent=0 // pred_check_branch
    %8 = sbr.rel (0) target = $region5
  $region4: #{discriminator_forward.8} parent=0 // pred_region
    _
  $region5: #{discriminator_forward.8} parent=0 // pred_fallthru
    _
  // Predicated region
  $region6: #{discriminator_forward.8} parent=0 // pred_check
    _
  $region7: #{discriminator_forward.8} parent=0 // pred_check_branch
    %10 = sbr.rel (0) target = $region9
  $region8: #{discriminator_forward.8} parent=0 // pred_region
    _
  $region9: #{discriminator_forward.8} parent=0 // pred_fallthru
    _
  %p12 = scmp.eq.s32.totalorder 0, 0
  // Predicated region
  $region10: #{discriminator_forward.8} parent=0 // pred_check
    %p13 = pneg %p12
  $region11: #{discriminator_forward.8} parent=0 // pred_check_branch
    %15 = sbr.rel (%p13) target = $region13
  $region12: #{discriminator_forward.8} parent=0 // pred_region
    %vm16 = vcmask 523264
    %17 = vst.msk [vmem:[#allocation2] sm:$0xff] %vm16, 0.0
    %18 = vst.msk [vmem:[#allocation2 + $0x8] sm:$0xff] %vm16, 0.0
    %19 = vst.msk [vmem:[#allocation2 + $0x10] sm:$0xff] %vm16, 0.0
    %20 = vst.msk [vmem:[#allocation2 + $0x18] sm:$0xff] %vm16, 0.0
    %21 = vst.msk [vmem:[#allocation2 + $0x20] sm:$0xff] %vm16, 0.0
    %22 = vst.msk [vmem:[#allocation2 + $0x28] sm:$0xff] %vm16, 0.0
    %23 = vst.msk [vmem:[#allocation2 + $0x30] sm:$0xff] %vm16, 0.0
    %24 = vst.msk [vmem:[#allocation2 + $0x38] sm:$0xff] %vm16, 0.0
    %25 = vst.msk [vmem:[#allocation2 + $0x40] sm:$0xff] %vm16, 0.0
    %26 = vst.msk [vmem:[#allocation2 + $0x48] sm:$0xff] %vm16, 0.0
    %27 = vst.msk [vmem:[#allocation2 + $0x50] sm:$0xff] %vm16, 0.0
    %28 = vst.msk [vmem:[#allocation2 + $0x58] sm:$0xff] %vm16, 0.0
    %29 = vst.msk [vmem:[#allocation2 + $0x60] sm:$0xff] %vm16, 0.0
    %30 = vst.msk [vmem:[#allocation2 + $0x68] sm:$0xff] %vm16, 0.0
    %31 = vst.msk [vmem:[#allocation2 + $0x70] sm:$0xff] %vm16, 0.0
    %32 = vst.msk [vmem:[#allocation2 + $0x78] sm:$0xff] %vm16, 0.0
  $region13: #{discriminator_forward.8} parent=0 // pred_fallthru
    _
  %v33 = vld [vmem:[#allocation2] sm:$0xff]
  %v34 = vld [vmem:[#allocation2 + $0x8] sm:$0xff]
  %v35 = vld [vmem:[#allocation2 + $0x10] sm:$0xff]
  %v36 = vld [vmem:[#allocation2 + $0x18] sm:$0xff]
  %v37 = vld [vmem:[#allocation2 + $0x20] sm:$0xff]
  %v38 = vld [vmem:[#allocation2 + $0x28] sm:$0xff]
  %v39 = vld [vmem:[#allocation2 + $0x30] sm:$0xff]
  %v40 = vld [vmem:[#allocation2 + $0x38] sm:$0xff]
  %v41 = vld [vmem:[#allocation2 + $0x40] sm:$0xff]
  %v42 = vld [vmem:[#allocation2 + $0x48] sm:$0xff]
  %v43 = vld [vmem:[#allocation2 + $0x50] sm:$0xff]
  %v44 = vld [vmem:[#allocation2 + $0x58] sm:$0xff]
  %v45 = vld [vmem:[#allocation2 + $0x60] sm:$0xff]
  %v46 = vld [vmem:[#allocation2 + $0x68] sm:$0xff]
  %v47 = vld [vmem:[#allocation2 + $0x70] sm:$0xff]
  %v48 = vld [vmem:[#allocation2 + $0x78] sm:$0xff]
  %v49 = vld [vmem:[%s0] sm:$0xf]
  %v50 = vld [vmem:[%s0 + $0x4] sm:$0xf]
  %v51 = vld [vmem:[%s0 + $0x8] sm:$0xf]
  %v52 = vld [vmem:[%s0 + $0xc] sm:$0xf]
  %v53 = vld [vmem:[%s0 + $0x10] sm:$0xf]
  %v54 = vld [vmem:[%s0 + $0x14] sm:$0xf]
  %v55 = vld [vmem:[%s0 + $0x18] sm:$0xf]
  %v56 = vld [vmem:[%s0 + $0x1c] sm:$0xf]
  %v57 = vld [vmem:[%s0 + $0x20] sm:$0xf]
  %v58 = vld [vmem:[%s0 + $0x24] sm:$0xf]
  %v59 = vld [vmem:[%s0 + $0x28] sm:$0xf]
  %v60 = vld [vmem:[%s0 + $0x2c] sm:$0xf]
  %v61 = vld [vmem:[%s0 + $0x30] sm:$0xf]
  %v62 = vld [vmem:[%s0 + $0x34] sm:$0xf]
  %v63 = vld [vmem:[%s0 + $0x38] sm:$0xf]
  %v64 = vld [vmem:[%s0 + $0x3c] sm:$0xf]
  %v65 = vld [vmem:[%s1] sm:$0xf]
  %v66 = vld [vmem:[%s1 + $0x4] sm:$0xf]
  %v67 = vld [vmem:[%s1 + $0x8] sm:$0xf]
  %v68 = vld [vmem:[%s1 + $0xc] sm:$0xf]
  %v69 = vld [vmem:[%s1 + $0x10] sm:$0xf]
  %v70 = vld [vmem:[%s1 + $0x14] sm:$0xf]
  %v71 = vld [vmem:[%s1 + $0x18] sm:$0xf]
  %v72 = vld [vmem:[%s1 + $0x1c] sm:$0xf]
  %v89 = vunpack.c.l.b16 %v49
  %v90 = vunpack.c.l.b16 %v50
  %v91 = vunpack.c.l.b16 %v51
  %v92 = vunpack.c.l.b16 %v52
  %v93 = vunpack.c.l.b16 %v53
  %v94 = vunpack.c.l.b16 %v54
  %v95 = vunpack.c.l.b16 %v55
  %v96 = vunpack.c.l.b16 %v56
  %v97 = vunpack.c.l.b16 %v57
  %v98 = vunpack.c.l.b16 %v58
  %v99 = vunpack.c.l.b16 %v59
  %v100 = vunpack.c.l.b16 %v60
  %v101 = vunpack.c.l.b16 %v61
  %v102 = vunpack.c.l.b16 %v62
  %v103 = vunpack.c.l.b16 %v63
  %v104 = vunpack.c.l.b16 %v64
  %v105 = vpack.c.b16 %v90, %v89
  %v106 = vpack.c.b16 %v92, %v91
  %v107 = vpack.c.b16 %v94, %v93
  %v108 = vpack.c.b16 %v96, %v95
  %v109 = vpack.c.b16 %v98, %v97
  %v110 = vpack.c.b16 %v100, %v99
  %v111 = vpack.c.b16 %v102, %v101
  %v112 = vpack.c.b16 %v104, %v103
  %v121 = vunpack.c.l.b16 %v65
  %v122 = vunpack.c.l.b16 %v66
  %v123 = vunpack.c.l.b16 %v67
  %v124 = vunpack.c.l.b16 %v68
  %v125 = vunpack.c.l.b16 %v69
  %v126 = vunpack.c.l.b16 %v70
  %v127 = vunpack.c.l.b16 %v71
  %v128 = vunpack.c.l.b16 %v72
  %v129 = vpack.c.b16 %v122, %v121
  %v130 = vpack.c.b16 %v124, %v123
  %v131 = vpack.c.b16 %v126, %v125
  %v132 = vpack.c.b16 %v128, %v127
  %vm137 = vcmask 523264
  %v139 = vsel %vm137, %v105, 0
  %v142 = vsel %vm137, %v106, 0
  %v145 = vsel %vm137, %v107, 0
  %v148 = vsel %vm137, %v108, 0
  %v151 = vsel %vm137, %v109, 0
  %v154 = vsel %vm137, %v110, 0
  %v157 = vsel %vm137, %v111, 0
  %v160 = vsel %vm137, %v112, 0
  %162 = vmatpush.bf16.msra.mxu0 0
  %163 = vmatpush.bf16.msra.mxu0 0
  %164 = vmatpush.bf16.msra.mxu0 0
  %165 = vmatpush.bf16.msra.mxu0 0
  %166 = vmatpush.bf16.msra.mxu0 %v132
  %167 = vmatpush.bf16.msra.mxu0 %v131
  %168 = vmatpush.bf16.msra.mxu0 %v130
  %169 = vmatpush.bf16.msra.mxu0 %v129
  %170 = vmatmul.bf16.gmra.mxu0 %v139
  %v171 = vpop.f32.mrf.mxu0
  %v172 = vadd.f32 0.0, %v171
  %v173 = vpop.f32.mrf.mxu0
  %v174 = vadd.f32 0.0, %v173
  %175 = vmatmul.bf16.gmra.mxu0 %v142
  %v176 = vpop.f32.mrf.mxu0
  %v177 = vadd.f32 0.0, %v176
  %v178 = vpop.f32.mrf.mxu0
  %v179 = vadd.f32 0.0, %v178
  %180 = vmatmul.bf16.gmra.mxu0 %v145
  %v181 = vpop.f32.mrf.mxu0
  %v182 = vadd.f32 0.0, %v181
  %v183 = vpop.f32.mrf.mxu0
  %v184 = vadd.f32 0.0, %v183
  %185 = vmatmul.bf16.gmra.mxu0 %v148
  %v186 = vpop.f32.mrf.mxu0
  %v187 = vadd.f32 0.0, %v186
  %v188 = vpop.f32.mrf.mxu0
  %v189 = vadd.f32 0.0, %v188
  %190 = vmatmul.bf16.gmra.mxu0 %v151
  %v191 = vpop.f32.mrf.mxu0
  %v192 = vadd.f32 0.0, %v191
  %v193 = vpop.f32.mrf.mxu0
  %v194 = vadd.f32 0.0, %v193
  %195 = vmatmul.bf16.gmra.mxu0 %v154
  %v196 = vpop.f32.mrf.mxu0
  %v197 = vadd.f32 0.0, %v196
  %v198 = vpop.f32.mrf.mxu0
  %v199 = vadd.f32 0.0, %v198
  %200 = vmatmul.bf16.gmra.mxu0 %v157
  %v201 = vpop.f32.mrf.mxu0
  %v202 = vadd.f32 0.0, %v201
  %v203 = vpop.f32.mrf.mxu0
  %v204 = vadd.f32 0.0, %v203
  %205 = vmatmul.bf16.gmra.mxu0 %v160
  %v206 = vpop.f32.mrf.mxu0
  %v207 = vadd.f32 0.0, %v206
  %v208 = vpop.f32.mrf.mxu0
  %v209 = vadd.f32 0.0, %v208
  %210 = vdwg.mxu0
  %v211 = vadd.f32 %v33, %v172
  %v212 = vadd.f32 %v34, %v174
  %v213 = vadd.f32 %v35, %v177
  %v214 = vadd.f32 %v36, %v179
  %v215 = vadd.f32 %v37, %v182
  %v216 = vadd.f32 %v38, %v184
  %v217 = vadd.f32 %v39, %v187
  %v218 = vadd.f32 %v40, %v189
  %v219 = vadd.f32 %v41, %v192
  %v220 = vadd.f32 %v42, %v194
  %v221 = vadd.f32 %v43, %v197
  %v222 = vadd.f32 %v44, %v199
  %v223 = vadd.f32 %v45, %v202
  %v224 = vadd.f32 %v46, %v204
  %v225 = vadd.f32 %v47, %v207
  %v226 = vadd.f32 %v48, %v209
  %227 = vst.msk [vmem:[#allocation2] sm:$0xff] %vm137, %v211
  %228 = vst.msk [vmem:[#allocation2 + $0x8] sm:$0xff] %vm137, %v212
  %229 = vst.msk [vmem:[#allocation2 + $0x10] sm:$0xff] %vm137, %v213
  %230 = vst.msk [vmem:[#allocation2 + $0x18] sm:$0xff] %vm137, %v214
  %231 = vst.msk [vmem:[#allocation2 + $0x20] sm:$0xff] %vm137, %v215
  %232 = vst.msk [vmem:[#allocation2 + $0x28] sm:$0xff] %vm137, %v216
  %233 = vst.msk [vmem:[#allocation2 + $0x30] sm:$0xff] %vm137, %v217
  %234 = vst.msk [vmem:[#allocation2 + $0x38] sm:$0xff] %vm137, %v218
  %235 = vst.msk [vmem:[#allocation2 + $0x40] sm:$0xff] %vm137, %v219
  %236 = vst.msk [vmem:[#allocation2 + $0x48] sm:$0xff] %vm137, %v220
  %237 = vst.msk [vmem:[#allocation2 + $0x50] sm:$0xff] %vm137, %v221
  %238 = vst.msk [vmem:[#allocation2 + $0x58] sm:$0xff] %vm137, %v222
  %239 = vst.msk [vmem:[#allocation2 + $0x60] sm:$0xff] %vm137, %v223
  %240 = vst.msk [vmem:[#allocation2 + $0x68] sm:$0xff] %vm137, %v224
  %241 = vst.msk [vmem:[#allocation2 + $0x70] sm:$0xff] %vm137, %v225
  %242 = vst.msk [vmem:[#allocation2 + $0x78] sm:$0xff] %vm137, %v226
  // Predicated region
  $region14: #{discriminator_forward.8} parent=0 // pred_check
    %p243 = pneg %p12
  $region15: #{discriminator_forward.8} parent=0 // pred_check_branch
    %245 = sbr.rel (%p243) target = $region17
  $region16: #{discriminator_forward.8} parent=0 // pred_region
    %v246 = vld [vmem:[#allocation2] sm:$0xff]
    %v247 = vld [vmem:[#allocation2 + $0x8] sm:$0xff]
    %v248 = vld [vmem:[#allocation2 + $0x10] sm:$0xff]
    %v249 = vld [vmem:[#allocation2 + $0x18] sm:$0xff]
    %v250 = vld [vmem:[#allocation2 + $0x20] sm:$0xff]
    %v251 = vld [vmem:[#allocation2 + $0x28] sm:$0xff]
    %v252 = vld [vmem:[#allocation2 + $0x30] sm:$0xff]
    %v253 = vld [vmem:[#allocation2 + $0x38] sm:$0xff]
    %v254 = vld [vmem:[#allocation2 + $0x40] sm:$0xff]
    %v255 = vld [vmem:[#allocation2 + $0x48] sm:$0xff]
    %v256 = vld [vmem:[#allocation2 + $0x50] sm:$0xff]
    %v257 = vld [vmem:[#allocation2 + $0x58] sm:$0xff]
    %v258 = vld [vmem:[#allocation2 + $0x60] sm:$0xff]
    %v259 = vld [vmem:[#allocation2 + $0x68] sm:$0xff]
    %v260 = vld [vmem:[#allocation2 + $0x70] sm:$0xff]
    %v261 = vld [vmem:[#allocation2 + $0x78] sm:$0xff]
    %vm262 = vcmp.ge.f32.partialorder %v246, 0.0
    %vm263 = vcmp.ge.f32.partialorder %v247, 0.0
    %vm264 = vcmp.ge.f32.partialorder %v248, 0.0
    %vm265 = vcmp.ge.f32.partialorder %v249, 0.0
    %vm266 = vcmp.ge.f32.partialorder %v250, 0.0
    %vm267 = vcmp.ge.f32.partialorder %v251, 0.0
    %vm268 = vcmp.ge.f32.partialorder %v252, 0.0
    %vm269 = vcmp.ge.f32.partialorder %v253, 0.0
    %vm270 = vcmp.ge.f32.partialorder %v254, 0.0
    %vm271 = vcmp.ge.f32.partialorder %v255, 0.0
    %vm272 = vcmp.ge.f32.partialorder %v256, 0.0
    %vm273 = vcmp.ge.f32.partialorder %v257, 0.0
    %vm274 = vcmp.ge.f32.partialorder %v258, 0.0
    %vm275 = vcmp.ge.f32.partialorder %v259, 0.0
    %vm276 = vcmp.ge.f32.partialorder %v260, 0.0
    %vm277 = vcmp.ge.f32.partialorder %v261, 0.0
    %v278 = vmul.f32 %v246, 0.2
    %v279 = vmul.f32 %v247, 0.2
    %v280 = vmul.f32 %v248, 0.2
    %v281 = vmul.f32 %v249, 0.2
    %v282 = vmul.f32 %v250, 0.2
    %v283 = vmul.f32 %v251, 0.2
    %v284 = vmul.f32 %v252, 0.2
    %v285 = vmul.f32 %v253, 0.2
    %v286 = vmul.f32 %v254, 0.2
    %v287 = vmul.f32 %v255, 0.2
    %v288 = vmul.f32 %v256, 0.2
    %v289 = vmul.f32 %v257, 0.2
    %v290 = vmul.f32 %v258, 0.2
    %v291 = vmul.f32 %v259, 0.2
    %v292 = vmul.f32 %v260, 0.2
    %v293 = vmul.f32 %v261, 0.2
    %v294 = vsel %vm262, %v246, %v278
    %v295 = vsel %vm263, %v247, %v279
    %v296 = vsel %vm264, %v248, %v280
    %v297 = vsel %vm265, %v249, %v281
    %v298 = vsel %vm266, %v250, %v282
    %v299 = vsel %vm267, %v251, %v283
    %v300 = vsel %vm268, %v252, %v284
    %v301 = vsel %vm269, %v253, %v285
    %v302 = vsel %vm270, %v254, %v286
    %v303 = vsel %vm271, %v255, %v287
    %v304 = vsel %vm272, %v256, %v288
    %v305 = vsel %vm273, %v257, %v289
    %v306 = vsel %vm274, %v258, %v290
    %v307 = vsel %vm275, %v259, %v291
    %v308 = vsel %vm276, %v260, %v292
    %v309 = vsel %vm277, %v261, %v293
    %v310 = vpack.c.bf16 %v294, %v294
    %v311 = vpack.c.bf16 %v295, %v295
    %v312 = vpack.c.bf16 %v296, %v296
    %v313 = vpack.c.bf16 %v297, %v297
    %v314 = vpack.c.bf16 %v298, %v298
    %v315 = vpack.c.bf16 %v299, %v299
    %v316 = vpack.c.bf16 %v300, %v300
    %v317 = vpack.c.bf16 %v301, %v301
    %v318 = vpack.c.bf16 %v302, %v302
    %v319 = vpack.c.bf16 %v303, %v303
    %v320 = vpack.c.bf16 %v304, %v304
    %v321 = vpack.c.bf16 %v305, %v305
    %v322 = vpack.c.bf16 %v306, %v306
    %v323 = vpack.c.bf16 %v307, %v307
    %v324 = vpack.c.bf16 %v308, %v308
    %v325 = vpack.c.bf16 %v309, %v309
    %vm326 = vcmask 519168
    %327 = vst.msk [vmem:[%s2] sm:$0xf] %vm326, %v310
    %328 = vst.msk [vmem:[%s2 + $0x4] sm:$0xf] %vm326, %v311
    %329 = vst.msk [vmem:[%s2 + $0x8] sm:$0xf] %vm326, %v312
    %330 = vst.msk [vmem:[%s2 + $0xc] sm:$0xf] %vm326, %v313
    %331 = vst.msk [vmem:[%s2 + $0x10] sm:$0xf] %vm326, %v314
    %332 = vst.msk [vmem:[%s2 + $0x14] sm:$0xf] %vm326, %v315
    %333 = vst.msk [vmem:[%s2 + $0x18] sm:$0xf] %vm326, %v316
    %334 = vst.msk [vmem:[%s2 + $0x1c] sm:$0xf] %vm326, %v317
    %335 = vst.msk [vmem:[%s2 + $0x20] sm:$0xf] %vm326, %v318
    %336 = vst.msk [vmem:[%s2 + $0x24] sm:$0xf] %vm326, %v319
    %337 = vst.msk [vmem:[%s2 + $0x28] sm:$0xf] %vm326, %v320
    %338 = vst.msk [vmem:[%s2 + $0x2c] sm:$0xf] %vm326, %v321
    %339 = vst.msk [vmem:[%s2 + $0x30] sm:$0xf] %vm326, %v322
    %340 = vst.msk [vmem:[%s2 + $0x34] sm:$0xf] %vm326, %v323
    %341 = vst.msk [vmem:[%s2 + $0x38] sm:$0xf] %vm326, %v324
    %342 = vst.msk [vmem:[%s2 + $0x3c] sm:$0xf] %vm326, %v325
  $region17: #{discriminator_forward.8} parent=0 // pred_fallthru
    _
  // Predicated region
  $region18: #{discriminator_forward.8} parent=0 // pred_check
    _
  $region19: #{discriminator_forward.8} parent=0 // pred_check_branch
    %344 = sbr.rel (0) target = $region21
  $region20: #{discriminator_forward.8} parent=0 // pred_region
    _
  $region21: #{discriminator_forward.8} parent=0 // pred_fallthru
    _
  // Predicated region
  $region22: #{discriminator_forward.8} parent=0 // pred_check
    _
  $region23: #{discriminator_forward.8} parent=0 // pred_check_branch
    %346 = sbr.rel (0) target = $region25
  $region24: #{discriminator_forward.8} parent=0 // pred_region
    _
  $region25: #{discriminator_forward.8} parent=0 // pred_fallthru
    _

// kernel: discriminator_forward.9
$region0: #{discriminator_forward.9}
  #allocation0 [shape = 'u32[]', space=smem, size = 0x4, offset = 0x4, fixed_abs, tag = 'smem constant byte address 0x4 - core index']
  #allocation1 [shape = 'u32[72,128]{1,0:T(1,128)}', space=vmem, size = 0x9000, scoped, tag = 'internal scratch']
  #allocation2 [shape = 'f32[32,128]{1,0:T(8,128)}', space=vmem, size = 0x4000, scoped, tag = 'scratch operand']
  %s0 = inlined_call_operand.vmem [shape: bf16[32,1024], index: 0, kind: input, shape index: {}]
  %s1 = inlined_call_operand.vmem [shape: bf16[1024,128], index: 1, kind: input, shape index: {}]
  %s2 = inlined_call_operand.vmem [shape: f32[32,128], index: 2, kind: output, shape index: {0}]
  %s3 = inlined_call_operand.vmem [shape: f32[1,128], index: 3, kind: output, shape index: {1}]
  %s4 = inlined_call_operand.vmem [shape: f32[1,128], index: 4, kind: output, shape index: {2}]
  %5 = xla_tuple %s2, %s3, %s4
  %s6 = sld [smem:[#allocation0]]
  $region92: #{discriminator_forward.9} parent=0
    _
  %s8 = ssub.s32 1, %s6
  %s9 = scalar_select 0, %s8, %s6
  $region1: #{discriminator_forward.9} parent=0
    #allocation3 [shape = 'u8[65536]{0}', space=vmem, size = 0x10000, scoped, tag = 'input window, operand 0']
    loop: start=0, step=1, limit=4
    $region2: #{discriminator_forward.9} parent=1 // loop_pre_header
      _
    $region3: #{discriminator_forward.9} parent=1 // loop_header
      %s11 = sphi 0, %s15
      %p12 = scmp.ge.s32.totalorder %s11, 4
      %s18 = sphi 0, %s37
      %s19 = sphi 0, %s33
      %s20 = sphi 0, %s29
      %s21 = sphi 0, %s18
      %s22 = sphi 0, %s19
      %s23 = sphi 0, %s20
      %s24 = sphi 0, %s21
      %s25 = sphi 0, %s22
      %s26 = sphi 0, %s23
      %s42 = sphi 0, %s44
      %s45 = sphi 0, %s42
      %s46 = sphi 0, %s45
      %s62 = sphi 0, %s46
      %s70 = sphi 0, %s72
      %s73 = sphi 0, %s70
      %s74 = sphi 0, %s73
      %s90 = sphi 0, %s74
      %s98 = sphi 0, %s100
      %s101 = sphi 0, %s98
      %s102 = sphi 0, %s101
      %s118 = sphi 0, %s102
      %s124 = sphi 0, %s126
      %s127 = sphi 0, %s124
      %s128 = sphi 0, %s127
      %s144 = sphi 0, %s128
      %s150 = sphi 0, %s152
      %s153 = sphi 0, %s150
      %s154 = sphi 0, %s153
      %s170 = sphi 0, %s154
    $region4: #{discriminator_forward.9} parent=1 // loop_header_branch
      %14 = sbr.rel (%p12) target = $region8
    $region5: #{discriminator_forward.9} parent=1 // loop_body
      %s16 = ssub.s32 %s11, 1
      %s17 = ssub.s32 %s11, 2
      %s27 = sadd.s32 1, %s20
      %p28 = scmp.ge.s32.totalorder %s27, 2
      %s29 = scalar_select %p28, 0, %s27
      %s30 = sadd.s32 1, %s19
      %s31 = scalar_select %p28, %s30, %s19
      %p32 = scmp.ge.s32.totalorder %s31, 1
      %s33 = scalar_select %p32, 0, %s31
      %s34 = sadd.s32 1, %s18
      %s35 = scalar_select %p32, %s34, %s18
      %p36 = scmp.ge.s32.totalorder %s35, 1
      %s37 = scalar_select %p36, 0, %s35
      %s38 = ssub.s32 %s19, %s33
      %s39 = ssub.s32 %s20, %s29
      %s40 = sor.u32 %s38, %s39
      %p41 = scmp.eq.s32.totalorder %s40, 0
      %s43 = sadd.s32 %s42, 1
      %s44 = scalar_select %p41, %s42, %s43
      %p47 = pneg %p41
      %p48 = scmp.eq.s32.totalorder %s11, 1
      %p49 = por %p47, %p48
      %p50 = scmp.ne.s32.totalorder %s42, %s45
      %p51 = scmp.eq.s32.totalorder %s11, 0
      %p52 = por %p50, %p51
      %p53 = scmp.ne.s32.totalorder %s42, %s45
      %p54 = scmp.eq.s32.totalorder %s16, 1
      %p55 = por %p53, %p54
      %p56 = scmp.ne.s32.totalorder %s45, %s46
      %p57 = scmp.eq.s32.totalorder %s16, 0
      %p58 = por %p56, %p57
      %p59 = scmp.ne.s32.totalorder %s45, %s46
      %p60 = scmp.eq.s32.totalorder %s17, 1
      %p61 = por %p59, %p60
      %p63 = scmp.ne.s32.totalorder %s46, %s62
      %p64 = scmp.eq.s32.totalorder %s17, 0
      %p65 = por %p63, %p64
      %s66 = ssub.s32 %s20, %s29
      %s67 = ssub.s32 %s18, %s37
      %s68 = sor.u32 %s66, %s67
      %p69 = scmp.eq.s32.totalorder %s68, 0
      %s71 = sadd.s32 %s70, 1
      %s72 = scalar_select %p69, %s70, %s71
      %p75 = pneg %p69
      %p76 = scmp.eq.s32.totalorder %s11, 1
      %p77 = por %p75, %p76
      %p78 = scmp.ne.s32.totalorder %s70, %s73
      %p79 = scmp.eq.s32.totalorder %s11, 0
      %p80 = por %p78, %p79
      %p81 = scmp.ne.s32.totalorder %s70, %s73
      %p82 = scmp.eq.s32.totalorder %s16, 1
      %p83 = por %p81, %p82
      %p84 = scmp.ne.s32.totalorder %s73, %s74
      %p85 = scmp.eq.s32.totalorder %s16, 0
      %p86 = por %p84, %p85
      %p87 = scmp.ne.s32.totalorder %s73, %s74
      %p88 = scmp.eq.s32.totalorder %s17, 1
      %p89 = por %p87, %p88
      %p91 = scmp.ne.s32.totalorder %s74, %s90
      %p92 = scmp.eq.s32.totalorder %s17, 0
      %p93 = por %p91, %p92
      %s94 = ssub.s32 %s19, %s33
      %s95 = ssub.s32 %s18, %s37
      %s96 = sor.u32 %s94, %s95
      %p97 = scmp.eq.s32.totalorder %s96, 0
      %s99 = sadd.s32 %s98, 1
      %s100 = scalar_select %p97, %s98, %s99
      %p103 = pneg %p97
      %p104 = scmp.eq.s32.totalorder %s11, 1
      %p105 = por %p103, %p104
      %p106 = scmp.ne.s32.totalorder %s98, %s101
      %p107 = scmp.eq.s32.totalorder %s11, 0
      %p108 = por %p106, %p107
      %p109 = scmp.ne.s32.totalorder %s98, %s101
      %p110 = scmp.eq.s32.totalorder %s16, 1
      %p111 = por %p109, %p110
      %p112 = scmp.ne.s32.totalorder %s101, %s102
      %p113 = scmp.eq.s32.totalorder %s16, 0
      %p114 = por %p112, %p113
      %p115 = scmp.ne.s32.totalorder %s101, %s102
      %p116 = scmp.eq.s32.totalorder %s17, 1
      %p117 = por %p115, %p116
      %p119 = scmp.ne.s32.totalorder %s102, %s118
      %p120 = scmp.eq.s32.totalorder %s17, 0
      %p121 = por %p119, %p120
      %s122 = ssub.s32 %s18, %s37
      %p123 = scmp.eq.s32.totalorder %s122, 0
      %s125 = sadd.s32 %s124, 1
      %s126 = scalar_select %p123, %s124, %s125
      %p129 = pneg %p123
      %p130 = scmp.eq.s32.totalorder %s11, 1
      %p131 = por %p129, %p130
      %p132 = scmp.ne.s32.totalorder %s124, %s127
      %p133 = scmp.eq.s32.totalorder %s11, 0
      %p134 = por %p132, %p133
      %p135 = scmp.ne.s32.totalorder %s124, %s127
      %p136 = scmp.eq.s32.totalorder %s16, 1
      %p137 = por %p135, %p136
      %p138 = scmp.ne.s32.totalorder %s127, %s128
      %p139 = scmp.eq.s32.totalorder %s16, 0
      %p140 = por %p138, %p139
      %p141 = scmp.ne.s32.totalorder %s127, %s128
      %p142 = scmp.eq.s32.totalorder %s17, 1
      %p143 = por %p141, %p142
      %p145 = scmp.ne.s32.totalorder %s128, %s144
      %p146 = scmp.eq.s32.totalorder %s17, 0
      %p147 = por %p145, %p146
      %s148 = ssub.s32 %s18, %s37
      %p149 = scmp.eq.s32.totalorder %s148, 0
      %s151 = sadd.s32 %s150, 1
      %s152 = scalar_select %p149, %s150, %s151
      %p155 = pneg %p149
      %p156 = scmp.eq.s32.totalorder %s11, 1
      %p157 = por %p155, %p156
      %p158 = scmp.ne.s32.totalorder %s150, %s153
      %p159 = scmp.eq.s32.totalorder %s11, 0
      %p160 = por %p158, %p159
      %p161 = scmp.ne.s32.totalorder %s150, %s153
      %p162 = scmp.eq.s32.totalorder %s16, 1
      %p163 = por %p161, %p162
      %p164 = scmp.ne.s32.totalorder %s153, %s154
      %p165 = scmp.eq.s32.totalorder %s16, 0
      %p166 = por %p164, %p165
      %p167 = scmp.ne.s32.totalorder %s153, %s154
      %p168 = scmp.eq.s32.totalorder %s17, 1
      %p169 = por %p167, %p168
      %p171 = scmp.ne.s32.totalorder %s154, %s170
      %p172 = scmp.eq.s32.totalorder %s17, 0
      %p173 = por %p171, %p172
      %p174 = scmp.le.s32.totalorder 1, %s11
      %p175 = scmp.lt.s32.totalorder %s11, 3
      %p176 = pnand %p174, %p175
      %p177 = pneg %p176
      // Predicated region
      $region9: #{discriminator_forward.9} parent=5 // pred_check
        _
      $region10: #{discriminator_forward.9} parent=5 // pred_check_branch
        %179 = sbr.rel (%p176) target = $region12
      $region11: #{discriminator_forward.9} parent=5 // pred_region
        %s180 = ssub.s32 %s11, 1
      $region12: #{discriminator_forward.9} parent=5 // pred_fallthru
        _
      %p181 = scmp.lt.s32.totalorder %s11, 2
      // Predicated region
      $region13: #{discriminator_forward.9} parent=5 // pred_check
        %p182 = pneg %p181
      $region14: #{discriminator_forward.9} parent=5 // pred_check_branch
        %184 = sbr.rel (%p182) target = $region16
      $region15: #{discriminator_forward.9} parent=5 // pred_region
        // Predicated region
        $region17: #{discriminator_forward.9} parent=15 // pred_check
          %p185 = pneg %p52
        $region18: #{discriminator_forward.9} parent=15 // pred_check_branch
          %187 = sbr.rel (%p185) target = $region20
        $region19: #{discriminator_forward.9} parent=15 // pred_region
          %s188 = sand.u32 %s42, 1
          %s189 = sand.u32 %s42, 1
          %s190 = smul.addr %s189, 64
          %s191 = scalar_lea.vmem [#allocation3], %s190
          %s192 = smul.u32 4, %s19
          %s193 = smul.u32 4, %s20
          %s194 = smul.addr %s192, 8
          %s195 = sadd.s32 %s193, %s194
          %s196 = smul.addr %s195, 4
          %s197 = scalar_lea.vmem %s0, %s196
          // Predicated region
          $region21: #{discriminator_forward.9} parent=19 // pred_check
            _
          $region22: #{discriminator_forward.9} parent=19 // pred_check_branch
            %199 = sbr.rel (0) target = $region24
          $region23: #{discriminator_forward.9} parent=19 // pred_region
            // Predicated region
            $region25: #{discriminator_forward.9} parent=23 // pred_check
              _
            $region26: #{discriminator_forward.9} parent=23 // pred_check_branch
              %201 = sbr.rel (0) target = $region28
            $region27: #{discriminator_forward.9} parent=23 // pred_region
              loop: start=0, step=1, limit=1
              $region29: #{discriminator_forward.9} parent=27 // loop_pre_header
                _
              $region30: #{discriminator_forward.9} parent=27 // loop_header
                %s203 = sphi 0, %s207
                %p204 = scmp.ge.s32.totalorder %s203, 1
                %s208 = sphi %s197, %s197
                %s209 = sphi %s191, %s191
              $region31: #{discriminator_forward.9} parent=27 // loop_header_branch
                %206 = sbr.rel (%p204) target = $region35
              $region32: #{discriminator_forward.9} parent=27 // loop_body
                %v210 = vld [vmem:[%s208] sm:$0xff]
                %211 = vst [vmem:[%s209] sm:$0xff] %v210
                %v212 = vld [vmem:[%s208 + $0x8] sm:$0xff]
                %213 = vst [vmem:[%s209 + $0x8] sm:$0xff] %v212
                %v214 = vld [vmem:[%s208 + $0x20] sm:$0xff]
                %215 = vst [vmem:[%s209 + $0x10] sm:$0xff] %v214
                %v216 = vld [vmem:[%s208 + $0x28] sm:$0xff]
                %217 = vst [vmem:[%s209 + $0x18] sm:$0xff] %v216
                %v218 = vld [vmem:[%s208 + $0x40] sm:$0xff]
                %219 = vst [vmem:[%s209 + $0x20] sm:$0xff] %v218
                %v220 = vld [vmem:[%s208 + $0x48] sm:$0xff]
                %221 = vst [vmem:[%s209 + $0x28] sm:$0xff] %v220
                %v222 = vld [vmem:[%s208 + $0x60] sm:$0xff]
                %223 = vst [vmem:[%s209 + $0x30] sm:$0xff] %v222
                %v224 = vld [vmem:[%s208 + $0x68] sm:$0xff]
                %225 = vst [vmem:[%s209 + $0x38] sm:$0xff] %v224
              $region33: #{discriminator_forward.9} parent=27 // loop_footer
                %s207 = sadd.s32 1, %s203
              $region34: #{discriminator_forward.9} parent=27 // loop_footer_branch
                %202 = sbr.rel target = $region30
              $region35: #{discriminator_forward.9} parent=27 // loop_exit
                _
            $region28: #{discriminator_forward.9} parent=23 // pred_fallthru
              _
            // Predicated region
            $region36: #{discriminator_forward.9} parent=23 // pred_check
              _
            $region37: #{discriminator_forward.9} parent=23 // pred_check_branch
              %227 = sbr.rel target = $region39
            $region38: #{discriminator_forward.9} parent=23 // pred_region
              _
            $region39: #{discriminator_forward.9} parent=23 // pred_fallthru
              _
          $region24: #{discriminator_forward.9} parent=19 // pred_fallthru
            _
          %228 = vnop
        $region20: #{discriminator_forward.9} parent=15 // pred_fallthru
          _
        // Predicated region
        $region40: #{discriminator_forward.9} parent=15 // pred_check
          %p229 = pneg %p80
        $region41: #{discriminator_forward.9} parent=15 // pred_check_branch
          %231 = sbr.rel (%p229) target = $region43
        $region42: #{discriminator_forward.9} parent=15 // pred_region
          %s232 = smul.u32 64, %s20
          %p233 = scmp.lt.s32.totalorder %s232, 127
          %s234 = scalar_select %p233, %s232, 127
          %p235 = scmp.lt.s32.totalorder %s18, 0
          %s236 = scalar_select %p235, %s18, 0
          %s237 = sadd.s32 %s236, %s234
          %s238 = smul.addr %s237, 4
          %s239 = scalar_lea.vmem %s1, %s238
          %s240 = smul.u32 64, %s20
        $region43: #{discriminator_forward.9} parent=15 // pred_fallthru
          _
      $region16: #{discriminator_forward.9} parent=5 // pred_fallthru
        _
      %p241 = scmp.le.s32.totalorder 1, %s11
      %p242 = scmp.lt.s32.totalorder %s11, 3
      %p243 = pnand %p241, %p242
      %p244 = pneg %p243
      // Predicated region
      $region44: #{discriminator_forward.9} parent=5 // pred_check
        _
      $region45: #{discriminator_forward.9} parent=5 // pred_check_branch
        %246 = sbr.rel (%p243) target = $region47
      $region46: #{discriminator_forward.9} parent=5 // pred_region
        %s247 = ssub.s32 %s11, 1
        %s248 = sand.u32 %s45, 1
        %s249 = sand.u32 %s45, 1
        %s250 = smul.addr %s249, 64
        %s251 = scalar_lea.vmem [#allocation3], %s250
        // Predicated region
        $region48: #{discriminator_forward.9} parent=46 // pred_check
          %p252 = pneg %p58
        $region49: #{discriminator_forward.9} parent=46 // pred_check_branch
          %254 = sbr.rel (%p252) target = $region51
        $region50: #{discriminator_forward.9} parent=46 // pred_region
          _
        $region51: #{discriminator_forward.9} parent=46 // pred_fallthru
          _
        %s255 = sand.u32 %s45, 1
        %s256 = sand.u32 %s45, 1
        %s257 = smul.addr %s256, 64
        %s258 = scalar_lea.vmem [#allocation3], %s257
        %p259 = pneg %p58
        %p260 = pneg %p55
        %s261 = smul.u32 64, %s23
        %p262 = scmp.lt.s32.totalorder %s261, 127
        %s263 = scalar_select %p262, %s261, 127
        %p264 = scmp.lt.s32.totalorder %s21, 0
        %s265 = scalar_select %p264, %s21, 0
        %s266 = sadd.s32 %s265, %s263
        %s267 = smul.addr %s266, 4
        %s268 = scalar_lea.vmem %s1, %s267
        %p269 = pneg %p86
        %p270 = pneg %p83
        %p271 = pneg %p114
        %p272 = pneg %p111
        %s273 = smul.u32 4, %s22
        %p274 = scmp.lt.s32.totalorder %s273, 3
        %s275 = scalar_select %p274, %s273, 3
        %p276 = scmp.lt.s32.totalorder %s21, 0
        %s277 = scalar_select %p276, %s21, 0
        %s278 = sadd.s32 %s277, %s275
        %s279 = smul.addr %s278, 8
        %s280 = scalar_lea.vmem %s2, %s279
        %p281 = pneg %p140
        %p282 = pneg %p137
        %p283 = scmp.lt.s32.totalorder %s21, 0
        %s284 = scalar_select %p283, %s21, 0
        %s285 = scalar_lea.vmem %s3, %s284
        %p286 = pneg %p166
        %p287 = pneg %p163
        %p288 = scmp.lt.s32.totalorder %s21, 0
        %s289 = scalar_select %p288, %s21, 0
        %s290 = scalar_lea.vmem %s4, %s289
        %s291 = smul.u32 4, %s22
        %s292 = smul.u32 4, %s23
        %s293 = smul.u32 64, %s23
        %p294 = scmp.lt.s32.totalorder %s293, 127
        %s295 = scalar_select %p294, %s293, 127
        %p296 = scmp.lt.s32.totalorder %s21, 0
        %s297 = scalar_select %p296, %s21, 0
        %s298 = sadd.s32 %s297, %s295
        %s299 = smul.addr %s298, 4
        %s300 = scalar_lea.vmem %s1, %s299
        %s301 = smul.u32 64, %s23
        %s302 = smul.u32 4, %s22
        %p303 = scmp.lt.s32.totalorder %s302, 3
        %s304 = scalar_select %p303, %s302, 3
        %p305 = scmp.lt.s32.totalorder %s21, 0
        %s306 = scalar_select %p305, %s21, 0
        %s307 = sadd.s32 %s306, %s304
        %s308 = smul.addr %s307, 8
        %s309 = scalar_lea.vmem %s2, %s308
        %s310 = smul.u32 4, %s22
        %p311 = scmp.lt.s32.totalorder %s21, 0
        %s312 = scalar_select %p311, %s21, 0
        %s313 = scalar_lea.vmem %s3, %s312
        %p314 = scmp.lt.s32.totalorder %s21, 0
        %s315 = scalar_select %p314, %s21, 0
        %s316 = scalar_lea.vmem %s4, %s315
        %p317 = scmp.eq.s32.totalorder %s23, 0
        // Predicated region
        $region52: #{discriminator_forward.9} parent=46 // pred_check
          %p318 = pneg %p317
        $region53: #{discriminator_forward.9} parent=46 // pred_check_branch
          %320 = sbr.rel (%p318) target = $region55
        $region54: #{discriminator_forward.9} parent=46 // pred_region
          %321 = vst [vmem:[#allocation2] sm:$0xff] 0.0
          %322 = vst [vmem:[#allocation2 + $0x8] sm:$0xff] 0.0
          %323 = vst [vmem:[#allocation2 + $0x10] sm:$0xff] 0.0
          %324 = vst [vmem:[#allocation2 + $0x18] sm:$0xff] 0.0
        $region55: #{discriminator_forward.9} parent=46 // pred_fallthru
          _
        %p325 = scmp.eq.s32.totalorder %s22, 0
        %p326 = pnand %p325, %p317
        %p327 = pneg %p326
        // Predicated region
        $region56: #{discriminator_forward.9} parent=46 // pred_check
          _
        $region57: #{discriminator_forward.9} parent=46 // pred_check_branch
          %329 = sbr.rel (%p326) target = $region59
        $region58: #{discriminator_forward.9} parent=46 // pred_region
          %330 = vst [vmem:[%s313] sm:$0x1] 0.0
          %331 = vst [vmem:[%s316] sm:$0x1] 0.0
        $region59: #{discriminator_forward.9} parent=46 // pred_fallthru
          _
        %v332 = vld [vmem:[#allocation2] sm:$0xff]
        %v333 = vld [vmem:[#allocation2 + $0x8] sm:$0xff]
        %v334 = vld [vmem:[#allocation2 + $0x10] sm:$0xff]
        %v335 = vld [vmem:[#allocation2 + $0x18] sm:$0xff]
        %v336 = vld [vmem:[%s251] sm:$0xff]
        %v337 = vld [vmem:[%s251 + $0x8] sm:$0xff]
        %v338 = vld [vmem:[%s251 + $0x10] sm:$0xff]
        %v339 = vld [vmem:[%s251 + $0x18] sm:$0xff]
        %v340 = vld [vmem:[%s251 + $0x20] sm:$0xff]
        %v341 = vld [vmem:[%s251 + $0x28] sm:$0xff]
        %v342 = vld [vmem:[%s251 + $0x30] sm:$0xff]
        %v343 = vld [vmem:[%s251 + $0x38] sm:$0xff]
        %v344 = vld [vmem:[%s300] sm:$0xf]
        %v345 = vld [vmem:[%s300 + $0x4] sm:$0xf]
        %v346 = vld [vmem:[%s300 + $0x8] sm:$0xf]
        %v347 = vld [vmem:[%s300 + $0xc] sm:$0xf]
        %v348 = vld [vmem:[%s300 + $0x10] sm:$0xf]
        %v349 = vld [vmem:[%s300 + $0x14] sm:$0xf]
        %v350 = vld [vmem:[%s300 + $0x18] sm:$0xf]
        %v351 = vld [vmem:[%s300 + $0x1c] sm:$0xf]
        %v352 = vld [vmem:[%s300 + $0x20] sm:$0xf]
        %v353 = vld [vmem:[%s300 + $0x24] sm:$0xf]
        %v354 = vld [vmem:[%s300 + $0x28] sm:$0xf]
        %v355 = vld [vmem:[%s300 + $0x2c] sm:$0xf]
        %v356 = vld [vmem:[%s300 + $0x30] sm:$0xf]
        %v357 = vld [vmem:[%s300 + $0x34] sm:$0xf]
        %v358 = vld [vmem:[%s300 + $0x38] sm:$0xf]
        %v359 = vld [vmem:[%s300 + $0x3c] sm:$0xf]
        %v360 = vld [vmem:[%s300 + $0x40] sm:$0xf]
        %v361 = vld [vmem:[%s300 + $0x44] sm:$0xf]
        %v362 = vld [vmem:[%s300 + $0x48] sm:$0xf]
        %v363 = vld [vmem:[%s300 + $0x4c] sm:$0xf]
        %v364 = vld [vmem:[%s300 + $0x50] sm:$0xf]
        %v365 = vld [vmem:[%s300 + $0x54] sm:$0xf]
        %v366 = vld [vmem:[%s300 + $0x58] sm:$0xf]
        %v367 = vld [vmem:[%s300 + $0x5c] sm:$0xf]
        %v368 = vld [vmem:[%s300 + $0x60] sm:$0xf]
        %v369 = vld [vmem:[%s300 + $0x64] sm:$0xf]
        %v370 = vld [vmem:[%s300 + $0x68] sm:$0xf]
        %v371 = vld [vmem:[%s300 + $0x6c] sm:$0xf]
        %v372 = vld [vmem:[%s300 + $0x70] sm:$0xf]
        %v373 = vld [vmem:[%s300 + $0x74] sm:$0xf]
        %v374 = vld [vmem:[%s300 + $0x78] sm:$0xf]
        %v375 = vld [vmem:[%s300 + $0x7c] sm:$0xf]
        %v376 = vld [vmem:[%s300 + $0x80] sm:$0xf]
        %v377 = vld [vmem:[%s300 + $0x84] sm:$0xf]
        %v378 = vld [vmem:[%s300 + $0x88] sm:$0xf]
        %v379 = vld [vmem:[%s300 + $0x8c] sm:$0xf]
        %v380 = vld [vmem:[%s300 + $0x90] sm:$0xf]
        %v381 = vld [vmem:[%s300 + $0x94] sm:$0xf]
        %v382 = vld [vmem:[%s300 + $0x98] sm:$0xf]
        %v383 = vld [vmem:[%s300 + $0x9c] sm:$0xf]
        %v384 = vld [vmem:[%s300 + $0xa0] sm:$0xf]
        %v385 = vld [vmem:[%s300 + $0xa4] sm:$0xf]
        %v386 = vld [vmem:[%s300 + $0xa8] sm:$0xf]
        %v387 = vld [vmem:[%s300 + $0xac] sm:$0xf]
        %v388 = vld [vmem:[%s300 + $0xb0] sm:$0xf]
        %v389 = vld [vmem:[%s300 + $0xb4] sm:$0xf]
        %v390 = vld [vmem:[%s300 + $0xb8] sm:$0xf]
        %v391 = vld [vmem:[%s300 + $0xbc] sm:$0xf]
        %v392 = vld [vmem:[%s300 + $0xc0] sm:$0xf]
        %v393 = vld [vmem:[%s300 + $0xc4] sm:$0xf]
        %v394 = vld [vmem:[%s300 + $0xc8] sm:$0xf]
        %v395 = vld [vmem:[%s300 + $0xcc] sm:$0xf]
        %v396 = vld [vmem:[%s300 + $0xd0] sm:$0xf]
        %v397 = vld [vmem:[%s300 + $0xd4] sm:$0xf]
        %v398 = vld [vmem:[%s300 + $0xd8] sm:$0xf]
        %v399 = vld [vmem:[%s300 + $0xdc] sm:$0xf]
        %v400 = vld [vmem:[%s300 + $0xe0] sm:$0xf]
        %v401 = vld [vmem:[%s300 + $0xe4] sm:$0xf]
        %v402 = vld [vmem:[%s300 + $0xe8] sm:$0xf]
        %v403 = vld [vmem:[%s300 + $0xec] sm:$0xf]
        %v404 = vld [vmem:[%s300 + $0xf0] sm:$0xf]
        %v405 = vld [vmem:[%s300 + $0xf4] sm:$0xf]
        %v406 = vld [vmem:[%s300 + $0xf8] sm:$0xf]
        %v407 = vld [vmem:[%s300 + $0xfc] sm:$0xf]
        %v416 = vunpack.c.l.b16 %v336
        %v417 = vunpack.c.h.b16 %v336
        %v418 = vunpack.c.l.b16 %v337
        %v419 = vunpack.c.h.b16 %v337
        %v420 = vunpack.c.l.b16 %v338
        %v421 = vunpack.c.h.b16 %v338
        %v422 = vunpack.c.l.b16 %v339
        %v423 = vunpack.c.h.b16 %v339
        %v424 = vunpack.c.l.b16 %v340
        %v425 = vunpack.c.h.b16 %v340
        %v426 = vunpack.c.l.b16 %v341
        %v427 = vunpack.c.h.b16 %v341
        %v428 = vunpack.c.l.b16 %v342
        %v429 = vunpack.c.h.b16 %v342
        %v430 = vunpack.c.l.b16 %v343
        %v431 = vunpack.c.h.b16 %v343
        %v432 = vpack.c.b16 %v420, %v416
        %v433 = vpack.c.b16 %v421, %v417
        %v434 = vpack.c.b16 %v422, %v418
        %v435 = vpack.c.b16 %v423, %v419
        %v436 = vpack.c.b16 %v428, %v424
        %v437 = vpack.c.b16 %v429, %v425
        %v438 = vpack.c.b16 %v430, %v426
        %v439 = vpack.c.b16 %v431, %v427
        %v512 = vunpack.c.l.b16 %v344
        %v513 = vunpack.c.l.b16 %v345
        %v514 = vunpack.c.l.b16 %v346
        %v515 = vunpack.c.l.b16 %v347
        %v516 = vunpack.c.l.b16 %v348
        %v517 = vunpack.c.l.b16 %v349
        %v518 = vunpack.c.l.b16 %v350
        %v519 = vunpack.c.l.b16 %v351
        %v520 = vunpack.c.l.b16 %v352
        %v521 = vunpack.c.l.b16 %v353
        %v522 = vunpack.c.l.b16 %v354
        %v523 = vunpack.c.l.b16 %v355
        %v524 = vunpack.c.l.b16 %v356
        %v525 = vunpack.c.l.b16 %v357
        %v526 = vunpack.c.l.b16 %v358
        %v527 = vunpack.c.l.b16 %v359
        %v528 = vunpack.c.l.b16 %v360
        %v529 = vunpack.c.l.b16 %v361
        %v530 = vunpack.c.l.b16 %v362
        %v531 = vunpack.c.l.b16 %v363
        %v532 = vunpack.c.l.b16 %v364
        %v533 = vunpack.c.l.b16 %v365
        %v534 = vunpack.c.l.b16 %v366
        %v535 = vunpack.c.l.b16 %v367
        %v536 = vunpack.c.l.b16 %v368
        %v537 = vunpack.c.l.b16 %v369
        %v538 = vunpack.c.l.b16 %v370
        %v539 = vunpack.c.l.b16 %v371
        %v540 = vunpack.c.l.b16 %v372
        %v541 = vunpack.c.l.b16 %v373
        %v542 = vunpack.c.l.b16 %v374
        %v543 = vunpack.c.l.b16 %v375
        %v544 = vunpack.c.l.b16 %v376
        %v545 = vunpack.c.l.b16 %v377
        %v546 = vunpack.c.l.b16 %v378
        %v547 = vunpack.c.l.b16 %v379
        %v548 = vunpack.c.l.b16 %v380
        %v549 = vunpack.c.l.b16 %v381
        %v550 = vunpack.c.l.b16 %v382
        %v551 = vunpack.c.l.b16 %v383
        %v552 = vunpack.c.l.b16 %v384
        %v553 = vunpack.c.l.b16 %v385
        %v554 = vunpack.c.l.b16 %v386
        %v555 = vunpack.c.l.b16 %v387
        %v556 = vunpack.c.l.b16 %v388
        %v557 = vunpack.c.l.b16 %v389
        %v558 = vunpack.c.l.b16 %v390
        %v559 = vunpack.c.l.b16 %v391
        %v560 = vunpack.c.l.b16 %v392
        %v561 = vunpack.c.l.b16 %v393
        %v562 = vunpack.c.l.b16 %v394
        %v563 = vunpack.c.l.b16 %v395
        %v564 = vunpack.c.l.b16 %v396
        %v565 = vunpack.c.l.b16 %v397
        %v566 = vunpack.c.l.b16 %v398
        %v567 = vunpack.c.l.b16 %v399
        %v568 = vunpack.c.l.b16 %v400
        %v569 = vunpack.c.l.b16 %v401
        %v570 = vunpack.c.l.b16 %v402
        %v571 = vunpack.c.l.b16 %v403
        %v572 = vunpack.c.l.b16 %v404
        %v573 = vunpack.c.l.b16 %v405
        %v574 = vunpack.c.l.b16 %v406
        %v575 = vunpack.c.l.b16 %v407
        %v576 = vpack.c.b16 %v513, %v512
        %v577 = vpack.c.b16 %v515, %v514
        %v578 = vpack.c.b16 %v517, %v516
        %v579 = vpack.c.b16 %v519, %v518
        %v580 = vpack.c.b16 %v521, %v520
        %v581 = vpack.c.b16 %v523, %v522
        %v582 = vpack.c.b16 %v525, %v524
        %v583 = vpack.c.b16 %v527, %v526
        %v584 = vpack.c.b16 %v529, %v528
        %v585 = vpack.c.b16 %v531, %v530
        %v586 = vpack.c.b16 %v533, %v532
        %v587 = vpack.c.b16 %v535, %v534
        %v588 = vpack.c.b16 %v537, %v536
        %v589 = vpack.c.b16 %v539, %v538
        %v590 = vpack.c.b16 %v541, %v540
        %v591 = vpack.c.b16 %v543, %v542
        %v592 = vpack.c.b16 %v545, %v544
        %v593 = vpack.c.b16 %v547, %v546
        %v594 = vpack.c.b16 %v549, %v548
        %v595 = vpack.c.b16 %v551, %v550
        %v596 = vpack.c.b16 %v553, %v552
        %v597 = vpack.c.b16 %v555, %v554
        %v598 = vpack.c.b16 %v557, %v556
        %v599 = vpack.c.b16 %v559, %v558
        %v600 = vpack.c.b16 %v561, %v560
        %v601 = vpack.c.b16 %v563, %v562
        %v602 = vpack.c.b16 %v565, %v564
        %v603 = vpack.c.b16 %v567, %v566
        %v604 = vpack.c.b16 %v569, %v568
        %v605 = vpack.c.b16 %v571, %v570
        %v606 = vpack.c.b16 %v573, %v572
        %v607 = vpack.c.b16 %v575, %v574
        %640 = vmatpush.bf16.msra.mxu0 %v583
        %641 = vmatpush.bf16.msra.mxu0 %v582
        %642 = vmatpush.bf16.msra.mxu0 %v581
        %643 = vmatpush.bf16.msra.mxu0 %v580
        %644 = vmatpush.bf16.msra.mxu0 %v579
        %645 = vmatpush.bf16.msra.mxu0 %v578
        %646 = vmatpush.bf16.msra.mxu0 %v577
        %647 = vmatpush.bf16.msra.mxu0 %v576
        %648 = vmatmul.bf16.gmra.mxu0 %v432
        %v649 = vpop.f32.mrf.mxu0
        %v650 = vadd.f32 0.0, %v649
        %v651 = vpop.f32.mrf.mxu0
        %v652 = vadd.f32 0.0, %v651
        %653 = vmatmul.bf16.gmra.mxu0 %v436
        %v654 = vpop.f32.mrf.mxu0
        %v655 = vadd.f32 0.0, %v654
        %v656 = vpop.f32.mrf.mxu0
        %v657 = vadd.f32 0.0, %v656
        %658 = vdwg.mxu0
        %659 = vmatpush.bf16.msra.mxu0 %v591
        %660 = vmatpush.bf16.msra.mxu0 %v590
        %661 = vmatpush.bf16.msra.mxu0 %v589
        %662 = vmatpush.bf16.msra.mxu0 %v588
        %663 = vmatpush.bf16.msra.mxu0 %v587
        %664 = vmatpush.bf16.msra.mxu0 %v586
        %665 = vmatpush.bf16.msra.mxu0 %v585
        %666 = vmatpush.bf16.msra.mxu0 %v584
        %667 = vmatmul.bf16.gmra.mxu0 %v433
        %v668 = vpop.f32.mrf.mxu0
        %v669 = vadd.f32 %v650, %v668
        %v670 = vpop.f32.mrf.mxu0
        %v671 = vadd.f32 %v652, %v670
        %672 = vmatmul.bf16.gmra.mxu0 %v437
        %v673 = vpop.f32.mrf.mxu0
        %v674 = vadd.f32 %v655, %v673
        %v675 = vpop.f32.mrf.mxu0
        %v676 = vadd.f32 %v657, %v675
        %677 = vdwg.mxu0
        %678 = vmatpush.bf16.msra.mxu0 %v599
        %679 = vmatpush.bf16.msra.mxu0 %v598
        %680 = vmatpush.bf16.msra.mxu0 %v597
        %681 = vmatpush.bf16.msra.mxu0 %v596
        %682 = vmatpush.bf16.msra.mxu0 %v595
        %683 = vmatpush.bf16.msra.mxu0 %v594
        %684 = vmatpush.bf16.msra.mxu0 %v593
        %685 = vmatpush.bf16.msra.mxu0 %v592
        %686 = vmatmul.bf16.gmra.mxu0 %v434
        %v687 = vpop.f32.mrf.mxu0
        %v688 = vadd.f32 %v669, %v687
        %v689 = vpop.f32.mrf.mxu0
        %v690 = vadd.f32 %v671, %v689
        %691 = vmatmul.bf16.gmra.mxu0 %v438
        %v692 = vpop.f32.mrf.mxu0
        %v693 = vadd.f32 %v674, %v692
        %v694 = vpop.f32.mrf.mxu0
        %v695 = vadd.f32 %v676, %v694
        %696 = vdwg.mxu0
        %697 = vmatpush.bf16.msra.mxu0 %v607
        %698 = vmatpush.bf16.msra.mxu0 %v606
        %699 = vmatpush.bf16.msra.mxu0 %v605
        %700 = vmatpush.bf16.msra.mxu0 %v604
        %701 = vmatpush.bf16.msra.mxu0 %v603
        %702 = vmatpush.bf16.msra.mxu0 %v602
        %703 = vmatpush.bf16.msra.mxu0 %v601
        %704 = vmatpush.bf16.msra.mxu0 %v600
        %705 = vmatmul.bf16.gmra.mxu0 %v435
        %v706 = vpop.f32.mrf.mxu0
        %v707 = vadd.f32 %v688, %v706
        %v708 = vpop.f32.mrf.mxu0
        %v709 = vadd.f32 %v690, %v708
        %710 = vmatmul.bf16.gmra.mxu0 %v439
        %v711 = vpop.f32.mrf.mxu0
        %v712 = vadd.f32 %v693, %v711
        %v713 = vpop.f32.mrf.mxu0
        %v714 = vadd.f32 %v695, %v713
        %715 = vdwg.mxu0
        %v716 = vadd.f32 %v332, %v707
        %v717 = vadd.f32 %v333, %v709
        %v718 = vadd.f32 %v334, %v712
        %v719 = vadd.f32 %v335, %v714
        %720 = vst [vmem:[#allocation2] sm:$0xff] %v716
        %721 = vst [vmem:[#allocation2 + $0x8] sm:$0xff] %v717
        %722 = vst [vmem:[#allocation2 + $0x10] sm:$0xff] %v718
        %723 = vst [vmem:[#allocation2 + $0x18] sm:$0xff] %v719
        %p724 = scmp.eq.s32.totalorder %s23, 1
        // Predicated region
        $region60: #{discriminator_forward.9} parent=46 // pred_check
          %p725 = pneg %p724
        $region61: #{discriminator_forward.9} parent=46 // pred_check_branch
          %727 = sbr.rel (%p725) target = $region63
        $region62: #{discriminator_forward.9} parent=46 // pred_region
          %v728 = vld [vmem:[#allocation2] sm:$0xff]
          %v729 = vld [vmem:[#allocation2 + $0x8] sm:$0xff]
          %v730 = vld [vmem:[#allocation2 + $0x10] sm:$0xff]
          %v731 = vld [vmem:[#allocation2 + $0x18] sm:$0xff]
          %v732 = vld [vmem:[%s313] sm:$0x1]
          %v733 = vadd.f32 %v728, %v729
          %v734 = vadd.f32 %v733, %v730
          %v735 = vadd.f32 %v734, %v731
          %v736 = vrot.slane %v735, 4
          %v737 = vadd.f32 %v735, %v736
          %v738 = vrot.slane %v737, 2
          %v739 = vadd.f32 %v737, %v738
          %v740 = vrot.slane %v739, 1
          %v741 = vadd.f32 %v739, %v740
          %v742 = vadd.f32 %v732, %v741
          %743 = vst [vmem:[%s313] sm:$0x1] %v742
          %v744 = vld [vmem:[%s316] sm:$0x1]
          %v745 = vmul.f32 %v728, %v728
          %v746 = vmul.f32 %v729, %v729
          %v747 = vmul.f32 %v730, %v730
          %v748 = vmul.f32 %v731, %v731
          %v749 = vadd.f32 %v745, %v746
          %v750 = vadd.f32 %v749, %v747
          %v751 = vadd.f32 %v750, %v748
          %v752 = vrot.slane %v751, 4
          %v753 = vadd.f32 %v751, %v752
          %v754 = vrot.slane %v753, 2
          %v755 = vadd.f32 %v753, %v754
          %v756 = vrot.slane %v755, 1
          %v757 = vadd.f32 %v755, %v756
          %v758 = vadd.f32 %v744, %v757
          %759 = vst [vmem:[%s316] sm:$0x1] %v758
          %760 = vst [vmem:[%s309] sm:$0xff] %v728
          %761 = vst [vmem:[%s309 + $0x8] sm:$0xff] %v729
          %762 = vst [vmem:[%s309 + $0x10] sm:$0xff] %v730
          %763 = vst [vmem:[%s309 + $0x18] sm:$0xff] %v731
        $region63: #{discriminator_forward.9} parent=46 // pred_fallthru
          _
        %s764 = smul.u32 4, %s22
        %p765 = scmp.lt.s32.totalorder %s764, 3
        %s766 = scalar_select %p765, %s764, 3
        %p767 = scmp.lt.s32.totalorder %s21, 0
        %s768 = scalar_select %p767, %s21, 0
        %s769 = sadd.s32 %s768, %s766
        %s770 = smul.addr %s769, 8
        %s771 = scalar_lea.vmem %s2, %s770
        %p772 = scmp.lt.s32.totalorder %s21, 0
        %s773 = scalar_select %p772, %s21, 0
        %s774 = scalar_lea.vmem %s3, %s773
        %p775 = scmp.lt.s32.totalorder %s21, 0
        %s776 = scalar_select %p775, %s21, 0
        %s777 = scalar_lea.vmem %s4, %s776
        // Predicated region
        $region64: #{discriminator_forward.9} parent=46 // pred_check
          %p778 = pneg %p111
        $region65: #{discriminator_forward.9} parent=46 // pred_check_branch
          %780 = sbr.rel (%p778) target = $region67
        $region66: #{discriminator_forward.9} parent=46 // pred_region
          %s781 = smul.u32 4, %s22
        $region67: #{discriminator_forward.9} parent=46 // pred_fallthru
          _
        // Predicated region
        $region68: #{discriminator_forward.9} parent=46 // pred_check
          %p782 = pneg %p137
        $region69: #{discriminator_forward.9} parent=46 // pred_check_branch
          %784 = sbr.rel (%p782) target = $region71
        $region70: #{discriminator_forward.9} parent=46 // pred_region
          _
        $region71: #{discriminator_forward.9} parent=46 // pred_fallthru
          _
        // Predicated region
        $region72: #{discriminator_forward.9} parent=46 // pred_check
          %p785 = pneg %p163
        $region73: #{discriminator_forward.9} parent=46 // pred_check_branch
          %787 = sbr.rel (%p785) target = $region75
        $region74: #{discriminator_forward.9} parent=46 // pred_region
          _
        $region75: #{discriminator_forward.9} parent=46 // pred_fallthru
          _
        // Predicated region
        $region76: #{discriminator_forward.9} parent=46 // pred_check
          %p788 = pneg %p111
        $region77: #{discriminator_forward.9} parent=46 // pred_check_branch
          %790 = sbr.rel (%p788) target = $region79
        $region78: #{discriminator_forward.9} parent=46 // pred_region
          %s791 = smul.u32 4, %s22
          %p792 = scmp.lt.s32.totalorder %s791, 3
          %s793 = scalar_select %p792, %s791, 3
          %p794 = scmp.lt.s32.totalorder %s21, 0
          %s795 = scalar_select %p794, %s21, 0
          %s796 = sadd.s32 %s795, %s793
          %s797 = smul.addr %s796, 8
          %s798 = scalar_lea.vmem %s2, %s797
        $region79: #{discriminator_forward.9} parent=46 // pred_fallthru
          _
        // Predicated region
        $region80: #{discriminator_forward.9} parent=46 // pred_check
          %p799 = pneg %p137
        $region81: #{discriminator_forward.9} parent=46 // pred_check_branch
          %801 = sbr.rel (%p799) target = $region83
        $region82: #{discriminator_forward.9} parent=46 // pred_region
          %p802 = scmp.lt.s32.totalorder %s21, 0
          %s803 = scalar_select %p802, %s21, 0
          %s804 = scalar_lea.vmem %s3, %s803
        $region83: #{discriminator_forward.9} parent=46 // pred_fallthru
          _
        // Predicated region
        $region84: #{discriminator_forward.9} parent=46 // pred_check
          %p805 = pneg %p163
        $region85: #{discriminator_forward.9} parent=46 // pred_check_branch
          %807 = sbr.rel (%p805) target = $region87
        $region86: #{discriminator_forward.9} parent=46 // pred_region
          %p808 = scmp.lt.s32.totalorder %s21, 0
          %s809 = scalar_select %p808, %s21, 0
          %s810 = scalar_lea.vmem %s4, %s809
        $region87: #{discriminator_forward.9} parent=46 // pred_fallthru
          _
      $region47: #{discriminator_forward.9} parent=5 // pred_fallthru
        _
      %p811 = scmp.le.s32.totalorder 2, %s11
      // Predicated region
      $region88: #{discriminator_forward.9} parent=5 // pred_check
        %p812 = pneg %p811
      $region89: #{discriminator_forward.9} parent=5 // pred_check_branch
        %814 = sbr.rel (%p812) target = $region91
      $region90: #{discriminator_forward.9} parent=5 // pred_region
        %s815 = ssub.s32 %s11, 2
      $region91: #{discriminator_forward.9} parent=5 // pred_fallthru
        _
    $region6: #{discriminator_forward.9} parent=1 // loop_footer
      %s15 = sadd.s32 1, %s11
    $region7: #{discriminator_forward.9} parent=1 // loop_footer_branch
      %10 = sbr.rel target = $region3
    $region8: #{discriminator_forward.9} parent=1 // loop_exit
      _

// kernel: discriminator_forward.10
$region0: #{discriminator_forward.10}
  #allocation0 [shape = 'u32[]', space=smem, size = 0x4, offset = 0x4, fixed_abs, tag = 'smem constant byte address 0x4 - core index']
  #allocation1 [shape = 'u32[72,128]{1,0:T(1,128)}', space=vmem, size = 0x9000, scoped, tag = 'internal scratch']
  %s0 = inlined_call_operand.vmem [shape: f32[32,128], index: 0, kind: input, shape index: {}]
  %s1 = inlined_call_operand.vmem [shape: f32[1,128], index: 1, kind: input, shape index: {}]
  %s2 = inlined_call_operand.vmem [shape: f32[1,128], index: 2, kind: input, shape index: {}]
  %s3 = inlined_call_operand.vmem [shape: bf16[32,128], index: 3, kind: output, shape index: {}]
  %s4 = sld [smem:[#allocation0]]
  $region22: #{discriminator_forward.10} parent=0
    _
  %s6 = ssub.s32 1, %s4
  %s7 = scalar_select 0, %s6, %s4
  // Predicated region
  $region2: #{discriminator_forward.10} parent=0 // pred_check
    _
  $region3: #{discriminator_forward.10} parent=0 // pred_check_branch
    %9 = sbr.rel (0) target = $region5
  $region4: #{discriminator_forward.10} parent=0 // pred_region
    _
  $region5: #{discriminator_forward.10} parent=0 // pred_fallthru
    _
  // Predicated region
  $region6: #{discriminator_forward.10} parent=0 // pred_check
    _
  $region7: #{discriminator_forward.10} parent=0 // pred_check_branch
    %11 = sbr.rel (0) target = $region9
  $region8: #{discriminator_forward.10} parent=0 // pred_region
    _
  $region9: #{discriminator_forward.10} parent=0 // pred_fallthru
    _
  // Predicated region
  $region10: #{discriminator_forward.10} parent=0 // pred_check
    _
  $region11: #{discriminator_forward.10} parent=0 // pred_check_branch
    %13 = sbr.rel (0) target = $region13
  $region12: #{discriminator_forward.10} parent=0 // pred_region
    _
  $region13: #{discriminator_forward.10} parent=0 // pred_fallthru
    _
  %v14 = vld [vmem:[%s0] sm:$0xff]
  %v15 = vld [vmem:[%s0 + $0x8] sm:$0xff]
  %v16 = vld [vmem:[%s0 + $0x10] sm:$0xff]
  %v17 = vld [vmem:[%s0 + $0x18] sm:$0xff]
  %v18 = vld [vmem:[%s1] sm:$0x1]
  %v20 = vperm.slane %v18, 0
  %v22 = vmul.f32 %v14, %v20
  %v23 = vmul.f32 %v15, %v20
  %v24 = vmul.f32 %v16, %v20
  %v25 = vmul.f32 %v17, %v20
  %v26 = vld [vmem:[%s2] sm:$0x1]
  %v28 = vperm.slane %v26, 0
  %v30 = vadd.f32 %v22, %v28
  %v31 = vadd.f32 %v23, %v28
  %v32 = vadd.f32 %v24, %v28
  %v33 = vadd.f32 %v25, %v28
  %vm34 = vcmp.ge.f32.partialorder %v30, 0.0
  %vm35 = vcmp.ge.f32.partialorder %v31, 0.0
  %vm36 = vcmp.ge.f32.partialorder %v32, 0.0
  %vm37 = vcmp.ge.f32.partialorder %v33, 0.0
  %v38 = vmul.f32 %v30, 0.2
  %v39 = vmul.f32 %v31, 0.2
  %v40 = vmul.f32 %v32, 0.2
  %v41 = vmul.f32 %v33, 0.2
  %v42 = vsel %vm34, %v30, %v38
  %v43 = vsel %vm35, %v31, %v39
  %v44 = vsel %vm36, %v32, %v40
  %v45 = vsel %vm37, %v33, %v41
  %v46 = vpack.c.bf16 %v42, %v42
  %v47 = vpack.c.bf16 %v43, %v43
  %v48 = vpack.c.bf16 %v44, %v44
  %v49 = vpack.c.bf16 %v45, %v45
  %50 = vst [vmem:[%s3] sm:$0xf] %v46
  %51 = vst [vmem:[%s3 + $0x4] sm:$0xf] %v47
  %52 = vst [vmem:[%s3 + $0x8] sm:$0xf] %v48
  %53 = vst [vmem:[%s3 + $0xc] sm:$0xf] %v49
  // Predicated region
  $region14: #{discriminator_forward.10} parent=0 // pred_check
    _
  $region15: #{discriminator_forward.10} parent=0 // pred_check_branch
    %55 = sbr.rel (0) target = $region17
  $region16: #{discriminator_forward.10} parent=0 // pred_region
    _
  $region17: #{discriminator_forward.10} parent=0 // pred_fallthru
    _
  // Predicated region
  $region18: #{discriminator_forward.10} parent=0 // pred_check
    _
  $region19: #{discriminator_forward.10} parent=0 // pred_check_branch
    %57 = sbr.rel (0) target = $region21
  $region20: #{discriminator_forward.10} parent=0 // pred_region
    _
  $region21: #{discriminator_forward.10} parent=0 // pred_fallthru
    _

// kernel: discriminator_forward.12
$region0: #{discriminator_forward.12}
  #allocation0 [shape = 'u32[]', space=smem, size = 0x4, offset = 0x4, fixed_abs, tag = 'smem constant byte address 0x4 - core index']
  #allocation1 [shape = 'u32[72,128]{1,0:T(1,128)}', space=vmem, size = 0x9000, scoped, tag = 'internal scratch']
  %s0 = inlined_call_operand.vmem [shape: f32[8,256], index: 0, kind: input, shape index: {}]
  %s1 = inlined_call_operand.vmem [shape: f32[1,256], index: 1, kind: input, shape index: {}]
  %s2 = inlined_call_operand.vmem [shape: f32[1,256], index: 2, kind: input, shape index: {}]
  %s3 = inlined_call_operand.vmem [shape: bf16[8,256], index: 3, kind: output, shape index: {}]
  %s4 = sld [smem:[#allocation0]]
  $region22: #{discriminator_forward.12} parent=0
    _
  %s6 = ssub.s32 1, %s4
  %s7 = scalar_select 0, %s6, %s4
  // Predicated region
  $region2: #{discriminator_forward.12} parent=0 // pred_check
    _
  $region3: #{discriminator_forward.12} parent=0 // pred_check_branch
    %9 = sbr.rel (0) target = $region5
  $region4: #{discriminator_forward.12} parent=0 // pred_region
    _
  $region5: #{discriminator_forward.12} parent=0 // pred_fallthru
    _
  // Predicated region
  $region6: #{discriminator_forward.12} parent=0 // pred_check
    _
  $region7: #{discriminator_forward.12} parent=0 // pred_check_branch
    %11 = sbr.rel (0) target = $region9
  $region8: #{discriminator_forward.12} parent=0 // pred_region
    _
  $region9: #{discriminator_forward.12} parent=0 // pred_fallthru
    _
  // Predicated region
  $region10: #{discriminator_forward.12} parent=0 // pred_check
    _
  $region11: #{discriminator_forward.12} parent=0 // pred_check_branch
    %13 = sbr.rel (0) target = $region13
  $region12: #{discriminator_forward.12} parent=0 // pred_region
    _
  $region13: #{discriminator_forward.12} parent=0 // pred_fallthru
    _
  %v14 = vld [vmem:[%s0] sm:$0xff]
  %v15 = vld [vmem:[%s0 + $0x8] sm:$0xff]
  %v16 = vld [vmem:[%s1] sm:$0x3]
  %v18 = vperm.slane %v16, 0
  %v19 = vperm.slane %v16, 1
  %v22 = vmul.f32 %v14, %v18
  %v23 = vmul.f32 %v15, %v19
  %v24 = vld [vmem:[%s2] sm:$0x3]
  %v26 = vperm.slane %v24, 0
  %v27 = vperm.slane %v24, 1
  %v30 = vadd.f32 %v22, %v26
  %v31 = vadd.f32 %v23, %v27
  %vm32 = vcmp.ge.f32.partialorder %v30, 0.0
  %vm33 = vcmp.ge.f32.partialorder %v31, 0.0
  %v34 = vmul.f32 %v30, 0.2
  %v35 = vmul.f32 %v31, 0.2
  %v36 = vsel %vm32, %v30, %v34
  %v37 = vsel %vm33, %v31, %v35
  %v38 = vpack.c.bf16 %v37, %v36
  %39 = vst [vmem:[%s3] sm:$0xff] %v38
  // Predicated region
  $region14: #{discriminator_forward.12} parent=0 // pred_check
    _
  $region15: #{discriminator_forward.12} parent=0 // pred_check_branch
    %41 = sbr.rel (0) target = $region17
  $region16: #{discriminator_forward.12} parent=0 // pred_region
    _
  $region17: #{discriminator_forward.12} parent=0 // pred_fallthru
    _
  // Predicated region
  $region18: #{discriminator_forward.12} parent=0 // pred_check
    _
  $region19: #{discriminator_forward.12} parent=0 // pred_check_branch
    %43 = sbr.rel (0) target = $region21
  $region20: #{discriminator_forward.12} parent=0 // pred_region
    _
  $region21: #{discriminator_forward.12} parent=0 // pred_fallthru
    _

// kernel: discriminator_forward.11
$region0: #{discriminator_forward.11}
  #allocation0 [shape = 'u32[]', space=smem, size = 0x4, offset = 0x4, fixed_abs, tag = 'smem constant byte address 0x4 - core index']
  #allocation1 [shape = 'u32[72,128]{1,0:T(1,128)}', space=vmem, size = 0x9000, scoped, tag = 'internal scratch']
  #allocation2 [shape = 'f32[8,256]{1,0:T(8,128)}', space=vmem, size = 0x2000, scoped, tag = 'scratch operand']
  %s0 = inlined_call_operand.vmem [shape: bf16[8,2048], index: 0, kind: input, shape index: {}]
  %s1 = inlined_call_operand.vmem [shape: bf16[2048,256], index: 1, kind: input, shape index: {}]
  %s2 = inlined_call_operand.vmem [shape: f32[8,256], index: 2, kind: output, shape index: {0}]
  %s3 = inlined_call_operand.vmem [shape: f32[1,256], index: 3, kind: output, shape index: {1}]
  %s4 = inlined_call_operand.vmem [shape: f32[1,256], index: 4, kind: output, shape index: {2}]
  %5 = xla_tuple %s2, %s3, %s4
  %s6 = sld [smem:[#allocation0]]
  $region69: #{discriminator_forward.11} parent=0
    _
  %s8 = ssub.s32 1, %s6
  %s9 = scalar_select 0, %s8, %s6
  loop: start=0, step=1, limit=6
  $region2: #{discriminator_forward.11} parent=0 // loop_pre_header
    _
  $region3: #{discriminator_forward.11} parent=0 // loop_header
    %s11 = sphi 0, %s15
    %p12 = scmp.ge.s32.totalorder %s11, 6
    %s18 = sphi 0, %s37
    %s19 = sphi 0, %s33
    %s20 = sphi 0, %s29
    %s21 = sphi 0, %s18
    %s22 = sphi 0, %s19
    %s23 = sphi 0, %s20
    %s24 = sphi 0, %s21
    %s25 = sphi 0, %s22
    %s26 = sphi 0, %s23
    %s42 = sphi 0, %s44
    %s45 = sphi 0, %s42
    %s46 = sphi 0, %s45
    %s62 = sphi 0, %s46
    %s70 = sphi 0, %s72
    %s73 = sphi 0, %s70
    %s74 = sphi 0, %s73
    %s90 = sphi 0, %s74
    %s98 = sphi 0, %s100
    %s101 = sphi 0, %s98
    %s102 = sphi 0, %s101
    %s118 = sphi 0, %s102
    %s124 = sphi 0, %s126
    %s127 = sphi 0, %s124
    %s128 = sphi 0, %s127
    %s144 = sphi 0, %s128
    %s150 = sphi 0, %s152
    %s153 = sphi 0, %s150
    %s154 = sphi 0, %s153
    %s170 = sphi 0, %s154
  $region4: #{discriminator_forward.11} parent=0 // loop_header_branch
    %14 = sbr.rel (%p12) target = $region8
  $region5: #{discriminator_forward.11} parent=0 // loop_body
    %s16 = ssub.s32 %s11, 1
    %s17 = ssub.s32 %s11, 2
    %s27 = sadd.s32 1, %s20
    %p28 = scmp.ge.s32.totalorder %s27, 4
    %s29 = scalar_select %p28, 0, %s27
    %s30 = sadd.s32 1, %s19
    %s31 = scalar_select %p28, %s30, %s19
    %p32 = scmp.ge.s32.totalorder %s31, 1
    %s33 = scalar_select %p32, 0, %s31
    %s34 = sadd.s32 1, %s18
    %s35 = scalar_select %p32, %s34, %s18
    %p36 = scmp.ge.s32.totalorder %s35, 1
    %s37 = scalar_select %p36, 0, %s35
    %s38 = ssub.s32 %s19, %s33
    %s39 = ssub.s32 %s20, %s29
    %s40 = sor.u32 %s38, %s39
    %p41 = scmp.eq.s32.totalorder %s40, 0
    %s43 = sadd.s32 %s42, 1
    %s44 = scalar_select %p41, %s42, %s43
    %p47 = pneg %p41
    %p48 = scmp.eq.s32.totalorder %s11, 3
    %p49 = por %p47, %p48
    %p50 = scmp.ne.s32.totalorder %s42, %s45
    %p51 = scmp.eq.s32.totalorder %s11, 0
    %p52 = por %p50, %p51
    %p53 = scmp.ne.s32.totalorder %s42, %s45
    %p54 = scmp.eq.s32.totalorder %s16, 3
    %p55 = por %p53, %p54
    %p56 = scmp.ne.s32.totalorder %s45, %s46
    %p57 = scmp.eq.s32.totalorder %s16, 0
    %p58 = por %p56, %p57
    %p59 = scmp.ne.s32.totalorder %s45, %s46
    %p60 = scmp.eq.s32.totalorder %s17, 3
    %p61 = por %p59, %p60
    %p63 = scmp.ne.s32.totalorder %s46, %s62
    %p64 = scmp.eq.s32.totalorder %s17, 0
    %p65 = por %p63, %p64
    %s66 = ssub.s32 %s20, %s29
    %s67 = ssub.s32 %s18, %s37
    %s68 = sor.u32 %s66, %s67
    %p69 = scmp.eq.s32.totalorder %s68, 0
    %s71 = sadd.s32 %s70, 1
    %s72 = scalar_select %p69, %s70, %s71
    %p75 = pneg %p69
    %p76 = scmp.eq.s32.totalorder %s11, 3
    %p77 = por %p75, %p76
    %p78 = scmp.ne.s32.totalorder %s70, %s73
    %p79 = scmp.eq.s32.totalorder %s11, 0
    %p80 = por %p78, %p79
    %p81 = scmp.ne.s32.totalorder %s70, %s73
    %p82 = scmp.eq.s32.totalorder %s16, 3
    %p83 = por %p81, %p82
    %p84 = scmp.ne.s32.totalorder %s73, %s74
    %p85 = scmp.eq.s32.totalorder %s16, 0
    %p86 = por %p84, %p85
    %p87 = scmp.ne.s32.totalorder %s73, %s74
    %p88 = scmp.eq.s32.totalorder %s17, 3
    %p89 = por %p87, %p88
    %p91 = scmp.ne.s32.totalorder %s74, %s90
    %p92 = scmp.eq.s32.totalorder %s17, 0
    %p93 = por %p91, %p92
    %s94 = ssub.s32 %s19, %s33
    %s95 = ssub.s32 %s18, %s37
    %s96 = sor.u32 %s94, %s95
    %p97 = scmp.eq.s32.totalorder %s96, 0
    %s99 = sadd.s32 %s98, 1
    %s100 = scalar_select %p97, %s98, %s99
    %p103 = pneg %p97
    %p104 = scmp.eq.s32.totalorder %s11, 3
    %p105 = por %p103, %p104
    %p106 = scmp.ne.s32.totalorder %s98, %s101
    %p107 = scmp.eq.s32.totalorder %s11, 0
    %p108 = por %p106, %p107
    %p109 = scmp.ne.s32.totalorder %s98, %s101
    %p110 = scmp.eq.s32.totalorder %s16, 3
    %p111 = por %p109, %p110
    %p112 = scmp.ne.s32.totalorder %s101, %s102
    %p113 = scmp.eq.s32.totalorder %s16, 0
    %p114 = por %p112, %p113
    %p115 = scmp.ne.s32.totalorder %s101, %s102
    %p116 = scmp.eq.s32.totalorder %s17, 3
    %p117 = por %p115, %p116
    %p119 = scmp.ne.s32.totalorder %s102, %s118
    %p120 = scmp.eq.s32.totalorder %s17, 0
    %p121 = por %p119, %p120
    %s122 = ssub.s32 %s18, %s37
    %p123 = scmp.eq.s32.totalorder %s122, 0
    %s125 = sadd.s32 %s124, 1
    %s126 = scalar_select %p123, %s124, %s125
    %p129 = pneg %p123
    %p130 = scmp.eq.s32.totalorder %s11, 3
    %p131 = por %p129, %p130
    %p132 = scmp.ne.s32.totalorder %s124, %s127
    %p133 = scmp.eq.s32.totalorder %s11, 0
    %p134 = por %p132, %p133
    %p135 = scmp.ne.s32.totalorder %s124, %s127
    %p136 = scmp.eq.s32.totalorder %s16, 3
    %p137 = por %p135, %p136
    %p138 = scmp.ne.s32.totalorder %s127, %s128
    %p139 = scmp.eq.s32.totalorder %s16, 0
    %p140 = por %p138, %p139
    %p141 = scmp.ne.s32.totalorder %s127, %s128
    %p142 = scmp.eq.s32.totalorder %s17, 3
    %p143 = por %p141, %p142
    %p145 = scmp.ne.s32.totalorder %s128, %s144
    %p146 = scmp.eq.s32.totalorder %s17, 0
    %p147 = por %p145, %p146
    %s148 = ssub.s32 %s18, %s37
    %p149 = scmp.eq.s32.totalorder %s148, 0
    %s151 = sadd.s32 %s150, 1
    %s152 = scalar_select %p149, %s150, %s151
    %p155 = pneg %p149
    %p156 = scmp.eq.s32.totalorder %s11, 3
    %p157 = por %p155, %p156
    %p158 = scmp.ne.s32.totalorder %s150, %s153
    %p159 = scmp.eq.s32.totalorder %s11, 0
    %p160 = por %p158, %p159
    %p161 = scmp.ne.s32.totalorder %s150, %s153
    %p162 = scmp.eq.s32.totalorder %s16, 3
    %p163 = por %p161, %p162
    %p164 = scmp.ne.s32.totalorder %s153, %s154
    %p165 = scmp.eq.s32.totalorder %s16, 0
    %p166 = por %p164, %p165
    %p167 = scmp.ne.s32.totalorder %s153, %s154
    %p168 = scmp.eq.s32.totalorder %s17, 3
    %p169 = por %p167, %p168
    %p171 = scmp.ne.s32.totalorder %s154, %s170
    %p172 = scmp.eq.s32.totalorder %s17, 0
    %p173 = por %p171, %p172
    %p174 = scmp.le.s32.totalorder 1, %s11
    %p175 = scmp.lt.s32.totalorder %s11, 5
    %p176 = pnand %p174, %p175
    %p177 = pneg %p176
    // Predicated region
    $region9: #{discriminator_forward.11} parent=5 // pred_check
      _
    $region10: #{discriminator_forward.11} parent=5 // pred_check_branch
      %179 = sbr.rel (%p176) target = $region12
    $region11: #{discriminator_forward.11} parent=5 // pred_region
      %s180 = ssub.s32 %s11, 1
    $region12: #{discriminator_forward.11} parent=5 // pred_fallthru
      _
    %p181 = scmp.lt.s32.totalorder %s11, 4
    // Predicated region
    $region13: #{discriminator_forward.11} parent=5 // pred_check
      %p182 = pneg %p181
    $region14: #{discriminator_forward.11} parent=5 // pred_check_branch
      %184 = sbr.rel (%p182) target = $region16
    $region15: #{discriminator_forward.11} parent=5 // pred_region
      // Predicated region
      $region17: #{discriminator_forward.11} parent=15 // pred_check
        %p185 = pneg %p52
      $region18: #{discriminator_forward.11} parent=15 // pred_check_branch
        %187 = sbr.rel (%p185) target = $region20
      $region19: #{discriminator_forward.11} parent=15 // pred_region
        %s188 = smul.u32 4, %s20
        %p189 = scmp.lt.s32.totalorder %s19, 0
        %s190 = scalar_select %p189, %s19, 0
        %p191 = scmp.lt.s32.totalorder %s188, 15
        %s192 = scalar_select %p191, %s188, 15
        %s193 = smul.addr %s190, 16
        %s194 = sadd.s32 %s192, %s193
        %s195 = smul.addr %s194, 4
        %s196 = scalar_lea.vmem %s0, %s195
        %s197 = smul.u32 4, %s20
      $region20: #{discriminator_forward.11} parent=15 // pred_fallthru
        _
      // Predicated region
      $region21: #{discriminator_forward.11} parent=15 // pred_check
        %p198 = pneg %p80
      $region22: #{discriminator_forward.11} parent=15 // pred_check_branch
        %200 = sbr.rel (%p198) target = $region24
      $region23: #{discriminator_forward.11} parent=15 // pred_region
        %s201 = smul.u32 64, %s20
        %s202 = smul.u32 2, %s18
        %p203 = scmp.lt.s32.totalorder %s201, 255
        %s204 = scalar_select %p203, %s201, 255
        %p205 = scmp.lt.s32.totalorder %s202, 1
        %s206 = scalar_select %p205, %s202, 1
        %s207 = smul.addr %s204, 2
        %s208 = sadd.s32 %s206, %s207
        %s209 = smul.addr %s208, 4
        %s210 = scalar_lea.vmem %s1, %s209
        %s211 = smul.u32 64, %s20
        %s212 = smul.u32 2, %s18
      $region24: #{discriminator_forward.11} parent=15 // pred_fallthru
        _
    $region16: #{discriminator_forward.11} parent=5 // pred_fallthru
      _
    %p213 = scmp.le.s32.totalorder 1, %s11
    %p214 = scmp.lt.s32.totalorder %s11, 5
    %p215 = pnand %p213, %p214
    %p216 = pneg %p215
    // Predicated region
    $region25: #{discriminator_forward.11} parent=5 // pred_check
      _
    $region26: #{discriminator_forward.11} parent=5 // pred_check_branch
      %218 = sbr.rel (%p215) target = $region28
    $region27: #{discriminator_forward.11} parent=5 // pred_region
      %s219 = ssub.s32 %s11, 1
      %s220 = smul.u32 4, %s23
      %p221 = scmp.lt.s32.totalorder %s22, 0
      %s222 = scalar_select %p221, %s22, 0
      %p223 = scmp.lt.s32.totalorder %s220, 15
      %s224 = scalar_select %p223, %s220, 15
      %s225 = smul.addr %s222, 16
      %s226 = sadd.s32 %s224, %s225
      %s227 = smul.addr %s226, 4
      %s228 = scalar_lea.vmem %s0, %s227
      %p229 = pneg %p58
      %p230 = pneg %p55
      %s231 = smul.u32 64, %s23
      %s232 = smul.u32 2, %s21
      %p233 = scmp.lt.s32.totalorder %s231, 255
      %s234 = scalar_select %p233, %s231, 255
      %p235 = scmp.lt.s32.totalorder %s232, 1
      %s236 = scalar_select %p235, %s232, 1
      %s237 = smul.addr %s234, 2
      %s238 = sadd.s32 %s236, %s237
      %s239 = smul.addr %s238, 4
      %s240 = scalar_lea.vmem %s1, %s239
      %p241 = pneg %p86
      %p242 = pneg %p83
      %p243 = pneg %p114
      %p244 = pneg %p111
      %s245 = smul.u32 2, %s21
      %p246 = scmp.lt.s32.totalorder %s22, 0
      %s247 = scalar_select %p246, %s22, 0
      %p248 = scmp.lt.s32.totalorder %s245, 1
      %s249 = scalar_select %p248, %s245, 1
      %s250 = smul.addr %s247, 2
      %s251 = sadd.s32 %s249, %s250
      %s252 = smul.addr %s251, 8
      %s253 = scalar_lea.vmem %s2, %s252
      %p254 = pneg %p140
      %p255 = pneg %p137
      %s256 = smul.u32 2, %s21
      %p257 = scmp.lt.s32.totalorder %s256, 1
      %s258 = scalar_select %p257, %s256, 1
      %s259 = scalar_lea.vmem %s3, %s258
      %p260 = pneg %p166
      %p261 = pneg %p163
      %s262 = smul.u32 2, %s21
      %p263 = scmp.lt.s32.totalorder %s262, 1
      %s264 = scalar_select %p263, %s262, 1
      %s265 = scalar_lea.vmem %s4, %s264
      %s266 = smul.u32 4, %s23
      %p267 = scmp.lt.s32.totalorder %s22, 0
      %s268 = scalar_select %p267, %s22, 0
      %p269 = scmp.lt.s32.totalorder %s266, 15
      %s270 = scalar_select %p269, %s266, 15
      %s271 = smul.addr %s268, 16
      %s272 = sadd.s32 %s270, %s271
      %s273 = smul.addr %s272, 4
      %s274 = scalar_lea.vmem %s0, %s273
      %s275 = smul.u32 4, %s23
      %s276 = smul.u32 64, %s23
      %s277 = smul.u32 2, %s21
      %p278 = scmp.lt.s32.totalorder %s276, 255
      %s279 = scalar_select %p278, %s276, 255
      %p280 = scmp.lt.s32.totalorder %s277, 1
      %s281 = scalar_select %p280, %s277, 1
      %s282 = smul.addr %s279, 2
      %s283 = sadd.s32 %s281, %s282
      %s284 = smul.addr %s283, 4
      %s285 = scalar_lea.vmem %s1, %s284
      %s286 = smul.u32 64, %s23
      %s287 = smul.u32 2, %s21
      %s288 = smul.u32 2, %s21
      %p289 = scmp.lt.s32.totalorder %s22, 0
      %s290 = scalar_select %p289, %s22, 0
      %p291 = scmp.lt.s32.totalorder %s288, 1
      %s292 = scalar_select %p291, %s288, 1
      %s293 = smul.addr %s290, 2
      %s294 = sadd.s32 %s292, %s293
      %s295 = smul.addr %s294, 8
      %s296 = scalar_lea.vmem %s2, %s295
      %s297 = smul.u32 2, %s21
      %s298 = smul.u32 2, %s21
      %p299 = scmp.lt.s32.totalorder %s298, 1
      %s300 = scalar_select %p299, %s298, 1
      %s301 = scalar_lea.vmem %s3, %s300
      %s302 = smul.u32 2, %s21
      %s303 = smul.u32 2, %s21
      %p304 = scmp.lt.s32.totalorder %s303, 1
      %s305 = scalar_select %p304, %s303, 1
      %s306 = scalar_lea.vmem %s4, %s305
      %s307 = smul.u32 2, %s21
      %p308 = scmp.eq.s32.totalorder %s23, 0
      // Predicated region
      $region29: #{discriminator_forward.11} parent=27 // pred_check
        %p309 = pneg %p308
      $region30: #{discriminator_forward.11} parent=27 // pred_check_branch
        %311 = sbr.rel (%p309) target = $region32
      $region31: #{discriminator_forward.11} parent=27 // pred_region
        %312 = vst [vmem:[#allocation2] sm:$0xff] 0.0
        %313 = vst [vmem:[#allocation2 + $0x8] sm:$0xff] 0.0
      $region32: #{discriminator_forward.11} parent=27 // pred_fallthru
        _
      %p314 = scmp.eq.s32.totalorder %s22, 0
      %p315 = pnand %p314, %p308
      %p316 = pneg %p315
      // Predicated region
      $region33: #{discriminator_forward.11} parent=27 // pred_check
        _
      $region34: #{discriminator_forward.11} parent=27 // pred_check_branch
        %318 = sbr.rel (%p315) target = $region36
      $region35: #{discriminator_forward.11} parent=27 // pred_region
        %v319 = vlaneseq
        %vm320 = vcmp.ge.s32.totalorder %v319, 0
        %vm321 = vcmp.lt.s32.totalorder %v319, 256
        %vm322 = vmand %vm320, %vm321
        %323 = vst.msk [vmem:[%s301] sm:$0x3] %vm322, 0.0
        %324 = vst.msk [vmem:[%s306] sm:$0x3] %vm322, 0.0
      $region36: #{discriminator_forward.11} parent=27 // pred_fallthru
        _
      %v325 = vld [vmem:[#allocation2] sm:$0xff]
      %v326 = vld [vmem:[#allocation2 + $0x8] sm:$0xff]
      %v327 = vld [vmem:[%s274] sm:$0xff]
      %v328 = vld [vmem:[%s274 + $0x8] sm:$0xff]
      %v329 = vld [vmem:[%s285] sm:$0xff]
      %v330 = vld [vmem:[%s285 + $0x8] sm:$0xff]
      %v331 = vld [vmem:[%s285 + $0x10] sm:$0xff]
      %v332 = vld [vmem:[%s285 + $0x18] sm:$0xff]
      %v333 = vld [vmem:[%s285 + $0x20] sm:$0xff]
      %v334 = vld [vmem:[%s285 + $0x28] sm:$0xff]
      %v335 = vld [vmem:[%s285 + $0x30] sm:$0xff]
      %v336 = vld [vmem:[%s285 + $0x38] sm:$0xff]
      %v337 = vld [vmem:[%s285 + $0x40] sm:$0xff]
      %v338 = vld [vmem:[%s285 + $0x48] sm:$0xff]
      %v339 = vld [vmem:[%s285 + $0x50] sm:$0xff]
      %v340 = vld [vmem:[%s285 + $0x58] sm:$0xff]
      %v341 = vld [vmem:[%s285 + $0x60] sm:$0xff]
      %v342 = vld [vmem:[%s285 + $0x68] sm:$0xff]
      %v343 = vld [vmem:[%s285 + $0x70] sm:$0xff]
      %v344 = vld [vmem:[%s285 + $0x78] sm:$0xff]
      %v345 = vld [vmem:[%s285 + $0x80] sm:$0xff]
      %v346 = vld [vmem:[%s285 + $0x88] sm:$0xff]
      %v347 = vld [vmem:[%s285 + $0x90] sm:$0xff]
      %v348 = vld [vmem:[%s285 + $0x98] sm:$0xff]
      %v349 = vld [vmem:[%s285 + $0xa0] sm:$0xff]
      %v350 = vld [vmem:[%s285 + $0xa8] sm:$0xff]
      %v351 = vld [vmem:[%s285 + $0xb0] sm:$0xff]
      %v352 = vld [vmem:[%s285 + $0xb8] sm:$0xff]
      %v353 = vld [vmem:[%s285 + $0xc0] sm:$0xff]
      %v354 = vld [vmem:[%s285 + $0xc8] sm:$0xff]
      %v355 = vld [vmem:[%s285 + $0xd0] sm:$0xff]
      %v356 = vld [vmem:[%s285 + $0xd8] sm:$0xff]
      %v357 = vld [vmem:[%s285 + $0xe0] sm:$0xff]
      %v358 = vld [vmem:[%s285 + $0xe8] sm:$0xff]
      %v359 = vld [vmem:[%s285 + $0xf0] sm:$0xff]
      %v360 = vld [vmem:[%s285 + $0xf8] sm:$0xff]
      %v361 = vld [vmem:[%s285 + $0x100] sm:$0xff]
      %v362 = vld [vmem:[%s285 + $0x108] sm:$0xff]
      %v363 = vld [vmem:[%s285 + $0x110] sm:$0xff]
      %v364 = vld [vmem:[%s285 + $0x118] sm:$0xff]
      %v365 = vld [vmem:[%s285 + $0x120] sm:$0xff]
      %v366 = vld [vmem:[%s285 + $0x128] sm:$0xff]
      %v367 = vld [vmem:[%s285 + $0x130] sm:$0xff]
      %v368 = vld [vmem:[%s285 + $0x138] sm:$0xff]
      %v369 = vld [vmem:[%s285 + $0x140] sm:$0xff]
      %v370 = vld [vmem:[%s285 + $0x148] sm:$0xff]
      %v371 = vld [vmem:[%s285 + $0x150] sm:$0xff]
      %v372 = vld [vmem:[%s285 + $0x158] sm:$0xff]
      %v373 = vld [vmem:[%s285 + $0x160] sm:$0xff]
      %v374 = vld [vmem:[%s285 + $0x168] sm:$0xff]
      %v375 = vld [vmem:[%s285 + $0x170] sm:$0xff]
      %v376 = vld [vmem:[%s285 + $0x178] sm:$0xff]
      %v377 = vld [vmem:[%s285 + $0x180] sm:$0xff]
      %v378 = vld [vmem:[%s285 + $0x188] sm:$0xff]
      %v379 = vld [vmem:[%s285 + $0x190] sm:$0xff]
      %v380 = vld [vmem:[%s285 + $0x198] sm:$0xff]
      %v381 = vld [vmem:[%s285 + $0x1a0] sm:$0xff]
      %v382 = vld [vmem:[%s285 + $0x1a8] sm:$0xff]
      %v383 = vld [vmem:[%s285 + $0x1b0] sm:$0xff]
      %v384 = vld [vmem:[%s285 + $0x1b8] sm:$0xff]
      %v385 = vld [vmem:[%s285 + $0x1c0] sm:$0xff]
      %v386 = vld [vmem:[%s285 + $0x1c8] sm:$0xff]
      %v387 = vld [vmem:[%s285 + $0x1d0] sm:$0xff]
      %v388 = vld [vmem:[%s285 + $0x1d8] sm:$0xff]
      %v389 = vld [vmem:[%s285 + $0x1e0] sm:$0xff]
      %v390 = vld [vmem:[%s285 + $0x1e8] sm:$0xff]
      %v391 = vld [vmem:[%s285 + $0x1f0] sm:$0xff]
      %v392 = vld [vmem:[%s285 + $0x1f8] sm:$0xff]
      %v395 = vunpack.c.l.b16 %v327
      %v396 = vunpack.c.h.b16 %v327
      %v397 = vunpack.c.l.b16 %v328
      %v398 = vunpack.c.h.b16 %v328
      %v399 = vpack.c.b16 %v395, %v395
      %v400 = vpack.c.b16 %v396, %v396
      %v401 = vpack.c.b16 %v397, %v397
      %v402 = vpack.c.b16 %v398, %v398
      %v471 = vunpack.c.l.b16 %v329
      %v472 = vunpack.c.h.b16 %v329
      %v473 = vunpack.c.l.b16 %v330
      %v474 = vunpack.c.h.b16 %v330
      %v475 = vunpack.c.l.b16 %v331
      %v476 = vunpack.c.h.b16 %v331
      %v477 = vunpack.c.l.b16 %v332
      %v478 = vunpack.c.h.b16 %v332
      %v479 = vunpack.c.l.b16 %v333
      %v480 = vunpack.c.h.b16 %v333
      %v481 = vunpack.c.l.b16 %v334
      %v482 = vunpack.c.h.b16 %v334
      %v483 = vunpack.c.l.b16 %v335
      %v484 = vunpack.c.h.b16 %v335
      %v485 = vunpack.c.l.b16 %v336
      %v486 = vunpack.c.h.b16 %v336
      %v487 = vunpack.c.l.b16 %v337
      %v488 = vunpack.c.h.b16 %v337
      %v489 = vunpack.c.l.b16 %v338
      %v490 = vunpack.c.h.b16 %v338
      %v491 = vunpack.c.l.b16 %v339
      %v492 = vunpack.c.h.b16 %v339
      %v493 = vunpack.c.l.b16 %v340
      %v494 = vunpack.c.h.b16 %v340
      %v495 = vunpack.c.l.b16 %v341
      %v496 = vunpack.c.h.b16 %v341
      %v497 = vunpack.c.l.b16 %v342
      %v498 = vunpack.c.h.b16 %v342
      %v499 = vunpack.c.l.b16 %v343
      %v500 = vunpack.c.h.b16 %v343
      %v501 = vunpack.c.l.b16 %v344
      %v502 = vunpack.c.h.b16 %v344
      %v503 = vunpack.c.l.b16 %v345
      %v504 = vunpack.c.h.b16 %v345
      %v505 = vunpack.c.l.b16 %v346
      %v506 = vunpack.c.h.b16 %v346
      %v507 = vunpack.c.l.b16 %v347
      %v508 = vunpack.c.h.b16 %v347
      %v509 = vunpack.c.l.b16 %v348
      %v510 = vunpack.c.h.b16 %v348
      %v511 = vunpack.c.l.b16 %v349
      %v512 = vunpack.c.h.b16 %v349
      %v513 = vunpack.c.l.b16 %v350
      %v514 = vunpack.c.h.b16 %v350
      %v515 = vunpack.c.l.b16 %v351
      %v516 = vunpack.c.h.b16 %v351
      %v517 = vunpack.c.l.b16 %v352
      %v518 = vunpack.c.h.b16 %v352
      %v519 = vunpack.c.l.b16 %v353
      %v520 = vunpack.c.h.b16 %v353
      %v521 = vunpack.c.l.b16 %v354
      %v522 = vunpack.c.h.b16 %v354
      %v523 = vunpack.c.l.b16 %v355
      %v524 = vunpack.c.h.b16 %v355
      %v525 = vunpack.c.l.b16 %v356
      %v526 = vunpack.c.h.b16 %v356
      %v527 = vunpack.c.l.b16 %v357
      %v528 = vunpack.c.h.b16 %v357
      %v529 = vunpack.c.l.b16 %v358
      %v530 = vunpack.c.h.b16 %v358
      %v531 = vunpack.c.l.b16 %v359
      %v532 = vunpack.c.h.b16 %v359
      %v533 = vunpack.c.l.b16 %v360
      %v534 = vunpack.c.h.b16 %v360
      %v535 = vunpack.c.l.b16 %v361
      %v536 = vunpack.c.h.b16 %v361
      %v537 = vunpack.c.l.b16 %v362
      %v538 = vunpack.c.h.b16 %v362
      %v539 = vunpack.c.l.b16 %v363
      %v540 = vunpack.c.h.b16 %v363
      %v541 = vunpack.c.l.b16 %v364
      %v542 = vunpack.c.h.b16 %v364
      %v543 = vunpack.c.l.b16 %v365
      %v544 = vunpack.c.h.b16 %v365
      %v545 = vunpack.c.l.b16 %v366
      %v546 = vunpack.c.h.b16 %v366
      %v547 = vunpack.c.l.b16 %v367
      %v548 = vunpack.c.h.b16 %v367
      %v549 = vunpack.c.l.b16 %v368
      %v550 = vunpack.c.h.b16 %v368
      %v551 = vunpack.c.l.b16 %v369
      %v552 = vunpack.c.h.b16 %v369
      %v553 = vunpack.c.l.b16 %v370
      %v554 = vunpack.c.h.b16 %v370
      %v555 = vunpack.c.l.b16 %v371
      %v556 = vunpack.c.h.b16 %v371
      %v557 = vunpack.c.l.b16 %v372
      %v558 = vunpack.c.h.b16 %v372
      %v559 = vunpack.c.l.b16 %v373
      %v560 = vunpack.c.h.b16 %v373
      %v561 = vunpack.c.l.b16 %v374
      %v562 = vunpack.c.h.b16 %v374
      %v563 = vunpack.c.l.b16 %v375
      %v564 = vunpack.c.h.b16 %v375
      %v565 = vunpack.c.l.b16 %v376
      %v566 = vunpack.c.h.b16 %v376
      %v567 = vunpack.c.l.b16 %v377
      %v568 = vunpack.c.h.b16 %v377
      %v569 = vunpack.c.l.b16 %v378
      %v570 = vunpack.c.h.b16 %v378
      %v571 = vunpack.c.l.b16 %v379
      %v572 = vunpack.c.h.b16 %v379
      %v573 = vunpack.c.l.b16 %v380
      %v574 = vunpack.c.h.b16 %v380
      %v575 = vunpack.c.l.b16 %v381
      %v576 = vunpack.c.h.b16 %v381
      %v577 = vunpack.c.l.b16 %v382
      %v578 = vunpack.c.h.b16 %v382
      %v579 = vunpack.c.l.b16 %v383
      %v580 = vunpack.c.h.b16 %v383
      %v581 = vunpack.c.l.b16 %v384
      %v582 = vunpack.c.h.b16 %v384
      %v583 = vunpack.c.l.b16 %v385
      %v584 = vunpack.c.h.b16 %v385
      %v585 = vunpack.c.l.b16 %v386
      %v586 = vunpack.c.h.b16 %v386
      %v587 = vunpack.c.l.b16 %v387
      %v588 = vunpack.c.h.b16 %v387
      %v589 = vunpack.c.l.b16 %v388
      %v590 = vunpack.c.h.b16 %v388
      %v591 = vunpack.c.l.b16 %v389
      %v592 = vunpack.c.h.b16 %v389
      %v593 = vunpack.c.l.b16 %v390
      %v594 = vunpack.c.h.b16 %v390
      %v595 = vunpack.c.l.b16 %v391
      %v596 = vunpack.c.h.b16 %v391
      %v597 = vunpack.c.l.b16 %v392
      %v598 = vunpack.c.h.b16 %v392
      %v599 = vpack.c.b16 %v473, %v471
      %v600 = vpack.c.b16 %v474, %v472
      %v601 = vpack.c.b16 %v477, %v475
      %v602 = vpack.c.b16 %v478, %v476
      %v603 = vpack.c.b16 %v481, %v479
      %v604 = vpack.c.b16 %v482, %v480
      %v605 = vpack.c.b16 %v485, %v483
      %v606 = vpack.c.b16 %v486, %v484
      %v607 = vpack.c.b16 %v489, %v487
      %v608 = vpack.c.b16 %v490, %v488
      %v609 = vpack.c.b16 %v493, %v491
      %v610 = vpack.c.b16 %v494, %v492
      %v611 = vpack.c.b16 %v497, %v495
      %v612 = vpack.c.b16 %v498, %v496
      %v613 = vpack.c.b16 %v501, %v499
      %v614 = vpack.c.b16 %v502, %v500
      %v615 = vpack.c.b16 %v505, %v503
      %v616 = vpack.c.b16 %v506, %v504
      %v617 = vpack.c.b16 %v509, %v507
      %v618 = vpack.c.b16 %v510, %v508
      %v619 = vpack.c.b16 %v513, %v511
      %v620 = vpack.c.b16 %v514, %v512
      %v621 = vpack.c.b16 %v517, %v515
      %v622 = vpack.c.b16 %v518, %v516
      %v623 = vpack.c.b16 %v521, %v519
      %v624 = vpack.c.b16 %v522, %v520
      %v625 = vpack.c.b16 %v525, %v523
      %v626 = vpack.c.b16 %v526, %v524
      %v627 = vpack.c.b16 %v529, %v527
      %v628 = vpack.c.b16 %v530, %v528
      %v629 = vpack.c.b16 %v533, %v531
      %v630 = vpack.c.b16 %v534, %v532
      %v631 = vpack.c.b16 %v537, %v535
      %v632 = vpack.c.b16 %v538, %v536
      %v633 = vpack.c.b16 %v541, %v539
      %v634 = vpack.c.b16 %v542, %v540
      %v635 = vpack.c.b16 %v545, %v543
      %v636 = vpack.c.b16 %v546, %v544
      %v637 = vpack.c.b16 %v549, %v547
      %v638 = vpack.c.b16 %v550, %v548
      %v639 = vpack.c.b16 %v553, %v551
      %v640 = vpack.c.b16 %v554, %v552
      %v641 = vpack.c.b16 %v557, %v555
      %v642 = vpack.c.b16 %v558, %v556
      %v643 = vpack.c.b16 %v561, %v559
      %v644 = vpack.c.b16 %v562, %v560
      %v645 = vpack.c.b16 %v565, %v563
      %v646 = vpack.c.b16 %v566, %v564
      %v647 = vpack.c.b16 %v569, %v567
      %v648 = vpack.c.b16 %v570, %v568
      %v649 = vpack.c.b16 %v573, %v571
      %v650 = vpack.c.b16 %v574, %v572
      %v651 = vpack.c.b16 %v577, %v575
      %v652 = vpack.c.b16 %v578, %v576
      %v653 = vpack.c.b16 %v581, %v579
      %v654 = vpack.c.b16 %v582, %v580
      %v655 = vpack.c.b16 %v585, %v583
      %v656 = vpack.c.b16 %v586, %v584
      %v657 = vpack.c.b16 %v589, %v587
      %v658 = vpack.c.b16 %v590, %v588
      %v659 = vpack.c.b16 %v593, %v591
      %v660 = vpack.c.b16 %v594, %v592
      %v661 = vpack.c.b16 %v597, %v595
      %v662 = vpack.c.b16 %v598, %v596
      %727 = vmatpush.bf16.msra.mxu0 %v613
      %728 = vmatpush.bf16.msra.mxu0 %v611
      %729 = vmatpush.bf16.msra.mxu0 %v609
      %730 = vmatpush.bf16.msra.mxu0 %v607
      %731 = vmatpush.bf16.msra.mxu0 %v605
      %732 = vmatpush.bf16.msra.mxu0 %v603
      %733 = vmatpush.bf16.msra.mxu0 %v601
      %734 = vmatpush.bf16.msra.mxu0 %v599
      %735 = vmatmul.bf16.gmra.mxu0 %v399
      %v736 = vpop.f32.mrf.mxu0
      %v737 = vadd.f32 0.0, %v736
      %v738 = vpop.f32.mrf.mxu0
      %739 = vdwg.mxu0
      %740 = vmatpush.bf16.msra.mxu0 %v629
      %741 = vmatpush.bf16.msra.mxu0 %v627
      %742 = vmatpush.bf16.msra.mxu0 %v625
      %743 = vmatpush.bf16.msra.mxu0 %v623
      %744 = vmatpush.bf16.msra.mxu0 %v621
      %745 = vmatpush.bf16.msra.mxu0 %v619
      %746 = vmatpush.bf16.msra.mxu0 %v617
      %747 = vmatpush.bf16.msra.mxu0 %v615
      %748 = vmatmul.bf16.gmra.mxu0 %v400
      %v749 = vpop.f32.mrf.mxu0
      %v750 = vadd.f32 %v737, %v749
      %v751 = vpop.f32.mrf.mxu0
      %752 = vdwg.mxu0
      %753 = vmatpush.bf16.msra.mxu0 %v645
      %754 = vmatpush.bf16.msra.mxu0 %v643
      %755 = vmatpush.bf16.msra.mxu0 %v641
      %756 = vmatpush.bf16.msra.mxu0 %v639
      %757 = vmatpush.bf16.msra.mxu0 %v637
      %758 = vmatpush.bf16.msra.mxu0 %v635
      %759 = vmatpush.bf16.msra.mxu0 %v633
      %760 = vmatpush.bf16.msra.mxu0 %v631
      %761 = vmatmul.bf16.gmra.mxu0 %v401
      %v762 = vpop.f32.mrf.mxu0
      %v763 = vadd.f32 %v750, %v762
      %v764 = vpop.f32.mrf.mxu0
      %765 = vdwg.mxu0
      %766 = vmatpush.bf16.msra.mxu0 %v661
      %767 = vmatpush.bf16.msra.mxu0 %v659
      %768 = vmatpush.bf16.msra.mxu0 %v657
      %769 = vmatpush.bf16.msra.mxu0 %v655
      %770 = vmatpush.bf16.msra.mxu0 %v653
      %771 = vmatpush.bf16.msra.mxu0 %v651
      %772 = vmatpush.bf16.msra.mxu0 %v649
      %773 = vmatpush.bf16.msra.mxu0 %v647
      %774 = vmatmul.bf16.gmra.mxu0 %v402
      %v775 = vpop.f32.mrf.mxu0
      %v776 = vadd.f32 %v763, %v775
      %v777 = vpop.f32.mrf.mxu0
      %778 = vdwg.mxu0
      %779 = vmatpush.bf16.msra.mxu0 %v614
      %780 = vmatpush.bf16.msra.mxu0 %v612
      %781 = vmatpush.bf16.msra.mxu0 %v610
      %782 = vmatpush.bf16.msra.mxu0 %v608
      %783 = vmatpush.bf16.msra.mxu0 %v606
      %784 = vmatpush.bf16.msra.mxu0 %v604
      %785 = vmatpush.bf16.msra.mxu0 %v602
      %786 = vmatpush.bf16.msra.mxu0 %v600
      %787 = vmatmul.bf16.gmra.mxu0 %v399
      %v788 = vpop.f32.mrf.mxu0
      %v789 = vadd.f32 0.0, %v788
      %v790 = vpop.f32.mrf.mxu0
      %791 = vdwg.mxu0
      %792 = vmatpush.bf16.msra.mxu0 %v630
      %793 = vmatpush.bf16.msra.mxu0 %v628
      %794 = vmatpush.bf16.msra.mxu0 %v626
      %795 = vmatpush.bf16.msra.mxu0 %v624
      %796 = vmatpush.bf16.msra.mxu0 %v622
      %797 = vmatpush.bf16.msra.mxu0 %v620
      %798 = vmatpush.bf16.msra.mxu0 %v618
      %799 = vmatpush.bf16.msra.mxu0 %v616
      %800 = vmatmul.bf16.gmra.mxu0 %v400
      %v801 = vpop.f32.mrf.mxu0
      %v802 = vadd.f32 %v789, %v801
      %v803 = vpop.f32.mrf.mxu0
      %804 = vdwg.mxu0
      %805 = vmatpush.bf16.msra.mxu0 %v646
      %806 = vmatpush.bf16.msra.mxu0 %v644
      %807 = vmatpush.bf16.msra.mxu0 %v642
      %808 = vmatpush.bf16.msra.mxu0 %v640
      %809 = vmatpush.bf16.msra.mxu0 %v638
      %810 = vmatpush.bf16.msra.mxu0 %v636
      %811 = vmatpush.bf16.msra.mxu0 %v634
      %812 = vmatpush.bf16.msra.mxu0 %v632
      %813 = vmatmul.bf16.gmra.mxu0 %v401
      %v814 = vpop.f32.mrf.mxu0
      %v815 = vadd.f32 %v802, %v814
      %v816 = vpop.f32.mrf.mxu0
      %817 = vdwg.mxu0
      %818 = vmatpush.bf16.msra.mxu0 %v662
      %819 = vmatpush.bf16.msra.mxu0 %v660
      %820 = vmatpush.bf16.msra.mxu0 %v658
      %821 = vmatpush.bf16.msra.mxu0 %v656
      %822 = vmatpush.bf16.msra.mxu0 %v654
      %823 = vmatpush.bf16.msra.mxu0 %v652
      %824 = vmatpush.bf16.msra.mxu0 %v650
      %825 = vmatpush.bf16.msra.mxu0 %v648
      %826 = vmatmul.bf16.gmra.mxu0 %v402
      %v827 = vpop.f32.mrf.mxu0
      %v828 = vadd.f32 %v815, %v827
      %v829 = vpop.f32.mrf.mxu0
      %830 = vdwg.mxu0
      %v831 = vadd.f32 %v325, %v776
      %v832 = vadd.f32 %v326, %v828
      %833 = vst [vmem:[#allocation2] sm:$0xff] %v831
      %834 = vst [vmem:[#allocation2 + $0x8] sm:$0xff] %v832
      %p835 = scmp.eq.s32.totalorder %s23, 3
      // Predicated region
      $region37: #{discriminator_forward.11} parent=27 // pred_check
        %p836 = pneg %p835
      $region38: #{discriminator_forward.11} parent=27 // pred_check_branch
        %838 = sbr.rel (%p836) target = $region40
      $region39: #{discriminator_forward.11} parent=27 // pred_region
        %v839 = vld [vmem:[#allocation2] sm:$0xff]
        %v840 = vld [vmem:[#allocation2 + $0x8] sm:$0xff]
        %v841 = vld [vmem:[%s301] sm:$0x3]
        %v842 = vrot.slane %v839, 4
        %v843 = vadd.f32 %v839, %v842
        %v844 = vrot.slane %v843, 2
        %v845 = vadd.f32 %v843, %v844
        %v846 = vrot.slane %v845, 1
        %v847 = vadd.f32 %v845, %v846
        %v848 = vrot.slane %v840, 4
        %v849 = vadd.f32 %v840, %v848
        %v850 = vrot.slane %v849, 2
        %v851 = vadd.f32 %v849, %v850
        %v852 = vrot.slane %v851, 1
        %v853 = vadd.f32 %v851, %v852
        %v856 = vrot.slane %v853, 7
        %vm857 = vcmask 1040384
        %v858 = vsel %vm857, %v847, %v856
        %v860 = vadd.f32 %v841, %v858
        %v861 = vlaneseq
        %vm862 = vcmp.ge.s32.totalorder %v861, 0
        %vm863 = vcmp.lt.s32.totalorder %v861, 256
        %vm864 = vmand %vm862, %vm863
        %865 = vst.msk [vmem:[%s301] sm:$0x3] %vm864, %v860
        %v866 = vld [vmem:[%s306] sm:$0x3]
        %v867 = vmul.f32 %v839, %v839
        %v868 = vmul.f32 %v840, %v840
        %v869 = vrot.slane %v867, 4
        %v870 = vadd.f32 %v867, %v869
        %v871 = vrot.slane %v870, 2
        %v872 = vadd.f32 %v870, %v871
        %v873 = vrot.slane %v872, 1
        %v874 = vadd.f32 %v872, %v873
        %v875 = vrot.slane %v868, 4
        %v876 = vadd.f32 %v868, %v875
        %v877 = vrot.slane %v876, 2
        %v878 = vadd.f32 %v876, %v877
        %v879 = vrot.slane %v878, 1
        %v880 = vadd.f32 %v878, %v879
        %v883 = vrot.slane %v880, 7
        %v884 = vsel %vm857, %v874, %v883
        %v886 = vadd.f32 %v866, %v884
        %887 = vst.msk [vmem:[%s306] sm:$0x3] %vm864, %v886
        %888 = vst [vmem:[%s296] sm:$0xff] %v839
        %889 = vst [vmem:[%s296 + $0x8] sm:$0xff] %v840
      $region40: #{discriminator_forward.11} parent=27 // pred_fallthru
        _
      %s890 = smul.u32 2, %s21
      %p891 = scmp.lt.s32.totalorder %s22, 0
      %s892 = scalar_select %p891, %s22, 0
      %p893 = scmp.lt.s32.totalorder %s890, 1
      %s894 = scalar_select %p893, %s890, 1
      %s895 = smul.addr %s892, 2
      %s896 = sadd.s32 %s894, %s895
      %s897 = smul.addr %s896, 8
      %s898 = scalar_lea.vmem %s2, %s897
      %s899 = smul.u32 2, %s21
      %p900 = scmp.lt.s32.totalorder %s899, 1
      %s901 = scalar_select %p900, %s899, 1
      %s902 = scalar_lea.vmem %s3, %s901
      %s903 = smul.u32 2, %s21
      %p904 = scmp.lt.s32.totalorder %s903, 1
      %s905 = scalar_select %p904, %s903, 1
      %s906 = scalar_lea.vmem %s4, %s905
      // Predicated region
      $region41: #{discriminator_forward.11} parent=27 // pred_check
        %p907 = pneg %p111
      $region42: #{discriminator_forward.11} parent=27 // pred_check_branch
        %909 = sbr.rel (%p907) target = $region44
      $region43: #{discriminator_forward.11} parent=27 // pred_region
        %s910 = smul.u32 2, %s21
      $region44: #{discriminator_forward.11} parent=27 // pred_fallthru
        _
      // Predicated region
      $region45: #{discriminator_forward.11} parent=27 // pred_check
        %p911 = pneg %p137
      $region46: #{discriminator_forward.11} parent=27 // pred_check_branch
        %913 = sbr.rel (%p911) target = $region48
      $region47: #{discriminator_forward.11} parent=27 // pred_region
        %s914 = smul.u32 2, %s21
      $region48: #{discriminator_forward.11} parent=27 // pred_fallthru
        _
      // Predicated region
      $region49: #{discriminator_forward.11} parent=27 // pred_check
        %p915 = pneg %p163
      $region50: #{discriminator_forward.11} parent=27 // pred_check_branch
        %917 = sbr.rel (%p915) target = $region52
      $region51: #{discriminator_forward.11} parent=27 // pred_region
        %s918 = smul.u32 2, %s21
      $region52: #{discriminator_forward.11} parent=27 // pred_fallthru
        _
      // Predicated region
      $region53: #{discriminator_forward.11} parent=27 // pred_check
        %p919 = pneg %p111
      $region54: #{discriminator_forward.11} parent=27 // pred_check_branch
        %921 = sbr.rel (%p919) target = $region56
      $region55: #{discriminator_forward.11} parent=27 // pred_region
        %s922 = smul.u32 2, %s21
        %p923 = scmp.lt.s32.totalorder %s22, 0
        %s924 = scalar_select %p923, %s22, 0
        %p925 = scmp.lt.s32.totalorder %s922, 1
        %s926 = scalar_select %p925, %s922, 1
        %s927 = smul.addr %s924, 2
        %s928 = sadd.s32 %s926, %s927
        %s929 = smul.addr %s928, 8
        %s930 = scalar_lea.vmem %s2, %s929
      $region56: #{discriminator_forward.11} parent=27 // pred_fallthru
        _
      // Predicated region
      $region57: #{discriminator_forward.11} parent=27 // pred_check
        %p931 = pneg %p137
      $region58: #{discriminator_forward.11} parent=27 // pred_check_branch
        %933 = sbr.rel (%p931) target = $region60
      $region59: #{discriminator_forward.11} parent=27 // pred_region
        %s934 = smul.u32 2, %s21
        %p935 = scmp.lt.s32.totalorder %s934, 1
        %s936 = scalar_select %p935, %s934, 1
        %s937 = scalar_lea.vmem %s3, %s936
      $region60: #{discriminator_forward.11} parent=27 // pred_fallthru
        _
      // Predicated region
      $region61: #{discriminator_forward.11} parent=27 // pred_check
        %p938 = pneg %p163
      $region62: #{discriminator_forward.11} parent=27 // pred_check_branch
        %940 = sbr.rel (%p938) target = $region64
      $region63: #{discriminator_forward.11} parent=27 // pred_region
        %s941 = smul.u32 2, %s21
        %p942 = scmp.lt.s32.totalorder %s941, 1
        %s943 = scalar_select %p942, %s941, 1
        %s944 = scalar_lea.vmem %s4, %s943
      $region64: #{discriminator_forward.11} parent=27 // pred_fallthru
        _
    $region28: #{discriminator_forward.11} parent=5 // pred_fallthru
      _
    %p945 = scmp.le.s32.totalorder 2, %s11
    // Predicated region
    $region65: #{discriminator_forward.11} parent=5 // pred_check
      %p946 = pneg %p945
    $region66: #{discriminator_forward.11} parent=5 // pred_check_branch
      %948 = sbr.rel (%p946) target = $region68
    $region67: #{discriminator_forward.11} parent=5 // pred_region
      %s949 = ssub.s32 %s11, 2
    $region68: #{discriminator_forward.11} parent=5 // pred_fallthru
      _
  $region6: #{discriminator_forward.11} parent=0 // loop_footer
    %s15 = sadd.s32 1, %s11
  $region7: #{discriminator_forward.11} parent=0 // loop_footer_branch
    %10 = sbr.rel target = $region3
  $region8: #{discriminator_forward.11} parent=0 // loop_exit
    _

// kernel: discriminator_forward.14
$region0: #{discriminator_forward.14}
  #allocation0 [shape = 'u32[]', space=smem, size = 0x4, offset = 0x4, fixed_abs, tag = 'smem constant byte address 0x4 - core index']
  #allocation1 [shape = 'u32[72,128]{1,0:T(1,128)}', space=vmem, size = 0x9000, scoped, tag = 'internal scratch']
  %s0 = inlined_call_operand.vmem [shape: f32[2,512], index: 0, kind: input, shape index: {}]
  %s1 = inlined_call_operand.vmem [shape: f32[1,512], index: 1, kind: input, shape index: {}]
  %s2 = inlined_call_operand.vmem [shape: f32[1,512], index: 2, kind: input, shape index: {}]
  %s3 = inlined_call_operand.vmem [shape: bf16[2,512], index: 3, kind: output, shape index: {}]
  %s4 = sld [smem:[#allocation0]]
  $region22: #{discriminator_forward.14} parent=0
    _
  %s6 = ssub.s32 1, %s4
  %s7 = scalar_select 0, %s6, %s4
  // Predicated region
  $region2: #{discriminator_forward.14} parent=0 // pred_check
    _
  $region3: #{discriminator_forward.14} parent=0 // pred_check_branch
    %9 = sbr.rel (0) target = $region5
  $region4: #{discriminator_forward.14} parent=0 // pred_region
    _
  $region5: #{discriminator_forward.14} parent=0 // pred_fallthru
    _
  // Predicated region
  $region6: #{discriminator_forward.14} parent=0 // pred_check
    _
  $region7: #{discriminator_forward.14} parent=0 // pred_check_branch
    %11 = sbr.rel (0) target = $region9
  $region8: #{discriminator_forward.14} parent=0 // pred_region
    _
  $region9: #{discriminator_forward.14} parent=0 // pred_fallthru
    _
  // Predicated region
  $region10: #{discriminator_forward.14} parent=0 // pred_check
    _
  $region11: #{discriminator_forward.14} parent=0 // pred_check_branch
    %13 = sbr.rel (0) target = $region13
  $region12: #{discriminator_forward.14} parent=0 // pred_region
    _
  $region13: #{discriminator_forward.14} parent=0 // pred_fallthru
    _
  %v14 = vld [vmem:[%s0] sm:$0xff]
  %v15 = vld [vmem:[%s1] sm:$0xf]
  %v17 = vperm.slane %v15, 0
  %v18 = vperm.slane %v15, 1
  %v19 = vperm.slane %v15, 2
  %v20 = vperm.slane %v15, 3
  %v21 = vrot.slane %v18, 6
  %v22 = vrot.slane %v19, 4
  %v23 = vrot.slane %v20, 2
  %vm24 = vcmask 1041408
  %v25 = vsel %vm24, %v17, %v21
  %vm26 = vcmask 1045508
  %v27 = vsel %vm26, %v22, %v23
  %vm28 = vcmask 1043456
  %v29 = vsel %vm28, %v25, %v27
  %v31 = vmul.f32 %v14, %v29
  %v32 = vld [vmem:[%s2] sm:$0xf]
  %v34 = vperm.slane %v32, 0
  %v35 = vperm.slane %v32, 1
  %v36 = vperm.slane %v32, 2
  %v37 = vperm.slane %v32, 3
  %v38 = vrot.slane %v35, 6
  %v39 = vrot.slane %v36, 4
  %v40 = vrot.slane %v37, 2
  %v41 = vsel %vm24, %v34, %v38
  %v42 = vsel %vm26, %v39, %v40
  %v43 = vsel %vm28, %v41, %v42
  %v45 = vadd.f32 %v31, %v43
  %vm46 = vcmp.ge.f32.partialorder %v45, 0.0
  %v47 = vmul.f32 %v45, 0.2
  %v48 = vsel %vm46, %v45, %v47
  %50 = vst [vmem:[#allocation1] ss:$4 sm:$0xff] %v48
  %v51 = vld.sshfl [vmem:[#allocation1] sm:$0xff pattern:$0x73625140]
  %v52 = vld.sshfl [vmem:[#allocation1 + $0x8] sm:$0xff pattern:$0x73625140]
  %v53 = vld.sshfl [vmem:[#allocation1 + $0x10] sm:$0xff pattern:$0x73625140]
  %v54 = vld.sshfl [vmem:[#allocation1 + $0x18] sm:$0xff pattern:$0x73625140]
  %v59 = vpack.c.bf16 %v52, %v51
  %v60 = vpack.c.bf16 %v54, %v53
  %v63 = vrot.slane %v59, 3
  %v64 = vrot.slane %v60, 6
  %v65 = vrot.slane %v60, 1
  %vm66 = vcmask 1040384
  %v69 = vsel %vm66, %v59, %v63
  %vm70 = vcmask 1042434
  %v73 = vsel %vm70, %v64, %v65
  %v74 = vsel %vm24, %v69, %v73
  %76 = vst [vmem:[%s3] sm:$0xf] %v74
  // Predicated region
  $region14: #{discriminator_forward.14} parent=0 // pred_check
    _
  $region15: #{discriminator_forward.14} parent=0 // pred_check_branch
    %78 = sbr.rel (0) target = $region17
  $region16: #{discriminator_forward.14} parent=0 // pred_region
    _
  $region17: #{discriminator_forward.14} parent=0 // pred_fallthru
    _
  // Predicated region
  $region18: #{discriminator_forward.14} parent=0 // pred_check
    _
  $region19: #{discriminator_forward.14} parent=0 // pred_check_branch
    %80 = sbr.rel (0) target = $region21
  $region20: #{discriminator_forward.14} parent=0 // pred_region
    _
  $region21: #{discriminator_forward.14} parent=0 // pred_fallthru
    _

// kernel: discriminator_forward.13
$region0: #{discriminator_forward.13}
  #allocation0 [shape = 'u32[]', space=smem, size = 0x4, offset = 0x4, fixed_abs, tag = 'smem constant byte address 0x4 - core index']
  #allocation1 [shape = 'u32[72,128]{1,0:T(1,128)}', space=vmem, size = 0x9000, scoped, tag = 'internal scratch']
  #allocation2 [shape = 'f32[2,256]{1,0:T(2,128)}', space=vmem, size = 0x800, scoped, tag = 'scratch operand']
  %s0 = inlined_call_operand.vmem [shape: bf16[2,4096], index: 0, kind: input, shape index: {}]
  %s1 = inlined_call_operand.vmem [shape: bf16[4096,512], index: 1, kind: input, shape index: {}]
  %s2 = inlined_call_operand.vmem [shape: f32[2,512], index: 2, kind: output, shape index: {0}]
  %s3 = inlined_call_operand.vmem [shape: f32[1,512], index: 3, kind: output, shape index: {1}]
  %s4 = inlined_call_operand.vmem [shape: f32[1,512], index: 4, kind: output, shape index: {2}]
  %5 = xla_tuple %s2, %s3, %s4
  %s6 = sld [smem:[#allocation0]]
  $region107: #{discriminator_forward.13} parent=0
    _
  %s8 = ssub.s32 1, %s6
  %s9 = scalar_select 0, %s8, %s6
  $region1: #{discriminator_forward.13} parent=0
    #allocation3 [shape = 'u8[524288]{0}', space=vmem, size = 0x80000, scoped, tag = 'input window, operand 1']
    loop: start=0, step=1, limit=18
    $region2: #{discriminator_forward.13} parent=1 // loop_pre_header
      _
    $region3: #{discriminator_forward.13} parent=1 // loop_header
      %s11 = sphi 0, %s15
      %p12 = scmp.ge.s32.totalorder %s11, 18
      %s18 = sphi 0, %s37
      %s19 = sphi 0, %s33
      %s20 = sphi 0, %s29
      %s21 = sphi 0, %s18
      %s22 = sphi 0, %s19
      %s23 = sphi 0, %s20
      %s24 = sphi 0, %s21
      %s25 = sphi 0, %s22
      %s26 = sphi 0, %s23
      %s42 = sphi 0, %s44
      %s45 = sphi 0, %s42
      %s46 = sphi 0, %s45
      %s62 = sphi 0, %s46
      %s70 = sphi 0, %s72
      %s73 = sphi 0, %s70
      %s74 = sphi 0, %s73
      %s90 = sphi 0, %s74
      %s98 = sphi 0, %s100
      %s101 = sphi 0, %s98
      %s102 = sphi 0, %s101
      %s118 = sphi 0, %s102
      %s124 = sphi 0, %s126
      %s127 = sphi 0, %s124
      %s128 = sphi 0, %s127
      %s144 = sphi 0, %s128
      %s150 = sphi 0, %s152
      %s153 = sphi 0, %s150
      %s154 = sphi 0, %s153
      %s170 = sphi 0, %s154
    $region4: #{discriminator_forward.13} parent=1 // loop_header_branch
      %14 = sbr.rel (%p12) target = $region8
    $region5: #{discriminator_forward.13} parent=1 // loop_body
      %s16 = ssub.s32 %s11, 1
      %s17 = ssub.s32 %s11, 2
      %s27 = sadd.s32 1, %s20
      %p28 = scmp.ge.s32.totalorder %s27, 8
      %s29 = scalar_select %p28, 0, %s27
      %s30 = sadd.s32 1, %s19
      %s31 = scalar_select %p28, %s30, %s19
      %p32 = scmp.ge.s32.totalorder %s31, 1
      %s33 = scalar_select %p32, 0, %s31
      %s34 = sadd.s32 1, %s18
      %s35 = scalar_select %p32, %s34, %s18
      %p36 = scmp.ge.s32.totalorder %s35, 2
      %s37 = scalar_select %p36, 0, %s35
      %s38 = ssub.s32 %s19, %s33
      %s39 = ssub.s32 %s20, %s29
      %s40 = sor.u32 %s38, %s39
      %p41 = scmp.eq.s32.totalorder %s40, 0
      %s43 = sadd.s32 %s42, 1
      %s44 = scalar_select %p41, %s42, %s43
      %p47 = pneg %p41
      %p48 = scmp.eq.s32.totalorder %s11, 15
      %p49 = por %p47, %p48
      %p50 = scmp.ne.s32.totalorder %s42, %s45
      %p51 = scmp.eq.s32.totalorder %s11, 0
      %p52 = por %p50, %p51
      %p53 = scmp.ne.s32.totalorder %s42, %s45
      %p54 = scmp.eq.s32.totalorder %s16, 15
      %p55 = por %p53, %p54
      %p56 = scmp.ne.s32.totalorder %s45, %s46
      %p57 = scmp.eq.s32.totalorder %s16, 0
      %p58 = por %p56, %p57
      %p59 = scmp.ne.s32.totalorder %s45, %s46
      %p60 = scmp.eq.s32.totalorder %s17, 15
      %p61 = por %p59, %p60
      %p63 = scmp.ne.s32.totalorder %s46, %s62
      %p64 = scmp.eq.s32.totalorder %s17, 0
      %p65 = por %p63, %p64
      %s66 = ssub.s32 %s20, %s29
      %s67 = ssub.s32 %s18, %s37
      %s68 = sor.u32 %s66, %s67
      %p69 = scmp.eq.s32.totalorder %s68, 0
      %s71 = sadd.s32 %s70, 1
      %s72 = scalar_select %p69, %s70, %s71
      %p75 = pneg %p69
      %p76 = scmp.eq.s32.totalorder %s11, 15
      %p77 = por %p75, %p76
      %p78 = scmp.ne.s32.totalorder %s70, %s73
      %p79 = scmp.eq.s32.totalorder %s11, 0
      %p80 = por %p78, %p79
      %p81 = scmp.ne.s32.totalorder %s70, %s73
      %p82 = scmp.eq.s32.totalorder %s16, 15
      %p83 = por %p81, %p82
      %p84 = scmp.ne.s32.totalorder %s73, %s74
      %p85 = scmp.eq.s32.totalorder %s16, 0
      %p86 = por %p84, %p85
      %p87 = scmp.ne.s32.totalorder %s73, %s74
      %p88 = scmp.eq.s32.totalorder %s17, 15
      %p89 = por %p87, %p88
      %p91 = scmp.ne.s32.totalorder %s74, %s90
      %p92 = scmp.eq.s32.totalorder %s17, 0
      %p93 = por %p91, %p92
      %s94 = ssub.s32 %s19, %s33
      %s95 = ssub.s32 %s18, %s37
      %s96 = sor.u32 %s94, %s95
      %p97 = scmp.eq.s32.totalorder %s96, 0
      %s99 = sadd.s32 %s98, 1
      %s100 = scalar_select %p97, %s98, %s99
      %p103 = pneg %p97
      %p104 = scmp.eq.s32.totalorder %s11, 15
      %p105 = por %p103, %p104
      %p106 = scmp.ne.s32.totalorder %s98, %s101
      %p107 = scmp.eq.s32.totalorder %s11, 0
      %p108 = por %p106, %p107
      %p109 = scmp.ne.s32.totalorder %s98, %s101
      %p110 = scmp.eq.s32.totalorder %s16, 15
      %p111 = por %p109, %p110
      %p112 = scmp.ne.s32.totalorder %s101, %s102
      %p113 = scmp.eq.s32.totalorder %s16, 0
      %p114 = por %p112, %p113
      %p115 = scmp.ne.s32.totalorder %s101, %s102
      %p116 = scmp.eq.s32.totalorder %s17, 15
      %p117 = por %p115, %p116
      %p119 = scmp.ne.s32.totalorder %s102, %s118
      %p120 = scmp.eq.s32.totalorder %s17, 0
      %p121 = por %p119, %p120
      %s122 = ssub.s32 %s18, %s37
      %p123 = scmp.eq.s32.totalorder %s122, 0
      %s125 = sadd.s32 %s124, 1
      %s126 = scalar_select %p123, %s124, %s125
      %p129 = pneg %p123
      %p130 = scmp.eq.s32.totalorder %s11, 15
      %p131 = por %p129, %p130
      %p132 = scmp.ne.s32.totalorder %s124, %s127
      %p133 = scmp.eq.s32.totalorder %s11, 0
      %p134 = por %p132, %p133
      %p135 = scmp.ne.s32.totalorder %s124, %s127
      %p136 = scmp.eq.s32.totalorder %s16, 15
      %p137 = por %p135, %p136
      %p138 = scmp.ne.s32.totalorder %s127, %s128
      %p139 = scmp.eq.s32.totalorder %s16, 0
      %p140 = por %p138, %p139
      %p141 = scmp.ne.s32.totalorder %s127, %s128
      %p142 = scmp.eq.s32.totalorder %s17, 15
      %p143 = por %p141, %p142
      %p145 = scmp.ne.s32.totalorder %s128, %s144
      %p146 = scmp.eq.s32.totalorder %s17, 0
      %p147 = por %p145, %p146
      %s148 = ssub.s32 %s18, %s37
      %p149 = scmp.eq.s32.totalorder %s148, 0
      %s151 = sadd.s32 %s150, 1
      %s152 = scalar_select %p149, %s150, %s151
      %p155 = pneg %p149
      %p156 = scmp.eq.s32.totalorder %s11, 15
      %p157 = por %p155, %p156
      %p158 = scmp.ne.s32.totalorder %s150, %s153
      %p159 = scmp.eq.s32.totalorder %s11, 0
      %p160 = por %p158, %p159
      %p161 = scmp.ne.s32.totalorder %s150, %s153
      %p162 = scmp.eq.s32.totalorder %s16, 15
      %p163 = por %p161, %p162
      %p164 = scmp.ne.s32.totalorder %s153, %s154
      %p165 = scmp.eq.s32.totalorder %s16, 0
      %p166 = por %p164, %p165
      %p167 = scmp.ne.s32.totalorder %s153, %s154
      %p168 = scmp.eq.s32.totalorder %s17, 15
      %p169 = por %p167, %p168
      %p171 = scmp.ne.s32.totalorder %s154, %s170
      %p172 = scmp.eq.s32.totalorder %s17, 0
      %p173 = por %p171, %p172
      %p174 = scmp.le.s32.totalorder 1, %s11
      %p175 = scmp.lt.s32.totalorder %s11, 17
      %p176 = pnand %p174, %p175
      %p177 = pneg %p176
      // Predicated region
      $region9: #{discriminator_forward.13} parent=5 // pred_check
        _
      $region10: #{discriminator_forward.13} parent=5 // pred_check_branch
        %179 = sbr.rel (%p176) target = $region12
      $region11: #{discriminator_forward.13} parent=5 // pred_region
        %s180 = ssub.s32 %s11, 1
      $region12: #{discriminator_forward.13} parent=5 // pred_fallthru
        _
      %p181 = scmp.lt.s32.totalorder %s11, 16
      // Predicated region
      $region13: #{discriminator_forward.13} parent=5 // pred_check
        %p182 = pneg %p181
      $region14: #{discriminator_forward.13} parent=5 // pred_check_branch
        %184 = sbr.rel (%p182) target = $region16
      $region15: #{discriminator_forward.13} parent=5 // pred_region
        // Predicated region
        $region17: #{discriminator_forward.13} parent=15 // pred_check
          %p185 = pneg %p52
        $region18: #{discriminator_forward.13} parent=15 // pred_check_branch
          %187 = sbr.rel (%p185) target = $region20
        $region19: #{discriminator_forward.13} parent=15 // pred_region
          %s188 = smul.u32 4, %s20
          %p189 = scmp.lt.s32.totalorder %s19, 0
          %s190 = scalar_select %p189, %s19, 0
          %p191 = scmp.lt.s32.totalorder %s188, 31
          %s192 = scalar_select %p191, %s188, 31
          %s193 = smul.addr %s190, 32
          %s194 = sadd.s32 %s192, %s193
          %s195 = scalar_lea.vmem %s0, %s194
          %s196 = smul.u32 4, %s20
        $region20: #{discriminator_forward.13} parent=15 // pred_fallthru
          _
        // Predicated region
        $region21: #{discriminator_forward.13} parent=15 // pred_check
          %p197 = pneg %p80
        $region22: #{discriminator_forward.13} parent=15 // pred_check_branch
          %199 = sbr.rel (%p197) target = $region24
        $region23: #{discriminator_forward.13} parent=15 // pred_region
          %s200 = sand.u32 %s70, 1
          %s201 = sand.u32 %s70, 1
          %s202 = smul.addr %s201, 512
          %s203 = scalar_lea.vmem [#allocation3], %s202
          %s204 = smul.u32 64, %s20
          %s205 = smul.u32 2, %s18
          %s206 = smul.addr %s204, 4
          %s207 = sadd.s32 %s205, %s206
          %s208 = smul.addr %s207, 4
          %s209 = scalar_lea.vmem %s1, %s208
          // Predicated region
          $region25: #{discriminator_forward.13} parent=23 // pred_check
            _
          $region26: #{discriminator_forward.13} parent=23 // pred_check_branch
            %211 = sbr.rel (0) target = $region28
          $region27: #{discriminator_forward.13} parent=23 // pred_region
            // Predicated region
            $region29: #{discriminator_forward.13} parent=27 // pred_check
              _
            $region30: #{discriminator_forward.13} parent=27 // pred_check_branch
              %213 = sbr.rel (0) target = $region32
            $region31: #{discriminator_forward.13} parent=27 // pred_region
              // Predicated region
              $region44: #{discriminator_forward.13} parent=31 // pred_check
                _
              $region45: #{discriminator_forward.13} parent=31 // pred_check_branch
                %355 = sbr.rel (0) target = $region47
              $region46: #{discriminator_forward.13} parent=31 // pred_region
                loop: start=0, step=1, limit=1
                $region48: #{discriminator_forward.13} parent=46 // loop_pre_header
                  _
                $region49: #{discriminator_forward.13} parent=46 // loop_header
                  %s357 = sphi 0, %s361
                  %p358 = scmp.ge.s32.totalorder %s357, 1
                  %s362 = sphi %s209, %s209
                  %s363 = sphi %s203, %s203
                $region50: #{discriminator_forward.13} parent=46 // loop_header_branch
                  %360 = sbr.rel (%p358) target = $region54
                $region51: #{discriminator_forward.13} parent=46 // loop_body
                  %v364 = vld [vmem:[%s362] sm:$0xff]
                  %365 = vst [vmem:[%s363] sm:$0xff] %v364
                  %v366 = vld [vmem:[%s362 + $0x10] sm:$0xff]
                  %367 = vst [vmem:[%s363 + $0x8] sm:$0xff] %v366
                  %v368 = vld [vmem:[%s362 + $0x20] sm:$0xff]
                  %369 = vst [vmem:[%s363 + $0x10] sm:$0xff] %v368
                  %v370 = vld [vmem:[%s362 + $0x30] sm:$0xff]
                  %371 = vst [vmem:[%s363 + $0x18] sm:$0xff] %v370
                  %v372 = vld [vmem:[%s362 + $0x40] sm:$0xff]
                  %373 = vst [vmem:[%s363 + $0x20] sm:$0xff] %v372
                  %v374 = vld [vmem:[%s362 + $0x50] sm:$0xff]
                  %375 = vst [vmem:[%s363 + $0x28] sm:$0xff] %v374
                  %v376 = vld [vmem:[%s362 + $0x60] sm:$0xff]
                  %377 = vst [vmem:[%s363 + $0x30] sm:$0xff] %v376
                  %v378 = vld [vmem:[%s362 + $0x70] sm:$0xff]
                  %379 = vst [vmem:[%s363 + $0x38] sm:$0xff] %v378
                  %v380 = vld [vmem:[%s362 + $0x80] sm:$0xff]
                  %381 = vst [vmem:[%s363 + $0x40] sm:$0xff] %v380
                  %v382 = vld [vmem:[%s362 + $0x90] sm:$0xff]
                  %383 = vst [vmem:[%s363 + $0x48] sm:$0xff] %v382
                  %v384 = vld [vmem:[%s362 + $0xa0] sm:$0xff]
                  %385 = vst [vmem:[%s363 + $0x50] sm:$0xff] %v384
                  %v386 = vld [vmem:[%s362 + $0xb0] sm:$0xff]
                  %387 = vst [vmem:[%s363 + $0x58] sm:$0xff] %v386
                  %v388 = vld [vmem:[%s362 + $0xc0] sm:$0xff]
                  %389 = vst [vmem:[%s363 + $0x60] sm:$0xff] %v388
                  %v390 = vld [vmem:[%s362 + $0xd0] sm:$0xff]
                  %391 = vst [vmem:[%s363 + $0x68] sm:$0xff] %v390
                  %v392 = vld [vmem:[%s362 + $0xe0] sm:$0xff]
                  %393 = vst [vmem:[%s363 + $0x70] sm:$0xff] %v392
                  %v394 = vld [vmem:[%s362 + $0xf0] sm:$0xff]
                  %395 = vst [vmem:[%s363 + $0x78] sm:$0xff] %v394
                  %v396 = vld [vmem:[%s362 + $0x100] sm:$0xff]
                  %397 = vst [vmem:[%s363 + $0x80] sm:$0xff] %v396
                  %v398 = vld [vmem:[%s362 + $0x110] sm:$0xff]
                  %399 = vst [vmem:[%s363 + $0x88] sm:$0xff] %v398
                  %v400 = vld [vmem:[%s362 + $0x120] sm:$0xff]
                  %401 = vst [vmem:[%s363 + $0x90] sm:$0xff] %v400
                  %v402 = vld [vmem:[%s362 + $0x130] sm:$0xff]
                  %403 = vst [vmem:[%s363 + $0x98] sm:$0xff] %v402
                  %v404 = vld [vmem:[%s362 + $0x140] sm:$0xff]
                  %405 = vst [vmem:[%s363 + $0xa0] sm:$0xff] %v404
                  %v406 = vld [vmem:[%s362 + $0x150] sm:$0xff]
                  %407 = vst [vmem:[%s363 + $0xa8] sm:$0xff] %v406
                  %v408 = vld [vmem:[%s362 + $0x160] sm:$0xff]
                  %409 = vst [vmem:[%s363 + $0xb0] sm:$0xff] %v408
                  %v410 = vld [vmem:[%s362 + $0x170] sm:$0xff]
                  %411 = vst [vmem:[%s363 + $0xb8] sm:$0xff] %v410
                  %v412 = vld [vmem:[%s362 + $0x180] sm:$0xff]
                  %413 = vst [vmem:[%s363 + $0xc0] sm:$0xff] %v412
                  %v414 = vld [vmem:[%s362 + $0x190] sm:$0xff]
                  %415 = vst [vmem:[%s363 + $0xc8] sm:$0xff] %v414
                  %v416 = vld [vmem:[%s362 + $0x1a0] sm:$0xff]
                  %417 = vst [vmem:[%s363 + $0xd0] sm:$0xff] %v416
                  %v418 = vld [vmem:[%s362 + $0x1b0] sm:$0xff]
                  %419 = vst [vmem:[%s363 + $0xd8] sm:$0xff] %v418
                  %v420 = vld [vmem:[%s362 + $0x1c0] sm:$0xff]
                  %421 = vst [vmem:[%s363 + $0xe0] sm:$0xff] %v420
                  %v422 = vld [vmem:[%s362 + $0x1d0] sm:$0xff]
                  %423 = vst [vmem:[%s363 + $0xe8] sm:$0xff] %v422
                  %v424 = vld [vmem:[%s362 + $0x1e0] sm:$0xff]
                  %425 = vst [vmem:[%s363 + $0xf0] sm:$0xff] %v424
                  %v426 = vld [vmem:[%s362 + $0x1f0] sm:$0xff]
                  %427 = vst [vmem:[%s363 + $0xf8] sm:$0xff] %v426
                  %v428 = vld [vmem:[%s362 + $0x200] sm:$0xff]
                  %429 = vst [vmem:[%s363 + $0x100] sm:$0xff] %v428
                  %v430 = vld [vmem:[%s362 + $0x210] sm:$0xff]
                  %431 = vst [vmem:[%s363 + $0x108] sm:$0xff] %v430
                  %v432 = vld [vmem:[%s362 + $0x220] sm:$0xff]
                  %433 = vst [vmem:[%s363 + $0x110] sm:$0xff] %v432
                  %v434 = vld [vmem:[%s362 + $0x230] sm:$0xff]
                  %435 = vst [vmem:[%s363 + $0x118] sm:$0xff] %v434
                  %v436 = vld [vmem:[%s362 + $0x240] sm:$0xff]
                  %437 = vst [vmem:[%s363 + $0x120] sm:$0xff] %v436
                  %v438 = vld [vmem:[%s362 + $0x250] sm:$0xff]
                  %439 = vst [vmem:[%s363 + $0x128] sm:$0xff] %v438
                  %v440 = vld [vmem:[%s362 + $0x260] sm:$0xff]
                  %441 = vst [vmem:[%s363 + $0x130] sm:$0xff] %v440
                  %v442 = vld [vmem:[%s362 + $0x270] sm:$0xff]
                  %443 = vst [vmem:[%s363 + $0x138] sm:$0xff] %v442
                  %v444 = vld [vmem:[%s362 + $0x280] sm:$0xff]
                  %445 = vst [vmem:[%s363 + $0x140] sm:$0xff] %v444
                  %v446 = vld [vmem:[%s362 + $0x290] sm:$0xff]
                  %447 = vst [vmem:[%s363 + $0x148] sm:$0xff] %v446
                  %v448 = vld [vmem:[%s362 + $0x2a0] sm:$0xff]
                  %449 = vst [vmem:[%s363 + $0x150] sm:$0xff] %v448
                  %v450 = vld [vmem:[%s362 + $0x2b0] sm:$0xff]
                  %451 = vst [vmem:[%s363 + $0x158] sm:$0xff] %v450
                  %v452 = vld [vmem:[%s362 + $0x2c0] sm:$0xff]
                  %453 = vst [vmem:[%s363 + $0x160] sm:$0xff] %v452
                  %v454 = vld [vmem:[%s362 + $0x2d0] sm:$0xff]
                  %455 = vst [vmem:[%s363 + $0x168] sm:$0xff] %v454
                  %v456 = vld [vmem:[%s362 + $0x2e0] sm:$0xff]
                  %457 = vst [vmem:[%s363 + $0x170] sm:$0xff] %v456
                  %v458 = vld [vmem:[%s362 + $0x2f0] sm:$0xff]
                  %459 = vst [vmem:[%s363 + $0x178] sm:$0xff] %v458
                  %v460 = vld [vmem:[%s362 + $0x300] sm:$0xff]
                  %461 = vst [vmem:[%s363 + $0x180] sm:$0xff] %v460
                  %v462 = vld [vmem:[%s362 + $0x310] sm:$0xff]
                  %463 = vst [vmem:[%s363 + $0x188] sm:$0xff] %v462
                  %v464 = vld [vmem:[%s362 + $0x320] sm:$0xff]
                  %465 = vst [vmem:[%s363 + $0x190] sm:$0xff] %v464
                  %v466 = vld [vmem:[%s362 + $0x330] sm:$0xff]
                  %467 = vst [vmem:[%s363 + $0x198] sm:$0xff] %v466
                  %v468 = vld [vmem:[%s362 + $0x340] sm:$0xff]
                  %469 = vst [vmem:[%s363 + $0x1a0] sm:$0xff] %v468
                  %v470 = vld [vmem:[%s362 + $0x350] sm:$0xff]
                  %471 = vst [vmem:[%s363 + $0x1a8] sm:$0xff] %v470
                  %v472 = vld [vmem:[%s362 + $0x360] sm:$0xff]
                  %473 = vst [vmem:[%s363 + $0x1b0] sm:$0xff] %v472
                  %v474 = vld [vmem:[%s362 + $0x370] sm:$0xff]
                  %475 = vst [vmem:[%s363 + $0x1b8] sm:$0xff] %v474
                  %v476 = vld [vmem:[%s362 + $0x380] sm:$0xff]
                  %477 = vst [vmem:[%s363 + $0x1c0] sm:$0xff] %v476
                  %v478 = vld [vmem:[%s362 + $0x390] sm:$0xff]
                  %479 = vst [vmem:[%s363 + $0x1c8] sm:$0xff] %v478
                  %v480 = vld [vmem:[%s362 + $0x3a0] sm:$0xff]
                  %481 = vst [vmem:[%s363 + $0x1d0] sm:$0xff] %v480
                  %v482 = vld [vmem:[%s362 + $0x3b0] sm:$0xff]
                  %483 = vst [vmem:[%s363 + $0x1d8] sm:$0xff] %v482
                  %v484 = vld [vmem:[%s362 + $0x3c0] sm:$0xff]
                  %485 = vst [vmem:[%s363 + $0x1e0] sm:$0xff] %v484
                  %v486 = vld [vmem:[%s362 + $0x3d0] sm:$0xff]
                  %487 = vst [vmem:[%s363 + $0x1e8] sm:$0xff] %v486
                  %v488 = vld [vmem:[%s362 + $0x3e0] sm:$0xff]
                  %489 = vst [vmem:[%s363 + $0x1f0] sm:$0xff] %v488
                  %v490 = vld [vmem:[%s362 + $0x3f0] sm:$0xff]
                  %491 = vst [vmem:[%s363 + $0x1f8] sm:$0xff] %v490
                $region52: #{discriminator_forward.13} parent=46 // loop_footer
                  %s361 = sadd.s32 1, %s357
                $region53: #{discriminator_forward.13} parent=46 // loop_footer_branch
                  %356 = sbr.rel target = $region49
                $region54: #{discriminator_forward.13} parent=46 // loop_exit
                  _
              $region47: #{discriminator_forward.13} parent=31 // pred_fallthru
                _
              // Predicated region
              $region55: #{discriminator_forward.13} parent=31 // pred_check
                _
              $region56: #{discriminator_forward.13} parent=31 // pred_check_branch
                %493 = sbr.rel target = $region58
              $region57: #{discriminator_forward.13} parent=31 // pred_region
                _
              $region58: #{discriminator_forward.13} parent=31 // pred_fallthru
                _
            $region32: #{discriminator_forward.13} parent=27 // pred_fallthru
              _
            // Predicated region
            $region33: #{discriminator_forward.13} parent=27 // pred_check
              _
            $region34: #{discriminator_forward.13} parent=27 // pred_check_branch
              %215 = sbr.rel target = $region36
            $region35: #{discriminator_forward.13} parent=27 // pred_region
              %s217 = ssub.s32 256, 1
              loop: start=0, step=1, limit=1
              $region37: #{discriminator_forward.13} parent=35 // loop_pre_header
                _
              $region38: #{discriminator_forward.13} parent=35 // loop_header
                %s219 = sphi 0, %s223
                %p220 = scmp.ge.s32.totalorder %s219, 1
                %s224 = sphi %s209, %s209
                %s225 = sphi %s203, %s203
              $region39: #{discriminator_forward.13} parent=35 // loop_header_branch
                %222 = sbr.rel (%p220) target = $region43
              $region40: #{discriminator_forward.13} parent=35 // loop_body
                %v226 = vld [vmem:[%s224] sm:%s217]
                %227 = vst [vmem:[%s225] sm:%s217] %v226
                %v228 = vld [vmem:[%s224 + $0x10] sm:%s217]
                %229 = vst [vmem:[%s225 + $0x8] sm:%s217] %v228
                %v230 = vld [vmem:[%s224 + $0x20] sm:%s217]
                %231 = vst [vmem:[%s225 + $0x10] sm:%s217] %v230
                %v232 = vld [vmem:[%s224 + $0x30] sm:%s217]
                %233 = vst [vmem:[%s225 + $0x18] sm:%s217] %v232
                %v234 = vld [vmem:[%s224 + $0x40] sm:%s217]
                %235 = vst [vmem:[%s225 + $0x20] sm:%s217] %v234
                %v236 = vld [vmem:[%s224 + $0x50] sm:%s217]
                %237 = vst [vmem:[%s225 + $0x28] sm:%s217] %v236
                %v238 = vld [vmem:[%s224 + $0x60] sm:%s217]
                %239 = vst [vmem:[%s225 + $0x30] sm:%s217] %v238
                %v240 = vld [vmem:[%s224 + $0x70] sm:%s217]
                %241 = vst [vmem:[%s225 + $0x38] sm:%s217] %v240
                %v242 = vld [vmem:[%s224 + $0x80] sm:%s217]
                %243 = vst [vmem:[%s225 + $0x40] sm:%s217] %v242
                %v244 = vld [vmem:[%s224 + $0x90] sm:%s217]
                %245 = vst [vmem:[%s225 + $0x48] sm:%s217] %v244
                %v246 = vld [vmem:[%s224 + $0xa0] sm:%s217]
                %247 = vst [vmem:[%s225 + $0x50] sm:%s217] %v246
                %v248 = vld [vmem:[%s224 + $0xb0] sm:%s217]
                %249 = vst [vmem:[%s225 + $0x58] sm:%s217] %v248
                %v250 = vld [vmem:[%s224 + $0xc0] sm:%s217]
                %251 = vst [vmem:[%s225 + $0x60] sm:%s217] %v250
                %v252 = vld [vmem:[%s224 + $0xd0] sm:%s217]
                %253 = vst [vmem:[%s225 + $0x68] sm:%s217] %v252
                %v254 = vld [vmem:[%s224 + $0xe0] sm:%s217]
                %255 = vst [vmem:[%s225 + $0x70] sm:%s217] %v254
                %v256 = vld [vmem:[%s224 + $0xf0] sm:%s217]
                %257 = vst [vmem:[%s225 + $0x78] sm:%s217] %v256
                %v258 = vld [vmem:[%s224 + $0x100] sm:%s217]
                %259 = vst [vmem:[%s225 + $0x80] sm:%s217] %v258
                %v260 = vld [vmem:[%s224 + $0x110] sm:%s217]
                %261 = vst [vmem:[%s225 + $0x88] sm:%s217] %v260
                %v262 = vld [vmem:[%s224 + $0x120] sm:%s217]
                %263 = vst [vmem:[%s225 + $0x90] sm:%s217] %v262
                %v264 = vld [vmem:[%s224 + $0x130] sm:%s217]
                %265 = vst [vmem:[%s225 + $0x98] sm:%s217] %v264
                %v266 = vld [vmem:[%s224 + $0x140] sm:%s217]
                %267 = vst [vmem:[%s225 + $0xa0] sm:%s217] %v266
                %v268 = vld [vmem:[%s224 + $0x150] sm:%s217]
                %269 = vst [vmem:[%s225 + $0xa8] sm:%s217] %v268
                %v270 = vld [vmem:[%s224 + $0x160] sm:%s217]
                %271 = vst [vmem:[%s225 + $0xb0] sm:%s217] %v270
                %v272 = vld [vmem:[%s224 + $0x170] sm:%s217]
                %273 = vst [vmem:[%s225 + $0xb8] sm:%s217] %v272
                %v274 = vld [vmem:[%s224 + $0x180] sm:%s217]
                %275 = vst [vmem:[%s225 + $0xc0] sm:%s217] %v274
                %v276 = vld [vmem:[%s224 + $0x190] sm:%s217]
                %277 = vst [vmem:[%s225 + $0xc8] sm:%s217] %v276
                %v278 = vld [vmem:[%s224 + $0x1a0] sm:%s217]
                %279 = vst [vmem:[%s225 + $0xd0] sm:%s217] %v278
                %v280 = vld [vmem:[%s224 + $0x1b0] sm:%s217]
                %281 = vst [vmem:[%s225 + $0xd8] sm:%s217] %v280
                %v282 = vld [vmem:[%s224 + $0x1c0] sm:%s217]
                %283 = vst [vmem:[%s225 + $0xe0] sm:%s217] %v282
                %v284 = vld [vmem:[%s224 + $0x1d0] sm:%s217]
                %285 = vst [vmem:[%s225 + $0xe8] sm:%s217] %v284
                %v286 = vld [vmem:[%s224 + $0x1e0] sm:%s217]
                %287 = vst [vmem:[%s225 + $0xf0] sm:%s217] %v286
                %v288 = vld [vmem:[%s224 + $0x1f0] sm:%s217]
                %289 = vst [vmem:[%s225 + $0xf8] sm:%s217] %v288
                %v290 = vld [vmem:[%s224 + $0x200] sm:%s217]
                %291 = vst [vmem:[%s225 + $0x100] sm:%s217] %v290
                %v292 = vld [vmem:[%s224 + $0x210] sm:%s217]
                %293 = vst [vmem:[%s225 + $0x108] sm:%s217] %v292
                %v294 = vld [vmem:[%s224 + $0x220] sm:%s217]
                %295 = vst [vmem:[%s225 + $0x110] sm:%s217] %v294
                %v296 = vld [vmem:[%s224 + $0x230] sm:%s217]
                %297 = vst [vmem:[%s225 + $0x118] sm:%s217] %v296
                %v298 = vld [vmem:[%s224 + $0x240] sm:%s217]
                %299 = vst [vmem:[%s225 + $0x120] sm:%s217] %v298
                %v300 = vld [vmem:[%s224 + $0x250] sm:%s217]
                %301 = vst [vmem:[%s225 + $0x128] sm:%s217] %v300
                %v302 = vld [vmem:[%s224 + $0x260] sm:%s217]
                %303 = vst [vmem:[%s225 + $0x130] sm:%s217] %v302
                %v304 = vld [vmem:[%s224 + $0x270] sm:%s217]
                %305 = vst [vmem:[%s225 + $0x138] sm:%s217] %v304
                %v306 = vld [vmem:[%s224 + $0x280] sm:%s217]
                %307 = vst [vmem:[%s225 + $0x140] sm:%s217] %v306
                %v308 = vld [vmem:[%s224 + $0x290] sm:%s217]
                %309 = vst [vmem:[%s225 + $0x148] sm:%s217] %v308
                %v310 = vld [vmem:[%s224 + $0x2a0] sm:%s217]
                %311 = vst [vmem:[%s225 + $0x150] sm:%s217] %v310
                %v312 = vld [vmem:[%s224 + $0x2b0] sm:%s217]
                %313 = vst [vmem:[%s225 + $0x158] sm:%s217] %v312
                %v314 = vld [vmem:[%s224 + $0x2c0] sm:%s217]
                %315 = vst [vmem:[%s225 + $0x160] sm:%s217] %v314
                %v316 = vld [vmem:[%s224 + $0x2d0] sm:%s217]
                %317 = vst [vmem:[%s225 + $0x168] sm:%s217] %v316
                %v318 = vld [vmem:[%s224 + $0x2e0] sm:%s217]
                %319 = vst [vmem:[%s225 + $0x170] sm:%s217] %v318
                %v320 = vld [vmem:[%s224 + $0x2f0] sm:%s217]
                %321 = vst [vmem:[%s225 + $0x178] sm:%s217] %v320
                %v322 = vld [vmem:[%s224 + $0x300] sm:%s217]
                %323 = vst [vmem:[%s225 + $0x180] sm:%s217] %v322
                %v324 = vld [vmem:[%s224 + $0x310] sm:%s217]
                %325 = vst [vmem:[%s225 + $0x188] sm:%s217] %v324
                %v326 = vld [vmem:[%s224 + $0x320] sm:%s217]
                %327 = vst [vmem:[%s225 + $0x190] sm:%s217] %v326
                %v328 = vld [vmem:[%s224 + $0x330] sm:%s217]
                %329 = vst [vmem:[%s225 + $0x198] sm:%s217] %v328
                %v330 = vld [vmem:[%s224 + $0x340] sm:%s217]
                %331 = vst [vmem:[%s225 + $0x1a0] sm:%s217] %v330
                %v332 = vld [vmem:[%s224 + $0x350] sm:%s217]
                %333 = vst [vmem:[%s225 + $0x1a8] sm:%s217] %v332
                %v334 = vld [vmem:[%s224 + $0x360] sm:%s217]
                %335 = vst [vmem:[%s225 + $0x1b0] sm:%s217] %v334
                %v336 = vld [vmem:[%s224 + $0x370] sm:%s217]
                %337 = vst [vmem:[%s225 + $0x1b8] sm:%s217] %v336
                %v338 = vld [vmem:[%s224 + $0x380] sm:%s217]
                %339 = vst [vmem:[%s225 + $0x1c0] sm:%s217] %v338
                %v340 = vld [vmem:[%s224 + $0x390] sm:%s217]
                %341 = vst [vmem:[%s225 + $0x1c8] sm:%s217] %v340
                %v342 = vld [vmem:[%s224 + $0x3a0] sm:%s217]
                %343 = vst [vmem:[%s225 + $0x1d0] sm:%s217] %v342
                %v344 = vld [vmem:[%s224 + $0x3b0] sm:%s217]
                %345 = vst [vmem:[%s225 + $0x1d8] sm:%s217] %v344
                %v346 = vld [vmem:[%s224 + $0x3c0] sm:%s217]
                %347 = vst [vmem:[%s225 + $0x1e0] sm:%s217] %v346
                %v348 = vld [vmem:[%s224 + $0x3d0] sm:%s217]
                %349 = vst [vmem:[%s225 + $0x1e8] sm:%s217] %v348
                %v350 = vld [vmem:[%s224 + $0x3e0] sm:%s217]
                %351 = vst [vmem:[%s225 + $0x1f0] sm:%s217] %v350
                %v352 = vld [vmem:[%s224 + $0x3f0] sm:%s217]
                %353 = vst [vmem:[%s225 + $0x1f8] sm:%s217] %v352
              $region41: #{discriminator_forward.13} parent=35 // loop_footer
                %s223 = sadd.s32 1, %s219
              $region42: #{discriminator_forward.13} parent=35 // loop_footer_branch
                %218 = sbr.rel target = $region38
              $region43: #{discriminator_forward.13} parent=35 // loop_exit
                _
            $region36: #{discriminator_forward.13} parent=27 // pred_fallthru
              _
          $region28: #{discriminator_forward.13} parent=23 // pred_fallthru
            _
          %494 = vnop
        $region24: #{discriminator_forward.13} parent=15 // pred_fallthru
          _
      $region16: #{discriminator_forward.13} parent=5 // pred_fallthru
        _
      %p495 = scmp.le.s32.totalorder 1, %s11
      %p496 = scmp.lt.s32.totalorder %s11, 17
      %p497 = pnand %p495, %p496
      %p498 = pneg %p497
      // Predicated region
      $region59: #{discriminator_forward.13} parent=5 // pred_check
        _
      $region60: #{discriminator_forward.13} parent=5 // pred_check_branch
        %500 = sbr.rel (%p497) target = $region62
      $region61: #{discriminator_forward.13} parent=5 // pred_region
        %s501 = ssub.s32 %s11, 1
        %s502 = sand.u32 %s73, 1
        %s503 = sand.u32 %s73, 1
        %s504 = smul.addr %s503, 512
        %s505 = scalar_lea.vmem [#allocation3], %s504
        // Predicated region
        $region63: #{discriminator_forward.13} parent=61 // pred_check
          %p506 = pneg %p86
        $region64: #{discriminator_forward.13} parent=61 // pred_check_branch
          %508 = sbr.rel (%p506) target = $region66
        $region65: #{discriminator_forward.13} parent=61 // pred_region
          _
        $region66: #{discriminator_forward.13} parent=61 // pred_fallthru
          _
        %s509 = smul.u32 4, %s23
        %p510 = scmp.lt.s32.totalorder %s22, 0
        %s511 = scalar_select %p510, %s22, 0
        %p512 = scmp.lt.s32.totalorder %s509, 31
        %s513 = scalar_select %p512, %s509, 31
        %s514 = smul.addr %s511, 32
        %s515 = sadd.s32 %s513, %s514
        %s516 = scalar_lea.vmem %s0, %s515
        %p517 = pneg %p58
        %p518 = pneg %p55
        %s519 = sand.u32 %s73, 1
        %s520 = sand.u32 %s73, 1
        %s521 = smul.addr %s520, 512
        %s522 = scalar_lea.vmem [#allocation3], %s521
        %p523 = pneg %p86
        %p524 = pneg %p83
        %p525 = pneg %p114
        %p526 = pneg %p111
        %s527 = smul.u32 2, %s21
        %p528 = scmp.lt.s32.totalorder %s22, 0
        %s529 = scalar_select %p528, %s22, 0
        %p530 = scmp.lt.s32.totalorder %s527, 3
        %s531 = scalar_select %p530, %s527, 3
        %s532 = smul.addr %s529, 4
        %s533 = sadd.s32 %s531, %s532
        %s534 = smul.addr %s533, 2
        %s535 = scalar_lea.vmem %s2, %s534
        %p536 = pneg %p140
        %p537 = pneg %p137
        %s538 = smul.u32 2, %s21
        %p539 = scmp.lt.s32.totalorder %s538, 3
        %s540 = scalar_select %p539, %s538, 3
        %s541 = scalar_lea.vmem %s3, %s540
        %p542 = pneg %p166
        %p543 = pneg %p163
        %s544 = smul.u32 2, %s21
        %p545 = scmp.lt.s32.totalorder %s544, 3
        %s546 = scalar_select %p545, %s544, 3
        %s547 = scalar_lea.vmem %s4, %s546
        %s548 = smul.u32 4, %s23
        %p549 = scmp.lt.s32.totalorder %s22, 0
        %s550 = scalar_select %p549, %s22, 0
        %p551 = scmp.lt.s32.totalorder %s548, 31
        %s552 = scalar_select %p551, %s548, 31
        %s553 = smul.addr %s550, 32
        %s554 = sadd.s32 %s552, %s553
        %s555 = scalar_lea.vmem %s0, %s554
        %s556 = smul.u32 4, %s23
        %s557 = smul.u32 64, %s23
        %s558 = smul.u32 2, %s21
        %s559 = smul.u32 2, %s21
        %p560 = scmp.lt.s32.totalorder %s22, 0
        %s561 = scalar_select %p560, %s22, 0
        %p562 = scmp.lt.s32.totalorder %s559, 3
        %s563 = scalar_select %p562, %s559, 3
        %s564 = smul.addr %s561, 4
        %s565 = sadd.s32 %s563, %s564
        %s566 = smul.addr %s565, 2
        %s567 = scalar_lea.vmem %s2, %s566
        %s568 = smul.u32 2, %s21
        %s569 = smul.u32 2, %s21
        %p570 = scmp.lt.s32.totalorder %s569, 3
        %s571 = scalar_select %p570, %s569, 3
        %s572 = scalar_lea.vmem %s3, %s571
        %s573 = smul.u32 2, %s21
        %s574 = smul.u32 2, %s21
        %p575 = scmp.lt.s32.totalorder %s574, 3
        %s576 = scalar_select %p575, %s574, 3
        %s577 = scalar_lea.vmem %s4, %s576
        %s578 = smul.u32 2, %s21
        %p579 = scmp.eq.s32.totalorder %s23, 0
        // Predicated region
        $region67: #{discriminator_forward.13} parent=61 // pred_check
          %p580 = pneg %p579
        $region68: #{discriminator_forward.13} parent=61 // pred_check_branch
          %582 = sbr.rel (%p580) target = $region70
        $region69: #{discriminator_forward.13} parent=61 // pred_region
          %583 = vst [vmem:[#allocation2] sm:$0xf] 0.0
        $region70: #{discriminator_forward.13} parent=61 // pred_fallthru
          _
        %p584 = scmp.eq.s32.totalorder %s22, 0
        %p585 = pnand %p584, %p579
        %p586 = pneg %p585
        // Predicated region
        $region71: #{discriminator_forward.13} parent=61 // pred_check
          _
        $region72: #{discriminator_forward.13} parent=61 // pred_check_branch
          %588 = sbr.rel (%p585) target = $region74
        $region73: #{discriminator_forward.13} parent=61 // pred_region
          %v589 = vlaneseq
          %vm590 = vcmp.ge.s32.totalorder %v589, 0
          %vm591 = vcmp.lt.s32.totalorder %v589, 256
          %vm592 = vmand %vm590, %vm591
          %593 = vst.msk [vmem:[%s572] sm:$0x3] %vm592, 0.0
          %594 = vst.msk [vmem:[%s577] sm:$0x3] %vm592, 0.0
        $region74: #{discriminator_forward.13} parent=61 // pred_fallthru
          _
        %v595 = vld [vmem:[#allocation2] sm:$0xf]
        %v596 = vld [vmem:[%s555] sm:$0xf]
        %v597 = vld [vmem:[%s505] sm:$0xff]
        %v598 = vld [vmem:[%s505 + $0x8] sm:$0xff]
        %v599 = vld [vmem:[%s505 + $0x10] sm:$0xff]
        %v600 = vld [vmem:[%s505 + $0x18] sm:$0xff]
        %v601 = vld [vmem:[%s505 + $0x20] sm:$0xff]
        %v602 = vld [vmem:[%s505 + $0x28] sm:$0xff]
        %v603 = vld [vmem:[%s505 + $0x30] sm:$0xff]
        %v604 = vld [vmem:[%s505 + $0x38] sm:$0xff]
        %v605 = vld [vmem:[%s505 + $0x40] sm:$0xff]
        %v606 = vld [vmem:[%s505 + $0x48] sm:$0xff]
        %v607 = vld [vmem:[%s505 + $0x50] sm:$0xff]
        %v608 = vld [vmem:[%s505 + $0x58] sm:$0xff]
        %v609 = vld [vmem:[%s505 + $0x60] sm:$0xff]
        %v610 = vld [vmem:[%s505 + $0x68] sm:$0xff]
        %v611 = vld [vmem:[%s505 + $0x70] sm:$0xff]
        %v612 = vld [vmem:[%s505 + $0x78] sm:$0xff]
        %v613 = vld [vmem:[%s505 + $0x80] sm:$0xff]
        %v614 = vld [vmem:[%s505 + $0x88] sm:$0xff]
        %v615 = vld [vmem:[%s505 + $0x90] sm:$0xff]
        %v616 = vld [vmem:[%s505 + $0x98] sm:$0xff]
        %v617 = vld [vmem:[%s505 + $0xa0] sm:$0xff]
        %v618 = vld [vmem:[%s505 + $0xa8] sm:$0xff]
        %v619 = vld [vmem:[%s505 + $0xb0] sm:$0xff]
        %v620 = vld [vmem:[%s505 + $0xb8] sm:$0xff]
        %v621 = vld [vmem:[%s505 + $0xc0] sm:$0xff]
        %v622 = vld [vmem:[%s505 + $0xc8] sm:$0xff]
        %v623 = vld [vmem:[%s505 + $0xd0] sm:$0xff]
        %v624 = vld [vmem:[%s505 + $0xd8] sm:$0xff]
        %v625 = vld [vmem:[%s505 + $0xe0] sm:$0xff]
        %v626 = vld [vmem:[%s505 + $0xe8] sm:$0xff]
        %v627 = vld [vmem:[%s505 + $0xf0] sm:$0xff]
        %v628 = vld [vmem:[%s505 + $0xf8] sm:$0xff]
        %v629 = vld [vmem:[%s505 + $0x100] sm:$0xff]
        %v630 = vld [vmem:[%s505 + $0x108] sm:$0xff]
        %v631 = vld [vmem:[%s505 + $0x110] sm:$0xff]
        %v632 = vld [vmem:[%s505 + $0x118] sm:$0xff]
        %v633 = vld [vmem:[%s505 + $0x120] sm:$0xff]
        %v634 = vld [vmem:[%s505 + $0x128] sm:$0xff]
        %v635 = vld [vmem:[%s505 + $0x130] sm:$0xff]
        %v636 = vld [vmem:[%s505 + $0x138] sm:$0xff]
        %v637 = vld [vmem:[%s505 + $0x140] sm:$0xff]
        %v638 = vld [vmem:[%s505 + $0x148] sm:$0xff]
        %v639 = vld [vmem:[%s505 + $0x150] sm:$0xff]
        %v640 = vld [vmem:[%s505 + $0x158] sm:$0xff]
        %v641 = vld [vmem:[%s505 + $0x160] sm:$0xff]
        %v642 = vld [vmem:[%s505 + $0x168] sm:$0xff]
        %v643 = vld [vmem:[%s505 + $0x170] sm:$0xff]
        %v644 = vld [vmem:[%s505 + $0x178] sm:$0xff]
        %v645 = vld [vmem:[%s505 + $0x180] sm:$0xff]
        %v646 = vld [vmem:[%s505 + $0x188] sm:$0xff]
        %v647 = vld [vmem:[%s505 + $0x190] sm:$0xff]
        %v648 = vld [vmem:[%s505 + $0x198] sm:$0xff]
        %v649 = vld [vmem:[%s505 + $0x1a0] sm:$0xff]
        %v650 = vld [vmem:[%s505 + $0x1a8] sm:$0xff]
        %v651 = vld [vmem:[%s505 + $0x1b0] sm:$0xff]
        %v652 = vld [vmem:[%s505 + $0x1b8] sm:$0xff]
        %v653 = vld [vmem:[%s505 + $0x1c0] sm:$0xff]
        %v654 = vld [vmem:[%s505 + $0x1c8] sm:$0xff]
        %v655 = vld [vmem:[%s505 + $0x1d0] sm:$0xff]
        %v656 = vld [vmem:[%s505 + $0x1d8] sm:$0xff]
        %v657 = vld [vmem:[%s505 + $0x1e0] sm:$0xff]
        %v658 = vld [vmem:[%s505 + $0x1e8] sm:$0xff]
        %v659 = vld [vmem:[%s505 + $0x1f0] sm:$0xff]
        %v660 = vld [vmem:[%s505 + $0x1f8] sm:$0xff]
        %662 = vst [vmem:[#allocation1] ss:$9 sm:$0xff] %v596
        %v663 = vld [vmem:[#allocation1] sm:$0xff]
        %v664 = vld [vmem:[#allocation1 + $0x9] sm:$0xff]
        %v665 = vld [vmem:[#allocation1 + $0x12] sm:$0xff]
        %v666 = vld [vmem:[#allocation1 + $0x1b] sm:$0xff]
        %v735 = vunpack.c.l.b16 %v597
        %v736 = vunpack.c.h.b16 %v597
        %v737 = vunpack.c.l.b16 %v598
        %v738 = vunpack.c.h.b16 %v598
        %v739 = vunpack.c.l.b16 %v599
        %v740 = vunpack.c.h.b16 %v599
        %v741 = vunpack.c.l.b16 %v600
        %v742 = vunpack.c.h.b16 %v600
        %v743 = vunpack.c.l.b16 %v601
        %v744 = vunpack.c.h.b16 %v601
        %v745 = vunpack.c.l.b16 %v602
        %v746 = vunpack.c.h.b16 %v602
        %v747 = vunpack.c.l.b16 %v603
        %v748 = vunpack.c.h.b16 %v603
        %v749 = vunpack.c.l.b16 %v604
        %v750 = vunpack.c.h.b16 %v604
        %v751 = vunpack.c.l.b16 %v605
        %v752 = vunpack.c.h.b16 %v605
        %v753 = vunpack.c.l.b16 %v606
        %v754 = vunpack.c.h.b16 %v606
        %v755 = vunpack.c.l.b16 %v607
        %v756 = vunpack.c.h.b16 %v607
        %v757 = vunpack.c.l.b16 %v608
        %v758 = vunpack.c.h.b16 %v608
        %v759 = vunpack.c.l.b16 %v609
        %v760 = vunpack.c.h.b16 %v609
        %v761 = vunpack.c.l.b16 %v610
        %v762 = vunpack.c.h.b16 %v610
        %v763 = vunpack.c.l.b16 %v611
        %v764 = vunpack.c.h.b16 %v611
        %v765 = vunpack.c.l.b16 %v612
        %v766 = vunpack.c.h.b16 %v612
        %v767 = vunpack.c.l.b16 %v613
        %v768 = vunpack.c.h.b16 %v613
        %v769 = vunpack.c.l.b16 %v614
        %v770 = vunpack.c.h.b16 %v614
        %v771 = vunpack.c.l.b16 %v615
        %v772 = vunpack.c.h.b16 %v615
        %v773 = vunpack.c.l.b16 %v616
        %v774 = vunpack.c.h.b16 %v616
        %v775 = vunpack.c.l.b16 %v617
        %v776 = vunpack.c.h.b16 %v617
        %v777 = vunpack.c.l.b16 %v618
        %v778 = vunpack.c.h.b16 %v618
        %v779 = vunpack.c.l.b16 %v619
        %v780 = vunpack.c.h.b16 %v619
        %v781 = vunpack.c.l.b16 %v620
        %v782 = vunpack.c.h.b16 %v620
        %v783 = vunpack.c.l.b16 %v621
        %v784 = vunpack.c.h.b16 %v621
        %v785 = vunpack.c.l.b16 %v622
        %v786 = vunpack.c.h.b16 %v622
        %v787 = vunpack.c.l.b16 %v623
        %v788 = vunpack.c.h.b16 %v623
        %v789 = vunpack.c.l.b16 %v624
        %v790 = vunpack.c.h.b16 %v624
        %v791 = vunpack.c.l.b16 %v625
        %v792 = vunpack.c.h.b16 %v625
        %v793 = vunpack.c.l.b16 %v626
        %v794 = vunpack.c.h.b16 %v626
        %v795 = vunpack.c.l.b16 %v627
        %v796 = vunpack.c.h.b16 %v627
        %v797 = vunpack.c.l.b16 %v628
        %v798 = vunpack.c.h.b16 %v628
        %v799 = vunpack.c.l.b16 %v629
        %v800 = vunpack.c.h.b16 %v629
        %v801 = vunpack.c.l.b16 %v630
        %v802 = vunpack.c.h.b16 %v630
        %v803 = vunpack.c.l.b16 %v631
        %v804 = vunpack.c.h.b16 %v631
        %v805 = vunpack.c.l.b16 %v632
        %v806 = vunpack.c.h.b16 %v632
        %v807 = vunpack.c.l.b16 %v633
        %v808 = vunpack.c.h.b16 %v633
        %v809 = vunpack.c.l.b16 %v634
        %v810 = vunpack.c.h.b16 %v634
        %v811 = vunpack.c.l.b16 %v635
        %v812 = vunpack.c.h.b16 %v635
        %v813 = vunpack.c.l.b16 %v636
        %v814 = vunpack.c.h.b16 %v636
        %v815 = vunpack.c.l.b16 %v637
        %v816 = vunpack.c.h.b16 %v637
        %v817 = vunpack.c.l.b16 %v638
        %v818 = vunpack.c.h.b16 %v638
        %v819 = vunpack.c.l.b16 %v639
        %v820 = vunpack.c.h.b16 %v639
        %v821 = vunpack.c.l.b16 %v640
        %v822 = vunpack.c.h.b16 %v640
        %v823 = vunpack.c.l.b16 %v641
        %v824 = vunpack.c.h.b16 %v641
        %v825 = vunpack.c.l.b16 %v642
        %v826 = vunpack.c.h.b16 %v642
        %v827 = vunpack.c.l.b16 %v643
        %v828 = vunpack.c.h.b16 %v643
        %v829 = vunpack.c.l.b16 %v644
        %v830 = vunpack.c.h.b16 %v644
        %v831 = vunpack.c.l.b16 %v645
        %v832 = vunpack.c.h.b16 %v645
        %v833 = vunpack.c.l.b16 %v646
        %v834 = vunpack.c.h.b16 %v646
        %v835 = vunpack.c.l.b16 %v647
        %v836 = vunpack.c.h.b16 %v647
        %v837 = vunpack.c.l.b16 %v648
        %v838 = vunpack.c.h.b16 %v648
        %v839 = vunpack.c.l.b16 %v649
        %v840 = vunpack.c.h.b16 %v649
        %v841 = vunpack.c.l.b16 %v650
        %v842 = vunpack.c.h.b16 %v650
        %v843 = vunpack.c.l.b16 %v651
        %v844 = vunpack.c.h.b16 %v651
        %v845 = vunpack.c.l.b16 %v652
        %v846 = vunpack.c.h.b16 %v652
        %v847 = vunpack.c.l.b16 %v653
        %v848 = vunpack.c.h.b16 %v653
        %v849 = vunpack.c.l.b16 %v654
        %v850 = vunpack.c.h.b16 %v654
        %v851 = vunpack.c.l.b16 %v655
        %v852 = vunpack.c.h.b16 %v655
        %v853 = vunpack.c.l.b16 %v656
        %v854 = vunpack.c.h.b16 %v656
        %v855 = vunpack.c.l.b16 %v657
        %v856 = vunpack.c.h.b16 %v657
        %v857 = vunpack.c.l.b16 %v658
        %v858 = vunpack.c.h.b16 %v658
        %v859 = vunpack.c.l.b16 %v659
        %v860 = vunpack.c.h.b16 %v659
        %v861 = vunpack.c.l.b16 %v660
        %v862 = vunpack.c.h.b16 %v660
        %v863 = vpack.c.b16 %v737, %v735
        %v864 = vpack.c.b16 %v738, %v736
        %v865 = vpack.c.b16 %v741, %v739
        %v866 = vpack.c.b16 %v742, %v740
        %v867 = vpack.c.b16 %v745, %v743
        %v868 = vpack.c.b16 %v746, %v744
        %v869 = vpack.c.b16 %v749, %v747
        %v870 = vpack.c.b16 %v750, %v748
        %v871 = vpack.c.b16 %v753, %v751
        %v872 = vpack.c.b16 %v754, %v752
        %v873 = vpack.c.b16 %v757, %v755
        %v874 = vpack.c.b16 %v758, %v756
        %v875 = vpack.c.b16 %v761, %v759
        %v876 = vpack.c.b16 %v762, %v760
        %v877 = vpack.c.b16 %v765, %v763
        %v878 = vpack.c.b16 %v766, %v764
        %v879 = vpack.c.b16 %v769, %v767
        %v880 = vpack.c.b16 %v770, %v768
        %v881 = vpack.c.b16 %v773, %v771
        %v882 = vpack.c.b16 %v774, %v772
        %v883 = vpack.c.b16 %v777, %v775
        %v884 = vpack.c.b16 %v778, %v776
        %v885 = vpack.c.b16 %v781, %v779
        %v886 = vpack.c.b16 %v782, %v780
        %v887 = vpack.c.b16 %v785, %v783
        %v888 = vpack.c.b16 %v786, %v784
        %v889 = vpack.c.b16 %v789, %v787
        %v890 = vpack.c.b16 %v790, %v788
        %v891 = vpack.c.b16 %v793, %v791
        %v892 = vpack.c.b16 %v794, %v792
        %v893 = vpack.c.b16 %v797, %v795
        %v894 = vpack.c.b16 %v798, %v796
        %v895 = vpack.c.b16 %v801, %v799
        %v896 = vpack.c.b16 %v802, %v800
        %v897 = vpack.c.b16 %v805, %v803
        %v898 = vpack.c.b16 %v806, %v804
        %v899 = vpack.c.b16 %v809, %v807
        %v900 = vpack.c.b16 %v810, %v808
        %v901 = vpack.c.b16 %v813, %v811
        %v902 = vpack.c.b16 %v814, %v812
        %v903 = vpack.c.b16 %v817, %v815
        %v904 = vpack.c.b16 %v818, %v816
        %v905 = vpack.c.b16 %v821, %v819
        %v906 = vpack.c.b16 %v822, %v820
        %v907 = vpack.c.b16 %v825, %v823
        %v908 = vpack.c.b16 %v826, %v824
        %v909 = vpack.c.b16 %v829, %v827
        %v910 = vpack.c.b16 %v830, %v828
        %v911 = vpack.c.b16 %v833, %v831
        %v912 = vpack.c.b16 %v834, %v832
        %v913 = vpack.c.b16 %v837, %v835
        %v914 = vpack.c.b16 %v838, %v836
        %v915 = vpack.c.b16 %v841, %v839
        %v916 = vpack.c.b16 %v842, %v840
        %v917 = vpack.c.b16 %v845, %v843
        %v918 = vpack.c.b16 %v846, %v844
        %v919 = vpack.c.b16 %v849, %v847
        %v920 = vpack.c.b16 %v850, %v848
        %v921 = vpack.c.b16 %v853, %v851
        %v922 = vpack.c.b16 %v854, %v852
        %v923 = vpack.c.b16 %v857, %v855
        %v924 = vpack.c.b16 %v858, %v856
        %v925 = vpack.c.b16 %v861, %v859
        %v926 = vpack.c.b16 %v862, %v860
        %991 = vmatpush.bf16.msra.mxu0 %v877
        %992 = vmatpush.bf16.msra.mxu0 %v875
        %993 = vmatpush.bf16.msra.mxu0 %v873
        %994 = vmatpush.bf16.msra.mxu0 %v871
        %995 = vmatpush.bf16.msra.mxu0 %v869
        %996 = vmatpush.bf16.msra.mxu0 %v867
        %997 = vmatpush.bf16.msra.mxu0 %v865
        %998 = vmatpush.bf16.msra.mxu0 %v863
        %999 = vmatmul.bf16.gmra.mxu0 %v663
        %v1000 = vpop.f32.mrf.mxu0
        %v1001 = vadd.f32 0.0, %v1000
        %v1002 = vpop.f32.mrf.mxu0
        %1003 = vdwg.mxu0
        %1004 = vmatpush.bf16.msra.mxu0 %v893
        %1005 = vmatpush.bf16.msra.mxu0 %v891
        %1006 = vmatpush.bf16.msra.mxu0 %v889
        %1007 = vmatpush.bf16.msra.mxu0 %v887
        %1008 = vmatpush.bf16.msra.mxu0 %v885
        %1009 = vmatpush.bf16.msra.mxu0 %v883
        %1010 = vmatpush.bf16.msra.mxu0 %v881
        %1011 = vmatpush.bf16.msra.mxu0 %v879
        %1012 = vmatmul.bf16.gmra.mxu0 %v664
        %v1013 = vpop.f32.mrf.mxu0
        %v1014 = vadd.f32 %v1001, %v1013
        %v1015 = vpop.f32.mrf.mxu0
        %1016 = vdwg.mxu0
        %1017 = vmatpush.bf16.msra.mxu0 %v909
        %1018 = vmatpush.bf16.msra.mxu0 %v907
        %1019 = vmatpush.bf16.msra.mxu0 %v905
        %1020 = vmatpush.bf16.msra.mxu0 %v903
        %1021 = vmatpush.bf16.msra.mxu0 %v901
        %1022 = vmatpush.bf16.msra.mxu0 %v899
        %1023 = vmatpush.bf16.msra.mxu0 %v897
        %1024 = vmatpush.bf16.msra.mxu0 %v895
        %1025 = vmatmul.bf16.gmra.mxu0 %v665
        %v1026 = vpop.f32.mrf.mxu0
        %v1027 = vadd.f32 %v1014, %v1026
        %v1028 = vpop.f32.mrf.mxu0
        %1029 = vdwg.mxu0
        %1030 = vmatpush.bf16.msra.mxu0 %v925
        %1031 = vmatpush.bf16.msra.mxu0 %v923
        %1032 = vmatpush.bf16.msra.mxu0 %v921
        %1033 = vmatpush.bf16.msra.mxu0 %v919
        %1034 = vmatpush.bf16.msra.mxu0 %v917
        %1035 = vmatpush.bf16.msra.mxu0 %v915
        %1036 = vmatpush.bf16.msra.mxu0 %v913
        %1037 = vmatpush.bf16.msra.mxu0 %v911
        %1038 = vmatmul.bf16.gmra.mxu0 %v666
        %v1039 = vpop.f32.mrf.mxu0
        %v1040 = vadd.f32 %v1027, %v1039
        %v1041 = vpop.f32.mrf.mxu0
        %1042 = vdwg.mxu0
        %1043 = vmatpush.bf16.msra.mxu0 %v878
        %1044 = vmatpush.bf16.msra.mxu0 %v876
        %1045 = vmatpush.bf16.msra.mxu0 %v874
        %1046 = vmatpush.bf16.msra.mxu0 %v872
        %1047 = vmatpush.bf16.msra.mxu0 %v870
        %1048 = vmatpush.bf16.msra.mxu0 %v868
        %1049 = vmatpush.bf16.msra.mxu0 %v866
        %1050 = vmatpush.bf16.msra.mxu0 %v864
        %1051 = vmatmul.bf16.gmra.mxu0 %v663
        %v1052 = vpop.f32.mrf.mxu0
        %v1053 = vadd.f32 0.0, %v1052
        %v1054 = vpop.f32.mrf.mxu0
        %1055 = vdwg.mxu0
        %1056 = vmatpush.bf16.msra.mxu0 %v894
        %1057 = vmatpush.bf16.msra.mxu0 %v892
        %1058 = vmatpush.bf16.msra.mxu0 %v890
        %1059 = vmatpush.bf16.msra.mxu0 %v888
        %1060 = vmatpush.bf16.msra.mxu0 %v886
        %1061 = vmatpush.bf16.msra.mxu0 %v884
        %1062 = vmatpush.bf16.msra.mxu0 %v882
        %1063 = vmatpush.bf16.msra.mxu0 %v880
        %1064 = vmatmul.bf16.gmra.mxu0 %v664
        %v1065 = vpop.f32.mrf.mxu0
        %v1066 = vadd.f32 %v1053, %v1065
        %v1067 = vpop.f32.mrf.mxu0
        %1068 = vdwg.mxu0
        %1069 = vmatpush.bf16.msra.mxu0 %v910
        %1070 = vmatpush.bf16.msra.mxu0 %v908
        %1071 = vmatpush.bf16.msra.mxu0 %v906
        %1072 = vmatpush.bf16.msra.mxu0 %v904
        %1073 = vmatpush.bf16.msra.mxu0 %v902
        %1074 = vmatpush.bf16.msra.mxu0 %v900
        %1075 = vmatpush.bf16.msra.mxu0 %v898
        %1076 = vmatpush.bf16.msra.mxu0 %v896
        %1077 = vmatmul.bf16.gmra.mxu0 %v665
        %v1078 = vpop.f32.mrf.mxu0
        %v1079 = vadd.f32 %v1066, %v1078
        %v1080 = vpop.f32.mrf.mxu0
        %1081 = vdwg.mxu0
        %1082 = vmatpush.bf16.msra.mxu0 %v926
        %1083 = vmatpush.bf16.msra.mxu0 %v924
        %1084 = vmatpush.bf16.msra.mxu0 %v922
        %1085 = vmatpush.bf16.msra.mxu0 %v920
        %1086 = vmatpush.bf16.msra.mxu0 %v918
        %1087 = vmatpush.bf16.msra.mxu0 %v916
        %1088 = vmatpush.bf16.msra.mxu0 %v914
        %1089 = vmatpush.bf16.msra.mxu0 %v912
        %1090 = vmatmul.bf16.gmra.mxu0 %v666
        %v1091 = vpop.f32.mrf.mxu0
        %v1092 = vadd.f32 %v1079, %v1091
        %v1093 = vpop.f32.mrf.mxu0
        %1094 = vdwg.mxu0
        %v1097 = vrot.slane %v1092, 6
        %vm1098 = vcmask 1041408
        %v1099 = vsel %vm1098, %v1040, %v1097
        %v1101 = vadd.f32 %v595, %v1099
        %1102 = vst [vmem:[#allocation2] sm:$0xf] %v1101
        %p1103 = scmp.eq.s32.totalorder %s23, 7
        // Predicated region
        $region75: #{discriminator_forward.13} parent=61 // pred_check
          %p1104 = pneg %p1103
        $region76: #{discriminator_forward.13} parent=61 // pred_check_branch
          %1106 = sbr.rel (%p1104) target = $region78
        $region77: #{discriminator_forward.13} parent=61 // pred_region
          %v1107 = vld [vmem:[#allocation2] sm:$0xf]
          %v1108 = vld [vmem:[%s572] sm:$0x3]
          %1110 = vst [vmem:[#allocation1] ss:$4 sm:$0xff] %v1107
          %v1111 = vld.sshfl [vmem:[#allocation1] sm:$0xff pattern:$0x73625140]
          %v1112 = vld.sshfl [vmem:[#allocation1 + $0x8] sm:$0xff pattern:$0x73625140]
          %v1115 = vsel %vm1098, %v1111, 0.0
          %v1116 = vrot.slane %v1115, 4
          %v1117 = vadd.f32 %v1115, %v1116
          %v1118 = vrot.slane %v1117, 2
          %v1119 = vadd.f32 %v1117, %v1118
          %v1120 = vrot.slane %v1119, 1
          %v1121 = vadd.f32 %v1119, %v1120
          %v1122 = vsel %vm1098, %v1112, 0.0
          %v1123 = vrot.slane %v1122, 4
          %v1124 = vadd.f32 %v1122, %v1123
          %v1125 = vrot.slane %v1124, 2
          %v1126 = vadd.f32 %v1124, %v1125
          %v1127 = vrot.slane %v1126, 1
          %v1128 = vadd.f32 %v1126, %v1127
          %v1131 = vrot.slane %v1128, 7
          %vm1132 = vcmask 1040384
          %v1133 = vsel %vm1132, %v1121, %v1131
          %v1135 = vadd.f32 %v1108, %v1133
          %v1136 = vlaneseq
          %vm1137 = vcmp.ge.s32.totalorder %v1136, 0
          %vm1138 = vcmp.lt.s32.totalorder %v1136, 256
          %vm1139 = vmand %vm1137, %vm1138
          %1140 = vst.msk [vmem:[%s572] sm:$0x3] %vm1139, %v1135
          %v1141 = vld [vmem:[%s577] sm:$0x3]
          %v1142 = vmul.f32 %v1107, %v1107
          %1144 = vst [vmem:[#allocation1] ss:$4 sm:$0xff] %v1142
          %v1145 = vld.sshfl [vmem:[#allocation1] sm:$0xff pattern:$0x73625140]
          %v1146 = vld.sshfl [vmem:[#allocation1 + $0x8] sm:$0xff pattern:$0x73625140]
          %v1149 = vsel %vm1098, %v1145, 0.0
          %v1150 = vrot.slane %v1149, 4
          %v1151 = vadd.f32 %v1149, %v1150
          %v1152 = vrot.slane %v1151, 2
          %v1153 = vadd.f32 %v1151, %v1152
          %v1154 = vrot.slane %v1153, 1
          %v1155 = vadd.f32 %v1153, %v1154
          %v1156 = vsel %vm1098, %v1146, 0.0
          %v1157 = vrot.slane %v1156, 4
          %v1158 = vadd.f32 %v1156, %v1157
          %v1159 = vrot.slane %v1158, 2
          %v1160 = vadd.f32 %v1158, %v1159
          %v1161 = vrot.slane %v1160, 1
          %v1162 = vadd.f32 %v1160, %v1161
          %v1165 = vrot.slane %v1162, 7
          %v1166 = vsel %vm1132, %v1155, %v1165
          %v1168 = vadd.f32 %v1141, %v1166
          %1169 = vst.msk [vmem:[%s577] sm:$0x3] %vm1139, %v1168
          %1170 = vst [vmem:[%s567] sm:$0xf] %v1107
        $region78: #{discriminator_forward.13} parent=61 // pred_fallthru
          _
        %s1171 = smul.u32 2, %s21
        %p1172 = scmp.lt.s32.totalorder %s22, 0
        %s1173 = scalar_select %p1172, %s22, 0
        %p1174 = scmp.lt.s32.totalorder %s1171, 3
        %s1175 = scalar_select %p1174, %s1171, 3
        %s1176 = smul.addr %s1173, 4
        %s1177 = sadd.s32 %s1175, %s1176
        %s1178 = smul.addr %s1177, 2
        %s1179 = scalar_lea.vmem %s2, %s1178
        %s1180 = smul.u32 2, %s21
        %p1181 = scmp.lt.s32.totalorder %s1180, 3
        %s1182 = scalar_select %p1181, %s1180, 3
        %s1183 = scalar_lea.vmem %s3, %s1182
        %s1184 = smul.u32 2, %s21
        %p1185 = scmp.lt.s32.totalorder %s1184, 3
        %s1186 = scalar_select %p1185, %s1184, 3
        %s1187 = scalar_lea.vmem %s4, %s1186
        // Predicated region
        $region79: #{discriminator_forward.13} parent=61 // pred_check
          %p1188 = pneg %p111
        $region80: #{discriminator_forward.13} parent=61 // pred_check_branch
          %1190 = sbr.rel (%p1188) target = $region82
        $region81: #{discriminator_forward.13} parent=61 // pred_region
          %s1191 = smul.u32 2, %s21
        $region82: #{discriminator_forward.13} parent=61 // pred_fallthru
          _
        // Predicated region
        $region83: #{discriminator_forward.13} parent=61 // pred_check
          %p1192 = pneg %p137
        $region84: #{discriminator_forward.13} parent=61 // pred_check_branch
          %1194 = sbr.rel (%p1192) target = $region86
        $region85: #{discriminator_forward.13} parent=61 // pred_region
          %s1195 = smul.u32 2, %s21
        $region86: #{discriminator_forward.13} parent=61 // pred_fallthru
          _
        // Predicated region
        $region87: #{discriminator_forward.13} parent=61 // pred_check
          %p1196 = pneg %p163
        $region88: #{discriminator_forward.13} parent=61 // pred_check_branch
          %1198 = sbr.rel (%p1196) target = $region90
        $region89: #{discriminator_forward.13} parent=61 // pred_region
          %s1199 = smul.u32 2, %s21
        $region90: #{discriminator_forward.13} parent=61 // pred_fallthru
          _
      $region62: #{discriminator_forward.13} parent=5 // pred_fallthru
        _
      %p1200 = scmp.le.s32.totalorder 2, %s11
      // Predicated region
      $region91: #{discriminator_forward.13} parent=5 // pred_check
        %p1201 = pneg %p1200
      $region92: #{discriminator_forward.13} parent=5 // pred_check_branch
        %1203 = sbr.rel (%p1201) target = $region94
      $region93: #{discriminator_forward.13} parent=5 // pred_region
        %s1204 = ssub.s32 %s11, 2
        // Predicated region
        $region95: #{discriminator_forward.13} parent=93 // pred_check
          %p1205 = pneg %p117
        $region96: #{discriminator_forward.13} parent=93 // pred_check_branch
          %1207 = sbr.rel (%p1205) target = $region98
        $region97: #{discriminator_forward.13} parent=93 // pred_region
          %s1208 = smul.u32 2, %s24
          %p1209 = scmp.lt.s32.totalorder %s25, 0
          %s1210 = scalar_select %p1209, %s25, 0
          %p1211 = scmp.lt.s32.totalorder %s1208, 3
          %s1212 = scalar_select %p1211, %s1208, 3
          %s1213 = smul.addr %s1210, 4
          %s1214 = sadd.s32 %s1212, %s1213
          %s1215 = smul.addr %s1214, 2
          %s1216 = scalar_lea.vmem %s2, %s1215
        $region98: #{discriminator_forward.13} parent=93 // pred_fallthru
          _
        // Predicated region
        $region99: #{discriminator_forward.13} parent=93 // pred_check
          %p1217 = pneg %p143
        $region100: #{discriminator_forward.13} parent=93 // pred_check_branch
          %1219 = sbr.rel (%p1217) target = $region102
        $region101: #{discriminator_forward.13} parent=93 // pred_region
          %s1220 = smul.u32 2, %s24
          %p1221 = scmp.lt.s32.totalorder %s1220, 3
          %s1222 = scalar_select %p1221, %s1220, 3
          %s1223 = scalar_lea.vmem %s3, %s1222
        $region102: #{discriminator_forward.13} parent=93 // pred_fallthru
          _
        // Predicated region
        $region103: #{discriminator_forward.13} parent=93 // pred_check
          %p1224 = pneg %p169
        $region104: #{discriminator_forward.13} parent=93 // pred_check_branch
          %1226 = sbr.rel (%p1224) target = $region106
        $region105: #{discriminator_forward.13} parent=93 // pred_region
          %s1227 = smul.u32 2, %s24
          %p1228 = scmp.lt.s32.totalorder %s1227, 3
          %s1229 = scalar_select %p1228, %s1227, 3
          %s1230 = scalar_lea.vmem %s4, %s1229
        $region106: #{discriminator_forward.13} parent=93 // pred_fallthru
          _
      $region94: #{discriminator_forward.13} parent=5 // pred_fallthru
        _
    $region6: #{discriminator_forward.13} parent=1 // loop_footer
      %s15 = sadd.s32 1, %s11
    $region7: #{discriminator_forward.13} parent=1 // loop_footer_branch
      %10 = sbr.rel target = $region3
    $region8: #{discriminator_forward.13} parent=1 // loop_exit
      _

// kernel: discriminator_forward.15
$region0: #{discriminator_forward.15}
  #allocation0 [shape = 'u32[]', space=smem, size = 0x4, offset = 0x4, fixed_abs, tag = 'smem constant byte address 0x4 - core index']
  #allocation1 [shape = 'u32[72,128]{1,0:T(1,128)}', space=vmem, size = 0x9000, scoped, tag = 'internal scratch']
  %s0 = inlined_call_operand.vmem [shape: bf16[2,512], index: 0, kind: input, shape index: {}]
  %s1 = inlined_call_operand.vmem [shape: f32[1,512], index: 1, kind: input, shape index: {}]
  %s2 = inlined_call_operand.vmem [shape: f32[2,1], index: 2, kind: output, shape index: {}]
  %s3 = sld [smem:[#allocation0]]
  $region18: #{discriminator_forward.15} parent=0
    _
  %s5 = ssub.s32 1, %s3
  %s6 = scalar_select 0, %s5, %s3
  // Predicated region
  $region2: #{discriminator_forward.15} parent=0 // pred_check
    _
  $region3: #{discriminator_forward.15} parent=0 // pred_check_branch
    %8 = sbr.rel (0) target = $region5
  $region4: #{discriminator_forward.15} parent=0 // pred_region
    _
  $region5: #{discriminator_forward.15} parent=0 // pred_fallthru
    _
  // Predicated region
  $region6: #{discriminator_forward.15} parent=0 // pred_check
    _
  $region7: #{discriminator_forward.15} parent=0 // pred_check_branch
    %10 = sbr.rel (0) target = $region9
  $region8: #{discriminator_forward.15} parent=0 // pred_region
    _
  $region9: #{discriminator_forward.15} parent=0 // pred_fallthru
    _
  %v11 = vld [vmem:[%s0] sm:$0xf]
  %v12 = vunpack.c.l.bf16 %v11
  %v13 = vld [vmem:[%s1] sm:$0xf]
  %v15 = vperm.slane %v13, 0
  %v16 = vperm.slane %v13, 1
  %v17 = vperm.slane %v13, 2
  %v18 = vperm.slane %v13, 3
  %v19 = vrot.slane %v16, 6
  %v20 = vrot.slane %v17, 4
  %v21 = vrot.slane %v18, 2
  %vm22 = vcmask 1041408
  %v23 = vsel %vm22, %v15, %v19
  %vm24 = vcmask 1045508
  %v25 = vsel %vm24, %v20, %v21
  %vm26 = vcmask 1043456
  %v27 = vsel %vm26, %v23, %v25
  %v29 = vmul.f32 %v12, %v27
  %31 = vst [vmem:[#allocation1] ss:$4 sm:$0xff] %v29
  %v32 = vld.sshfl [vmem:[#allocation1] sm:$0xff pattern:$0x73625140]
  %v33 = vld.sshfl [vmem:[#allocation1 + $0x8] sm:$0xff pattern:$0x73625140]
  %v34 = vld.sshfl [vmem:[#allocation1 + $0x10] sm:$0xff pattern:$0x73625140]
  %v35 = vld.sshfl [vmem:[#allocation1 + $0x18] sm:$0xff pattern:$0x73625140]
  %v40 = vsel %vm22, %v32, 0.0
  %v41 = vsel %vm22, %v33, 0.0
  %v42 = vadd.f32 %v40, %v41
  %v43 = vsel %vm22, %v34, 0.0
  %v44 = vadd.f32 %v42, %v43
  %v45 = vsel %vm22, %v35, 0.0
  %v46 = vadd.f32 %v44, %v45
  %47 = vadd.xlane.f32.xlu0 %v46
  %v48 = vpop.xlane.xlu0 %47
  %v49 = vxor.u32 %v48, 2147483648
  %v50 = vmul.f32 %v49, 1.442695
  %v51 = vpow.pop %v50
  %v52 = vadd.f32 %v51, 1.0
  %v53 = vrcp.pop %v52
  %v54 = vmul.f32 %v52, %v53
  %v55 = vsub.f32 1.0, %v54
  %v56 = vmul.f32 %v53, %v55
  %v57 = vadd.f32 %v53, %v56
  %vm58 = vweird.f32 %v52
  %vm59 = vweird.f32 %v53
  %vm60 = vmor %vm58, %vm59
  %v61 = vsel %vm60, %v53, %v57
  %v62 = vand.u32 2147483647, %v52
  %vm63 = vcmp.eq.f32.partialorder %v62, 8.507059e+37
  %v64 = vand.u32 %v52, 2147483648
  %v65 = vor.u32 1.1754944e-38, %v64
  %v66 = vsel %vm63, %v65, %v61
  %v67 = vmul.f32 1.0, %v66
  %vm68 = vcmask 1024
  %69 = vst.msk [vmem:[%s2] sm:$0x3] %vm68, %v67
  // Predicated region
  $region10: #{discriminator_forward.15} parent=0 // pred_check
    _
  $region11: #{discriminator_forward.15} parent=0 // pred_check_branch
    %71 = sbr.rel (0) target = $region13
  $region12: #{discriminator_forward.15} parent=0 // pred_region
    _
  $region13: #{discriminator_forward.15} parent=0 // pred_fallthru
    _
  // Predicated region
  $region14: #{discriminator_forward.15} parent=0 // pred_check
    _
  $region15: #{discriminator_forward.15} parent=0 // pred_check_branch
    %73 = sbr.rel (0) target = $region17
  $region16: #{discriminator_forward.15} parent=0 // pred_region
    _
  $region17: #{discriminator_forward.15} parent=0 // pred_fallthru
    _

</llo_original>
